<compile_context>
chip_gen: v7x
topology: tpu7x:2x2x1
jax: 0.10.0
libtpu: 0.0.40
codegen_flags: <defaults>
</compile_context>

<pallas_src>
import math

import jax
import jax.numpy as jnp
import numpy as np
from jax.experimental import pallas as pl
from jax.experimental.pallas import tpu as pltpu

# ----------------------------------------------------------------------------
# Synthetic configuration (mirrors what SharedLora.__init__ derives)
# ----------------------------------------------------------------------------
WINDOW = (-1600, 1600)              # fragments.regions.window
BINWIDTHS = (800, 200, 100, 25)     # hierarchical binwidths
N_CLUSTERS = 8                      # clustering.n_clusters
N_REGIONS = 37                      # fragments.n_regions

TOTAL_WIDTH = WINDOW[1] - WINDOW[0]
N_FINAL_BINS = TOTAL_WIDTH // BINWIDTHS[-1]   # 128
DELTA_P_SCALE = math.log(1.5)                 # registered buffer (normal prior)
LOG_FINAL_BINWIDTH = math.log(float(BINWIDTHS[-1]))


def _level_nbins():
    """Same recurrence as SharedLora.__init__ (nsection * nbin_section)."""
    nbins = []
    cw = TOTAL_WIDTH
    for bw in BINWIDTHS:
        nbin_section = cw // bw
        nsection = TOTAL_WIDTH // (bw * nbin_section)
        nbins.append(nsection * nbin_section)
        cw = bw
    return nbins


NBINS = _level_nbins()              # [4, 16, 32, 128]
NLEVELS = len(BINWIDTHS)
NBTOT = int(sum(NBINS))             # 180
N_COARSE = NBTOT - N_FINAL_BINS     # 52

# Lane packing order: the finest level (identity expansion, 128 bins) comes
# first so its slab is lane-aligned at [0,128); the coarse levels follow in
# original order so the coarse slab starts at a 128-aligned lane offset.
LEVEL_ORDER = [NLEVELS - 1] + list(range(NLEVELS - 1))


def _coarse_expand_matrix():
    """0/1 expansion matrix for the coarse levels only, shape (52, 128)."""
    blocks = []
    for lvl in range(NLEVELS - 1):
        nb = NBINS[lvl]
        rep = N_FINAL_BINS // nb
        e = (np.arange(N_FINAL_BINS)[None, :] // rep == np.arange(nb)[:, None])
        blocks.append(e.astype(np.float32))
    return jnp.asarray(np.concatenate(blocks, axis=0))


# ----------------------------------------------------------------------------
# Pallas kernel: one grid step == one block of RB regions
# ----------------------------------------------------------------------------
def _shared_lora_w_kernel(comp_ref, wd_ref, bias_ref, ecoarse_ref, w_ref, klsq_ref):
    # comp_ref    : (C, C) f32 in SMEM; comp[a, b] as in einsum('ab,cad->cbd')
    # wd_ref      : (C, RB, NBTOT) bf16, cluster-major gathered W_delta
    # bias_ref    : (RB, NBTOT) bf16 (NOT broadcast over clusters)
    # ecoarse_ref : (52, 128) f32, 0/1 expansion of the coarse levels
    # w_ref       : (C, RB, 128) f32 log-density output (cluster-major)
    # klsq_ref    : (RB, 1) f32, per-region sum over clusters/bins of delta**2
    bias = bias_ref[...].astype(jnp.float32)            # (RB, NBTOT)
    ecoarse = ecoarse_ref[...]                           # (52, 128)
    row_sq = jnp.zeros((bias.shape[0], 1), jnp.float32)

    for b in range(N_CLUSTERS):
        # C=8 contraction as VPU broadcast-FMAs (K=8 would under-fill the MXU).
        delta = comp_ref[0, b] * wd_ref[0].astype(jnp.float32)
        for a in range(1, N_CLUSTERS):
            delta = delta + comp_ref[a, b] * wd_ref[a].astype(jnp.float32)

        # KL partial: padded regions have zero wd -> zero contribution.
        row_sq = row_sq + jnp.sum(delta * delta, axis=-1, keepdims=True)

        w_lvl = bias + delta                                           # (RB, NBTOT)
        # Finest level (lanes [0,128)) expands with the identity; only the
        # coarse 52 lanes go through the MXU.
        acc = w_lvl[:, :N_FINAL_BINS] + jnp.dot(
            w_lvl[:, N_FINAL_BINS:], ecoarse,
            preferred_element_type=jnp.float32)                        # (RB, 128)

        # log_softmax over the final-bin (lane) axis, minus log(binwidth[-1])
        m = jnp.max(acc, axis=-1, keepdims=True)
        lse = m + jnp.log(jnp.sum(jnp.exp(acc - m), axis=-1, keepdims=True))
        w_ref[b] = acc - lse - LOG_FINAL_BINWIDTH

    klsq_ref[...] = row_sq


def calculate_w(components, w_bias_list, w_delta_list, regions_oi, region_block=32):
    """Pallas-backed SharedLora._calculate_w.

    Returns (w_cm, kl) where w_cm has shape (n_clusters, len(regions_oi),
    n_final_bins) -- the cluster-major transpose of the module's `w` (the
    forward-pass gather indexes it directly, so no transpose is needed).
    """
    C, NF = N_CLUSTERS, N_FINAL_BINS
    R = int(regions_oi.shape[0])
    # Regions per grid step, rounded up to 16 (bf16 sublane tile). Larger
    # values (64-256) amortize per-step overhead for production-sized R.
    RB = -(-min(region_block, R) // 16) * 16
    num_blocks = -(-R // RB)
    R_pad = num_blocks * RB

    regions = regions_oi.astype(jnp.int32)

    # --- JAX-side gather + lane packing (layout plumbing) --------------------
    # TODO(synk): for very large R the gather/concat/transpose below could move
    # into the kernel via PrefetchScalarGridSpec(num_scalar_prefetch=1) with
    # per-level Element-indexed in_specs, halving input-side HBM traffic.
    wd_cat = jnp.concatenate(
        [w_delta_list[l][regions] for l in LEVEL_ORDER], axis=-1)       # (R, C, NBTOT)
    bias_cat = jnp.concatenate(
        [w_bias_list[l][regions] for l in LEVEL_ORDER], axis=-1)        # (R, NBTOT)
    wd_cm = jnp.transpose(wd_cat, (1, 0, 2))                            # (C, R, NBTOT)
    if R_pad != R:
        # Zero-pad the region axis: padded rows give delta == 0, so they add
        # nothing to the in-kernel KL sum and their w rows are sliced off.
        wd_cm = jnp.pad(wd_cm, ((0, 0), (0, R_pad - R), (0, 0)))
        bias_cat = jnp.pad(bias_cat, ((0, R_pad - R), (0, 0)))

    # Stream the large operands as bf16 (math stays f32 in-kernel).
    wd_cm = wd_cm.astype(jnp.bfloat16)
    bias_p = bias_cat.astype(jnp.bfloat16)
    comp = components.astype(jnp.float32)                               # (C, C)
    ecoarse = _coarse_expand_matrix()                                   # (52, 128)

    grid_spec = pltpu.PrefetchScalarGridSpec(
        num_scalar_prefetch=0,
        grid=(num_blocks,),
        in_specs=[
            pl.BlockSpec(memory_space=pltpu.MemorySpace.SMEM),        # components
            pl.BlockSpec((C, RB, NBTOT), lambda i: (0, i, 0)),        # W_delta (bf16)
            pl.BlockSpec((RB, NBTOT), lambda i: (i, 0)),              # bias (bf16)
            pl.BlockSpec((N_COARSE, NF), lambda i: (0, 0)),           # E_coarse (resident)
        ],
        out_specs=(
            pl.BlockSpec((C, RB, NF), lambda i: (0, i, 0)),           # w (cluster-major)
            pl.BlockSpec((RB, 1), lambda i: (i, 0)),                  # sum(delta^2)/region
        ),
    )
    out_shape = (
        jax.ShapeDtypeStruct((C, R_pad, NF), jnp.float32),
        jax.ShapeDtypeStruct((R_pad, 1), jnp.float32),
    )
    w_cm_pad, klsq = pl.pallas_call(
        _shared_lora_w_kernel,
        out_shape=out_shape,
        grid_spec=grid_spec,
        compiler_params=pltpu.CompilerParams(
            dimension_semantics=("parallel",)),   # region blocks are independent
    )(comp, wd_cm, bias_p, ecoarse)

    w_cm = w_cm_pad[:, :R, :]

    # KL regulariser: Normal(0, exp(delta_p_scale)).log_prob(w_delta).sum().
    scale = math.exp(DELTA_P_SCALE)
    logp_const = -(DELTA_P_SCALE + 0.5 * math.log(2.0 * math.pi))
    kl = (-0.5 / (scale * scale)) * jnp.sum(klsq) + logp_const * float(R * C * NBTOT)
    return w_cm, kl


def shared_lora_forward(params, regions_oi, coordinates, local_region_ix,
                        local_cell_ix, clustering_indices, region_block=32):
    """Equivalent of SharedLora.forward(data) with default flags
    (differential=True, delta_regularization=True, bias_regularization=False)."""
    w_cm, w_kl = calculate_w(params["components"], params["w_bias"],
                             params["w_delta"], regions_oi, region_block)
    coords = jnp.clip(coordinates, WINDOW[0], WINDOW[1] - 1) - WINDOW[0]
    bin_ix = coords // BINWIDTHS[-1]
    cluster_ix = clustering_indices[local_cell_ix]
    # TODO(synk): per-cut data-dependent 3-index gather stays in XLA glue;
    # fusing it into the pallas_call would need per-element dynamic gathers.
    likelihood = w_cm[cluster_ix, local_region_ix, bin_ix]
    return likelihood, w_kl


# ----------------------------------------------------------------------------
# Pure-JAX reference (mirrors the PyTorch code line-by-line) for validation
# ----------------------------------------------------------------------------
def _reference_forward(components, w_bias_list, w_delta_list, regions_oi,
                       coordinates, local_region_ix, local_cell_ix,
                       clustering_indices):
    R, C, NF = regions_oi.shape[0], N_CLUSTERS, N_FINAL_BINS
    w = jnp.zeros((R, C, NF), jnp.float32)
    kl = jnp.float32(0.0)
    scale = math.exp(DELTA_P_SCALE)
    for lvl in range(NLEVELS):
        nb = NBINS[lvl]
        wb = w_bias_list[lvl][regions_oi]                  # (R, nb)
        Wd = w_delta_list[lvl][regions_oi]                 # (R, C, nb)
        delta = jnp.einsum("ab,rad->rbd", components, Wd)  # (R, C, nb)
        w_level = wb[:, None, :] + delta
        rep = NF // nb
        w = (w.reshape(R, C, nb, rep) + w_level[..., None]).reshape(R, C, NF)
        logp = -0.5 * (delta / scale) ** 2 - (DELTA_P_SCALE + 0.5 * math.log(2 * math.pi))
        kl = kl + jnp.sum(logp)
    w = jax.nn.log_softmax(w, axis=-1) - math.log(float(BINWIDTHS[-1]))
    coords = jnp.clip(coordinates, WINDOW[0], WINDOW[1] - 1) - WINDOW[0]
    bin_ix = coords // BINWIDTHS[-1]
    likelihood = w[local_region_ix, clustering_indices[local_cell_ix], bin_ix]
    return likelihood, kl


# ----------------------------------------------------------------------------
if __name__ == "__main__":
    key = jax.random.PRNGKey(0)
    keys = jax.random.split(key, 2 + 2 * NLEVELS)

    # components buffer (PCA of cluster means in the original module) -> synthetic
    components = jax.random.normal(keys[0], (N_CLUSTERS, N_CLUSTERS), jnp.float32)

    # Parameters. Module defaults initialize these to zeros; we use small random
    # values (deterministic) so the kernel output is non-trivial.
    w_bias, w_delta = [], []
    for lvl in range(NLEVELS):
        nb = NBINS[lvl]
        w_bias.append(0.1 * jax.random.normal(keys[1 + 2 * lvl],
                                              (N_REGIONS, nb), jnp.float32))
        w_delta.append(0.05 * jax.random.normal(keys[2 + 2 * lvl],
                                                (N_REGIONS, N_CLUSTERS, nb),
                                                jnp.float32))
    params = {"components": components, "w_bias": w_bias, "w_delta": w_delta}

    # Minibatch-style inputs: 19 regions -> 2 grid blocks of RB=16 regions
    # (last block zero-padded), exercising the multi-block + padding path.
    regions_oi = jnp.arange(0, 38, 2, dtype=jnp.int32)        # 19 region ids < 37
    n_cells, n_cuts = 6, 16
    kc = jax.random.split(keys[-1], 4)
    clustering_indices = jax.random.randint(kc[0], (n_cells,), 0, N_CLUSTERS, jnp.int32)
    coordinates = jax.random.randint(kc[1], (n_cuts,), WINDOW[0] - 50,
                                     WINDOW[1] + 50, jnp.int32)
    local_region_ix = jax.random.randint(kc[2], (n_cuts,), 0, regions_oi.shape[0], jnp.int32)
    local_cell_ix = jax.random.randint(kc[3], (n_cuts,), 0, n_cells, jnp.int32)

    likelihood, kl = shared_lora_forward(params, regions_oi, coordinates,
                                         local_region_ix, local_cell_ix,
                                         clustering_indices, region_block=16)
    likelihood, kl = jax.block_until_ready((likelihood, kl))

    lik_ref, kl_ref = _reference_forward(components, w_bias, w_delta, regions_oi,
                                         coordinates, local_region_ix,
                                         local_cell_ix, clustering_indices)
    # bf16 streaming of W_delta/bias with f32 in-kernel math: small abs slack.
    np.testing.assert_allclose(np.asarray(likelihood), np.asarray(lik_ref),
                               rtol=1e-3, atol=2e-3)
    np.testing.assert_allclose(np.asarray(kl), np.asarray(kl_ref),
                               rtol=1e-3, atol=2e-3)
    print("KERNEL_OK")
</pallas_src>

<mosaic_0001>
module attributes {stable_mosaic.version = 11 : i64} {
  func.func @_shared_lora_w_kernel(%arg0: i32, %arg1: memref<8x8xf32, #tpu.memory_space<smem>>, %arg2: memref<8x16x180xbf16, #tpu.memory_space<vmem>>, %arg3: memref<16x180xbf16, #tpu.memory_space<vmem>>, %arg4: memref<52x128xf32, #tpu.memory_space<vmem>>, %arg5: memref<8x16x128xf32, #tpu.memory_space<vmem>>, %arg6: memref<16x1xf32, #tpu.memory_space<vmem>>) attributes {dimension_semantics = [#tpu.dimension_semantics<parallel>], iteration_bounds = array<i64: 2>, scalar_prefetch = 0 : i64, scratch_operands = 0 : i64, tpu.core_type = #tpu.core_type<tc>, window_params = [{transform_indices = @transform_0, window_bounds = array<i64: 8, 8>}, {transform_indices = @transform_1, window_bounds = array<i64: 8, 16, 180>}, {transform_indices = @transform_2, window_bounds = array<i64: 16, 180>}, {pipeline_mode = #tpu.pipeline_mode<synchronous>, transform_indices = @transform_3, window_bounds = array<i64: 52, 128>}, {transform_indices = @transform_4, window_bounds = array<i64: 8, 16, 128>}, {transform_indices = @transform_5, window_bounds = array<i64: 16, 1>}]} {
    %c0 = arith.constant 0 : index
    %c0_0 = arith.constant 0 : index
    %0 = vector.load %arg3[%c0, %c0_0] : memref<16x180xbf16, #tpu.memory_space<vmem>>, vector<16x180xbf16>
    %1 = arith.extf %0 : vector<16x180xbf16> to vector<16x180xf32>
    %c0_1 = arith.constant 0 : index
    %c0_2 = arith.constant 0 : index
    %2 = vector.load %arg4[%c0_1, %c0_2] : memref<52x128xf32, #tpu.memory_space<vmem>>, vector<52x128xf32>
    %cst = arith.constant 0.000000e+00 : f32
    %3 = vector.broadcast %cst : f32 to vector<16x1xf32>
    %c0_3 = arith.constant 0 : index
    %c0_4 = arith.constant 0 : index
    %4 = memref.load %arg1[%c0_3, %c0_4] : memref<8x8xf32, #tpu.memory_space<smem>>
    %c0_5 = arith.constant 0 : index
    %c0_6 = arith.constant 0 : index
    %c0_7 = arith.constant 0 : index
    %5 = vector.load %arg2[%c0_5, %c0_6, %c0_7] : memref<8x16x180xbf16, #tpu.memory_space<vmem>>, vector<1x16x180xbf16>
    %6 = vector.shape_cast %5 : vector<1x16x180xbf16> to vector<16x180xbf16>
    %7 = arith.extf %6 : vector<16x180xbf16> to vector<16x180xf32>
    %8 = vector.broadcast %4 : f32 to vector<16x180xf32>
    %9 = arith.mulf %8, %7 : vector<16x180xf32>
    %c1 = arith.constant 1 : index
    %c0_8 = arith.constant 0 : index
    %10 = memref.load %arg1[%c1, %c0_8] : memref<8x8xf32, #tpu.memory_space<smem>>
    %c1_9 = arith.constant 1 : index
    %c0_10 = arith.constant 0 : index
    %c0_11 = arith.constant 0 : index
    %11 = vector.load %arg2[%c1_9, %c0_10, %c0_11] : memref<8x16x180xbf16, #tpu.memory_space<vmem>>, vector<1x16x180xbf16>
    %12 = vector.shape_cast %11 : vector<1x16x180xbf16> to vector<16x180xbf16>
    %13 = arith.extf %12 : vector<16x180xbf16> to vector<16x180xf32>
    %14 = vector.broadcast %10 : f32 to vector<16x180xf32>
    %15 = arith.mulf %14, %13 : vector<16x180xf32>
    %16 = arith.addf %9, %15 : vector<16x180xf32>
    %c2 = arith.constant 2 : index
    %c0_12 = arith.constant 0 : index
    %17 = memref.load %arg1[%c2, %c0_12] : memref<8x8xf32, #tpu.memory_space<smem>>
    %c2_13 = arith.constant 2 : index
    %c0_14 = arith.constant 0 : index
    %c0_15 = arith.constant 0 : index
    %18 = vector.load %arg2[%c2_13, %c0_14, %c0_15] : memref<8x16x180xbf16, #tpu.memory_space<vmem>>, vector<1x16x180xbf16>
    %19 = vector.shape_cast %18 : vector<1x16x180xbf16> to vector<16x180xbf16>
    %20 = arith.extf %19 : vector<16x180xbf16> to vector<16x180xf32>
    %21 = vector.broadcast %17 : f32 to vector<16x180xf32>
    %22 = arith.mulf %21, %20 : vector<16x180xf32>
    %23 = arith.addf %16, %22 : vector<16x180xf32>
    %c3 = arith.constant 3 : index
    %c0_16 = arith.constant 0 : index
    %24 = memref.load %arg1[%c3, %c0_16] : memref<8x8xf32, #tpu.memory_space<smem>>
    %c3_17 = arith.constant 3 : index
    %c0_18 = arith.constant 0 : index
    %c0_19 = arith.constant 0 : index
    %25 = vector.load %arg2[%c3_17, %c0_18, %c0_19] : memref<8x16x180xbf16, #tpu.memory_space<vmem>>, vector<1x16x180xbf16>
    %26 = vector.shape_cast %25 : vector<1x16x180xbf16> to vector<16x180xbf16>
    %27 = arith.extf %26 : vector<16x180xbf16> to vector<16x180xf32>
    %28 = vector.broadcast %24 : f32 to vector<16x180xf32>
    %29 = arith.mulf %28, %27 : vector<16x180xf32>
    %30 = arith.addf %23, %29 : vector<16x180xf32>
    %c4 = arith.constant 4 : index
    %c0_20 = arith.constant 0 : index
    %31 = memref.load %arg1[%c4, %c0_20] : memref<8x8xf32, #tpu.memory_space<smem>>
    %c4_21 = arith.constant 4 : index
    %c0_22 = arith.constant 0 : index
    %c0_23 = arith.constant 0 : index
    %32 = vector.load %arg2[%c4_21, %c0_22, %c0_23] : memref<8x16x180xbf16, #tpu.memory_space<vmem>>, vector<1x16x180xbf16>
    %33 = vector.shape_cast %32 : vector<1x16x180xbf16> to vector<16x180xbf16>
    %34 = arith.extf %33 : vector<16x180xbf16> to vector<16x180xf32>
    %35 = vector.broadcast %31 : f32 to vector<16x180xf32>
    %36 = arith.mulf %35, %34 : vector<16x180xf32>
    %37 = arith.addf %30, %36 : vector<16x180xf32>
    %c5 = arith.constant 5 : index
    %c0_24 = arith.constant 0 : index
    %38 = memref.load %arg1[%c5, %c0_24] : memref<8x8xf32, #tpu.memory_space<smem>>
    %c5_25 = arith.constant 5 : index
    %c0_26 = arith.constant 0 : index
    %c0_27 = arith.constant 0 : index
    %39 = vector.load %arg2[%c5_25, %c0_26, %c0_27] : memref<8x16x180xbf16, #tpu.memory_space<vmem>>, vector<1x16x180xbf16>
    %40 = vector.shape_cast %39 : vector<1x16x180xbf16> to vector<16x180xbf16>
    %41 = arith.extf %40 : vector<16x180xbf16> to vector<16x180xf32>
    %42 = vector.broadcast %38 : f32 to vector<16x180xf32>
    %43 = arith.mulf %42, %41 : vector<16x180xf32>
    %44 = arith.addf %37, %43 : vector<16x180xf32>
    %c6 = arith.constant 6 : index
    %c0_28 = arith.constant 0 : index
    %45 = memref.load %arg1[%c6, %c0_28] : memref<8x8xf32, #tpu.memory_space<smem>>
    %c6_29 = arith.constant 6 : index
    %c0_30 = arith.constant 0 : index
    %c0_31 = arith.constant 0 : index
    %46 = vector.load %arg2[%c6_29, %c0_30, %c0_31] : memref<8x16x180xbf16, #tpu.memory_space<vmem>>, vector<1x16x180xbf16>
    %47 = vector.shape_cast %46 : vector<1x16x180xbf16> to vector<16x180xbf16>
    %48 = arith.extf %47 : vector<16x180xbf16> to vector<16x180xf32>
    %49 = vector.broadcast %45 : f32 to vector<16x180xf32>
    %50 = arith.mulf %49, %48 : vector<16x180xf32>
    %51 = arith.addf %44, %50 : vector<16x180xf32>
    %c7 = arith.constant 7 : index
    %c0_32 = arith.constant 0 : index
    %52 = memref.load %arg1[%c7, %c0_32] : memref<8x8xf32, #tpu.memory_space<smem>>
    %c7_33 = arith.constant 7 : index
    %c0_34 = arith.constant 0 : index
    %c0_35 = arith.constant 0 : index
    %53 = vector.load %arg2[%c7_33, %c0_34, %c0_35] : memref<8x16x180xbf16, #tpu.memory_space<vmem>>, vector<1x16x180xbf16>
    %54 = vector.shape_cast %53 : vector<1x16x180xbf16> to vector<16x180xbf16>
    %55 = arith.extf %54 : vector<16x180xbf16> to vector<16x180xf32>
    %56 = vector.broadcast %52 : f32 to vector<16x180xf32>
    %57 = arith.mulf %56, %55 : vector<16x180xf32>
    %58 = arith.addf %51, %57 : vector<16x180xf32>
    %59 = arith.mulf %58, %58 : vector<16x180xf32>
    %cst_36 = arith.constant dense<0.000000e+00> : vector<16xf32>
    %60 = vector.multi_reduction <add>, %59, %cst_36 [1] : vector<16x180xf32> to vector<16xf32>
    %61 = vector.shape_cast %60 : vector<16xf32> to vector<16x1xf32>
    %62 = arith.addf %3, %61 : vector<16x1xf32>
    %63 = arith.addf %1, %58 : vector<16x180xf32>
    %64 = vector.extract_strided_slice %63 {offsets = [0, 0], sizes = [16, 128], strides = [1, 1]} : vector<16x180xf32> to vector<16x128xf32>
    %65 = vector.extract_strided_slice %63 {offsets = [0, 128], sizes = [16, 52], strides = [1, 1]} : vector<16x180xf32> to vector<16x52xf32>
    %cst_37 = arith.constant dense<0.000000e+00> : vector<16x128xf32>
    %66 = tpu.matmul %65, %2, %cst_37 {dimension_numbers = #tpu.dot_dimension_numbers<[1], [0], [0], [1], [0, 0, 1, 1], [], []>} : vector<16x52xf32>, vector<52x128xf32>, vector<16x128xf32> -> vector<16x128xf32>
    %67 = arith.addf %64, %66 : vector<16x128xf32>
    %cst_38 = arith.constant dense<0xFF800000> : vector<16xf32>
    %68 = vector.multi_reduction <maximumf>, %67, %cst_38 [1] : vector<16x128xf32> to vector<16xf32>
    %69 = vector.shape_cast %68 : vector<16xf32> to vector<16x1xf32>
    %70 = vector.broadcast %69 : vector<16x1xf32> to vector<16x128xf32>
    %71 = arith.subf %67, %70 : vector<16x128xf32>
    %72 = math.exp %71 : vector<16x128xf32>
    %cst_39 = arith.constant dense<0.000000e+00> : vector<16xf32>
    %73 = vector.multi_reduction <add>, %72, %cst_39 [1] : vector<16x128xf32> to vector<16xf32>
    %74 = vector.shape_cast %73 : vector<16xf32> to vector<16x1xf32>
    %75 = math.log %74 : vector<16x1xf32>
    %76 = arith.addf %69, %75 : vector<16x1xf32>
    %77 = vector.broadcast %76 : vector<16x1xf32> to vector<16x128xf32>
    %78 = arith.subf %67, %77 : vector<16x128xf32>
    %cst_40 = arith.constant 3.21887589 : f32
    %79 = vector.broadcast %cst_40 : f32 to vector<16x128xf32>
    %80 = arith.subf %78, %79 : vector<16x128xf32>
    %c0_41 = arith.constant 0 : index
    %c0_42 = arith.constant 0 : index
    %c0_43 = arith.constant 0 : index
    %81 = vector.load %arg5[%c0_41, %c0_42, %c0_43] : memref<8x16x128xf32, #tpu.memory_space<vmem>>, vector<1x16x128xf32>
    %82 = vector.shape_cast %81 : vector<1x16x128xf32> to vector<16x128xf32>
    %83 = vector.shape_cast %80 : vector<16x128xf32> to vector<1x16x128xf32>
    tpu.vector_store %arg5[%c0_41, %c0_42, %c0_43], %83 {strides = array<i32>} : memref<8x16x128xf32, #tpu.memory_space<vmem>>, vector<1x16x128xf32>,
    %c0_44 = arith.constant 0 : index
    %c1_45 = arith.constant 1 : index
    %84 = memref.load %arg1[%c0_44, %c1_45] : memref<8x8xf32, #tpu.memory_space<smem>>
    %c0_46 = arith.constant 0 : index
    %c0_47 = arith.constant 0 : index
    %c0_48 = arith.constant 0 : index
    %85 = vector.load %arg2[%c0_46, %c0_47, %c0_48] : memref<8x16x180xbf16, #tpu.memory_space<vmem>>, vector<1x16x180xbf16>
    %86 = vector.shape_cast %85 : vector<1x16x180xbf16> to vector<16x180xbf16>
    %87 = arith.extf %86 : vector<16x180xbf16> to vector<16x180xf32>
    %88 = vector.broadcast %84 : f32 to vector<16x180xf32>
    %89 = arith.mulf %88, %87 : vector<16x180xf32>
    %c1_49 = arith.constant 1 : index
    %c1_50 = arith.constant 1 : index
    %90 = memref.load %arg1[%c1_49, %c1_50] : memref<8x8xf32, #tpu.memory_space<smem>>
    %c1_51 = arith.constant 1 : index
    %c0_52 = arith.constant 0 : index
    %c0_53 = arith.constant 0 : index
    %91 = vector.load %arg2[%c1_51, %c0_52, %c0_53] : memref<8x16x180xbf16, #tpu.memory_space<vmem>>, vector<1x16x180xbf16>
    %92 = vector.shape_cast %91 : vector<1x16x180xbf16> to vector<16x180xbf16>
    %93 = arith.extf %92 : vector<16x180xbf16> to vector<16x180xf32>
    %94 = vector.broadcast %90 : f32 to vector<16x180xf32>
    %95 = arith.mulf %94, %93 : vector<16x180xf32>
    %96 = arith.addf %89, %95 : vector<16x180xf32>
    %c2_54 = arith.constant 2 : index
    %c1_55 = arith.constant 1 : index
    %97 = memref.load %arg1[%c2_54, %c1_55] : memref<8x8xf32, #tpu.memory_space<smem>>
    %c2_56 = arith.constant 2 : index
    %c0_57 = arith.constant 0 : index
    %c0_58 = arith.constant 0 : index
    %98 = vector.load %arg2[%c2_56, %c0_57, %c0_58] : memref<8x16x180xbf16, #tpu.memory_space<vmem>>, vector<1x16x180xbf16>
    %99 = vector.shape_cast %98 : vector<1x16x180xbf16> to vector<16x180xbf16>
    %100 = arith.extf %99 : vector<16x180xbf16> to vector<16x180xf32>
    %101 = vector.broadcast %97 : f32 to vector<16x180xf32>
    %102 = arith.mulf %101, %100 : vector<16x180xf32>
    %103 = arith.addf %96, %102 : vector<16x180xf32>
    %c3_59 = arith.constant 3 : index
    %c1_60 = arith.constant 1 : index
    %104 = memref.load %arg1[%c3_59, %c1_60] : memref<8x8xf32, #tpu.memory_space<smem>>
    %c3_61 = arith.constant 3 : index
    %c0_62 = arith.constant 0 : index
    %c0_63 = arith.constant 0 : index
    %105 = vector.load %arg2[%c3_61, %c0_62, %c0_63] : memref<8x16x180xbf16, #tpu.memory_space<vmem>>, vector<1x16x180xbf16>
    %106 = vector.shape_cast %105 : vector<1x16x180xbf16> to vector<16x180xbf16>
    %107 = arith.extf %106 : vector<16x180xbf16> to vector<16x180xf32>
    %108 = vector.broadcast %104 : f32 to vector<16x180xf32>
    %109 = arith.mulf %108, %107 : vector<16x180xf32>
    %110 = arith.addf %103, %109 : vector<16x180xf32>
    %c4_64 = arith.constant 4 : index
    %c1_65 = arith.constant 1 : index
    %111 = memref.load %arg1[%c4_64, %c1_65] : memref<8x8xf32, #tpu.memory_space<smem>>
    %c4_66 = arith.constant 4 : index
    %c0_67 = arith.constant 0 : index
    %c0_68 = arith.constant 0 : index
    %112 = vector.load %arg2[%c4_66, %c0_67, %c0_68] : memref<8x16x180xbf16, #tpu.memory_space<vmem>>, vector<1x16x180xbf16>
    %113 = vector.shape_cast %112 : vector<1x16x180xbf16> to vector<16x180xbf16>
    %114 = arith.extf %113 : vector<16x180xbf16> to vector<16x180xf32>
    %115 = vector.broadcast %111 : f32 to vector<16x180xf32>
    %116 = arith.mulf %115, %114 : vector<16x180xf32>
    %117 = arith.addf %110, %116 : vector<16x180xf32>
    %c5_69 = arith.constant 5 : index
    %c1_70 = arith.constant 1 : index
    %118 = memref.load %arg1[%c5_69, %c1_70] : memref<8x8xf32, #tpu.memory_space<smem>>
    %c5_71 = arith.constant 5 : index
    %c0_72 = arith.constant 0 : index
    %c0_73 = arith.constant 0 : index
    %119 = vector.load %arg2[%c5_71, %c0_72, %c0_73] : memref<8x16x180xbf16, #tpu.memory_space<vmem>>, vector<1x16x180xbf16>
    %120 = vector.shape_cast %119 : vector<1x16x180xbf16> to vector<16x180xbf16>
    %121 = arith.extf %120 : vector<16x180xbf16> to vector<16x180xf32>
    %122 = vector.broadcast %118 : f32 to vector<16x180xf32>
    %123 = arith.mulf %122, %121 : vector<16x180xf32>
    %124 = arith.addf %117, %123 : vector<16x180xf32>
    %c6_74 = arith.constant 6 : index
    %c1_75 = arith.constant 1 : index
    %125 = memref.load %arg1[%c6_74, %c1_75] : memref<8x8xf32, #tpu.memory_space<smem>>
    %c6_76 = arith.constant 6 : index
    %c0_77 = arith.constant 0 : index
    %c0_78 = arith.constant 0 : index
    %126 = vector.load %arg2[%c6_76, %c0_77, %c0_78] : memref<8x16x180xbf16, #tpu.memory_space<vmem>>, vector<1x16x180xbf16>
    %127 = vector.shape_cast %126 : vector<1x16x180xbf16> to vector<16x180xbf16>
    %128 = arith.extf %127 : vector<16x180xbf16> to vector<16x180xf32>
    %129 = vector.broadcast %125 : f32 to vector<16x180xf32>
    %130 = arith.mulf %129, %128 : vector<16x180xf32>
    %131 = arith.addf %124, %130 : vector<16x180xf32>
    %c7_79 = arith.constant 7 : index
    %c1_80 = arith.constant 1 : index
    %132 = memref.load %arg1[%c7_79, %c1_80] : memref<8x8xf32, #tpu.memory_space<smem>>
    %c7_81 = arith.constant 7 : index
    %c0_82 = arith.constant 0 : index
    %c0_83 = arith.constant 0 : index
    %133 = vector.load %arg2[%c7_81, %c0_82, %c0_83] : memref<8x16x180xbf16, #tpu.memory_space<vmem>>, vector<1x16x180xbf16>
    %134 = vector.shape_cast %133 : vector<1x16x180xbf16> to vector<16x180xbf16>
    %135 = arith.extf %134 : vector<16x180xbf16> to vector<16x180xf32>
    %136 = vector.broadcast %132 : f32 to vector<16x180xf32>
    %137 = arith.mulf %136, %135 : vector<16x180xf32>
    %138 = arith.addf %131, %137 : vector<16x180xf32>
    %139 = arith.mulf %138, %138 : vector<16x180xf32>
    %cst_84 = arith.constant dense<0.000000e+00> : vector<16xf32>
    %140 = vector.multi_reduction <add>, %139, %cst_84 [1] : vector<16x180xf32> to vector<16xf32>
    %141 = vector.shape_cast %140 : vector<16xf32> to vector<16x1xf32>
    %142 = arith.addf %62, %141 : vector<16x1xf32>
    %143 = arith.addf %1, %138 : vector<16x180xf32>
    %144 = vector.extract_strided_slice %143 {offsets = [0, 0], sizes = [16, 128], strides = [1, 1]} : vector<16x180xf32> to vector<16x128xf32>
    %145 = vector.extract_strided_slice %143 {offsets = [0, 128], sizes = [16, 52], strides = [1, 1]} : vector<16x180xf32> to vector<16x52xf32>
    %cst_85 = arith.constant dense<0.000000e+00> : vector<16x128xf32>
    %146 = tpu.matmul %145, %2, %cst_85 {dimension_numbers = #tpu.dot_dimension_numbers<[1], [0], [0], [1], [0, 0, 1, 1], [], []>} : vector<16x52xf32>, vector<52x128xf32>, vector<16x128xf32> -> vector<16x128xf32>
    %147 = arith.addf %144, %146 : vector<16x128xf32>
    %cst_86 = arith.constant dense<0xFF800000> : vector<16xf32>
    %148 = vector.multi_reduction <maximumf>, %147, %cst_86 [1] : vector<16x128xf32> to vector<16xf32>
    %149 = vector.shape_cast %148 : vector<16xf32> to vector<16x1xf32>
    %150 = vector.broadcast %149 : vector<16x1xf32> to vector<16x128xf32>
    %151 = arith.subf %147, %150 : vector<16x128xf32>
    %152 = math.exp %151 : vector<16x128xf32>
    %cst_87 = arith.constant dense<0.000000e+00> : vector<16xf32>
    %153 = vector.multi_reduction <add>, %152, %cst_87 [1] : vector<16x128xf32> to vector<16xf32>
    %154 = vector.shape_cast %153 : vector<16xf32> to vector<16x1xf32>
    %155 = math.log %154 : vector<16x1xf32>
    %156 = arith.addf %149, %155 : vector<16x1xf32>
    %157 = vector.broadcast %156 : vector<16x1xf32> to vector<16x128xf32>
    %158 = arith.subf %147, %157 : vector<16x128xf32>
    %cst_88 = arith.constant 3.21887589 : f32
    %159 = vector.broadcast %cst_88 : f32 to vector<16x128xf32>
    %160 = arith.subf %158, %159 : vector<16x128xf32>
    %c1_89 = arith.constant 1 : index
    %c0_90 = arith.constant 0 : index
    %c0_91 = arith.constant 0 : index
    %161 = vector.load %arg5[%c1_89, %c0_90, %c0_91] : memref<8x16x128xf32, #tpu.memory_space<vmem>>, vector<1x16x128xf32>
    %162 = vector.shape_cast %161 : vector<1x16x128xf32> to vector<16x128xf32>
    %163 = vector.shape_cast %160 : vector<16x128xf32> to vector<1x16x128xf32>
    tpu.vector_store %arg5[%c1_89, %c0_90, %c0_91], %163 {strides = array<i32>} : memref<8x16x128xf32, #tpu.memory_space<vmem>>, vector<1x16x128xf32>,
    %c0_92 = arith.constant 0 : index
    %c2_93 = arith.constant 2 : index
    %164 = memref.load %arg1[%c0_92, %c2_93] : memref<8x8xf32, #tpu.memory_space<smem>>
    %c0_94 = arith.constant 0 : index
    %c0_95 = arith.constant 0 : index
    %c0_96 = arith.constant 0 : index
    %165 = vector.load %arg2[%c0_94, %c0_95, %c0_96] : memref<8x16x180xbf16, #tpu.memory_space<vmem>>, vector<1x16x180xbf16>
    %166 = vector.shape_cast %165 : vector<1x16x180xbf16> to vector<16x180xbf16>
    %167 = arith.extf %166 : vector<16x180xbf16> to vector<16x180xf32>
    %168 = vector.broadcast %164 : f32 to vector<16x180xf32>
    %169 = arith.mulf %168, %167 : vector<16x180xf32>
    %c1_97 = arith.constant 1 : index
    %c2_98 = arith.constant 2 : index
    %170 = memref.load %arg1[%c1_97, %c2_98] : memref<8x8xf32, #tpu.memory_space<smem>>
    %c1_99 = arith.constant 1 : index
    %c0_100 = arith.constant 0 : index
    %c0_101 = arith.constant 0 : index
    %171 = vector.load %arg2[%c1_99, %c0_100, %c0_101] : memref<8x16x180xbf16, #tpu.memory_space<vmem>>, vector<1x16x180xbf16>
    %172 = vector.shape_cast %171 : vector<1x16x180xbf16> to vector<16x180xbf16>
    %173 = arith.extf %172 : vector<16x180xbf16> to vector<16x180xf32>
    %174 = vector.broadcast %170 : f32 to vector<16x180xf32>
    %175 = arith.mulf %174, %173 : vector<16x180xf32>
    %176 = arith.addf %169, %175 : vector<16x180xf32>
    %c2_102 = arith.constant 2 : index
    %c2_103 = arith.constant 2 : index
    %177 = memref.load %arg1[%c2_102, %c2_103] : memref<8x8xf32, #tpu.memory_space<smem>>
    %c2_104 = arith.constant 2 : index
    %c0_105 = arith.constant 0 : index
    %c0_106 = arith.constant 0 : index
    %178 = vector.load %arg2[%c2_104, %c0_105, %c0_106] : memref<8x16x180xbf16, #tpu.memory_space<vmem>>, vector<1x16x180xbf16>
    %179 = vector.shape_cast %178 : vector<1x16x180xbf16> to vector<16x180xbf16>
    %180 = arith.extf %179 : vector<16x180xbf16> to vector<16x180xf32>
    %181 = vector.broadcast %177 : f32 to vector<16x180xf32>
    %182 = arith.mulf %181, %180 : vector<16x180xf32>
    %183 = arith.addf %176, %182 : vector<16x180xf32>
    %c3_107 = arith.constant 3 : index
    %c2_108 = arith.constant 2 : index
    %184 = memref.load %arg1[%c3_107, %c2_108] : memref<8x8xf32, #tpu.memory_space<smem>>
    %c3_109 = arith.constant 3 : index
    %c0_110 = arith.constant 0 : index
    %c0_111 = arith.constant 0 : index
    %185 = vector.load %arg2[%c3_109, %c0_110, %c0_111] : memref<8x16x180xbf16, #tpu.memory_space<vmem>>, vector<1x16x180xbf16>
    %186 = vector.shape_cast %185 : vector<1x16x180xbf16> to vector<16x180xbf16>
    %187 = arith.extf %186 : vector<16x180xbf16> to vector<16x180xf32>
    %188 = vector.broadcast %184 : f32 to vector<16x180xf32>
    %189 = arith.mulf %188, %187 : vector<16x180xf32>
    %190 = arith.addf %183, %189 : vector<16x180xf32>
    %c4_112 = arith.constant 4 : index
    %c2_113 = arith.constant 2 : index
    %191 = memref.load %arg1[%c4_112, %c2_113] : memref<8x8xf32, #tpu.memory_space<smem>>
    %c4_114 = arith.constant 4 : index
    %c0_115 = arith.constant 0 : index
    %c0_116 = arith.constant 0 : index
    %192 = vector.load %arg2[%c4_114, %c0_115, %c0_116] : memref<8x16x180xbf16, #tpu.memory_space<vmem>>, vector<1x16x180xbf16>
    %193 = vector.shape_cast %192 : vector<1x16x180xbf16> to vector<16x180xbf16>
    %194 = arith.extf %193 : vector<16x180xbf16> to vector<16x180xf32>
    %195 = vector.broadcast %191 : f32 to vector<16x180xf32>
    %196 = arith.mulf %195, %194 : vector<16x180xf32>
    %197 = arith.addf %190, %196 : vector<16x180xf32>
    %c5_117 = arith.constant 5 : index
    %c2_118 = arith.constant 2 : index
    %198 = memref.load %arg1[%c5_117, %c2_118] : memref<8x8xf32, #tpu.memory_space<smem>>
    %c5_119 = arith.constant 5 : index
    %c0_120 = arith.constant 0 : index
    %c0_121 = arith.constant 0 : index
    %199 = vector.load %arg2[%c5_119, %c0_120, %c0_121] : memref<8x16x180xbf16, #tpu.memory_space<vmem>>, vector<1x16x180xbf16>
    %200 = vector.shape_cast %199 : vector<1x16x180xbf16> to vector<16x180xbf16>
    %201 = arith.extf %200 : vector<16x180xbf16> to vector<16x180xf32>
    %202 = vector.broadcast %198 : f32 to vector<16x180xf32>
    %203 = arith.mulf %202, %201 : vector<16x180xf32>
    %204 = arith.addf %197, %203 : vector<16x180xf32>
    %c6_122 = arith.constant 6 : index
    %c2_123 = arith.constant 2 : index
    %205 = memref.load %arg1[%c6_122, %c2_123] : memref<8x8xf32, #tpu.memory_space<smem>>
    %c6_124 = arith.constant 6 : index
    %c0_125 = arith.constant 0 : index
    %c0_126 = arith.constant 0 : index
    %206 = vector.load %arg2[%c6_124, %c0_125, %c0_126] : memref<8x16x180xbf16, #tpu.memory_space<vmem>>, vector<1x16x180xbf16>
    %207 = vector.shape_cast %206 : vector<1x16x180xbf16> to vector<16x180xbf16>
    %208 = arith.extf %207 : vector<16x180xbf16> to vector<16x180xf32>
    %209 = vector.broadcast %205 : f32 to vector<16x180xf32>
    %210 = arith.mulf %209, %208 : vector<16x180xf32>
    %211 = arith.addf %204, %210 : vector<16x180xf32>
    %c7_127 = arith.constant 7 : index
    %c2_128 = arith.constant 2 : index
    %212 = memref.load %arg1[%c7_127, %c2_128] : memref<8x8xf32, #tpu.memory_space<smem>>
    %c7_129 = arith.constant 7 : index
    %c0_130 = arith.constant 0 : index
    %c0_131 = arith.constant 0 : index
    %213 = vector.load %arg2[%c7_129, %c0_130, %c0_131] : memref<8x16x180xbf16, #tpu.memory_space<vmem>>, vector<1x16x180xbf16>
    %214 = vector.shape_cast %213 : vector<1x16x180xbf16> to vector<16x180xbf16>
    %215 = arith.extf %214 : vector<16x180xbf16> to vector<16x180xf32>
    %216 = vector.broadcast %212 : f32 to vector<16x180xf32>
    %217 = arith.mulf %216, %215 : vector<16x180xf32>
    %218 = arith.addf %211, %217 : vector<16x180xf32>
    %219 = arith.mulf %218, %218 : vector<16x180xf32>
    %cst_132 = arith.constant dense<0.000000e+00> : vector<16xf32>
    %220 = vector.multi_reduction <add>, %219, %cst_132 [1] : vector<16x180xf32> to vector<16xf32>
    %221 = vector.shape_cast %220 : vector<16xf32> to vector<16x1xf32>
    %222 = arith.addf %142, %221 : vector<16x1xf32>
    %223 = arith.addf %1, %218 : vector<16x180xf32>
    %224 = vector.extract_strided_slice %223 {offsets = [0, 0], sizes = [16, 128], strides = [1, 1]} : vector<16x180xf32> to vector<16x128xf32>
    %225 = vector.extract_strided_slice %223 {offsets = [0, 128], sizes = [16, 52], strides = [1, 1]} : vector<16x180xf32> to vector<16x52xf32>
    %cst_133 = arith.constant dense<0.000000e+00> : vector<16x128xf32>
    %226 = tpu.matmul %225, %2, %cst_133 {dimension_numbers = #tpu.dot_dimension_numbers<[1], [0], [0], [1], [0, 0, 1, 1], [], []>} : vector<16x52xf32>, vector<52x128xf32>, vector<16x128xf32> -> vector<16x128xf32>
    %227 = arith.addf %224, %226 : vector<16x128xf32>
    %cst_134 = arith.constant dense<0xFF800000> : vector<16xf32>
    %228 = vector.multi_reduction <maximumf>, %227, %cst_134 [1] : vector<16x128xf32> to vector<16xf32>
    %229 = vector.shape_cast %228 : vector<16xf32> to vector<16x1xf32>
    %230 = vector.broadcast %229 : vector<16x1xf32> to vector<16x128xf32>
    %231 = arith.subf %227, %230 : vector<16x128xf32>
    %232 = math.exp %231 : vector<16x128xf32>
    %cst_135 = arith.constant dense<0.000000e+00> : vector<16xf32>
    %233 = vector.multi_reduction <add>, %232, %cst_135 [1] : vector<16x128xf32> to vector<16xf32>
    %234 = vector.shape_cast %233 : vector<16xf32> to vector<16x1xf32>
    %235 = math.log %234 : vector<16x1xf32>
    %236 = arith.addf %229, %235 : vector<16x1xf32>
    %237 = vector.broadcast %236 : vector<16x1xf32> to vector<16x128xf32>
    %238 = arith.subf %227, %237 : vector<16x128xf32>
    %cst_136 = arith.constant 3.21887589 : f32
    %239 = vector.broadcast %cst_136 : f32 to vector<16x128xf32>
    %240 = arith.subf %238, %239 : vector<16x128xf32>
    %c2_137 = arith.constant 2 : index
    %c0_138 = arith.constant 0 : index
    %c0_139 = arith.constant 0 : index
    %241 = vector.load %arg5[%c2_137, %c0_138, %c0_139] : memref<8x16x128xf32, #tpu.memory_space<vmem>>, vector<1x16x128xf32>
    %242 = vector.shape_cast %241 : vector<1x16x128xf32> to vector<16x128xf32>
    %243 = vector.shape_cast %240 : vector<16x128xf32> to vector<1x16x128xf32>
    tpu.vector_store %arg5[%c2_137, %c0_138, %c0_139], %243 {strides = array<i32>} : memref<8x16x128xf32, #tpu.memory_space<vmem>>, vector<1x16x128xf32>,
    %c0_140 = arith.constant 0 : index
    %c3_141 = arith.constant 3 : index
    %244 = memref.load %arg1[%c0_140, %c3_141] : memref<8x8xf32, #tpu.memory_space<smem>>
    %c0_142 = arith.constant 0 : index
    %c0_143 = arith.constant 0 : index
    %c0_144 = arith.constant 0 : index
    %245 = vector.load %arg2[%c0_142, %c0_143, %c0_144] : memref<8x16x180xbf16, #tpu.memory_space<vmem>>, vector<1x16x180xbf16>
    %246 = vector.shape_cast %245 : vector<1x16x180xbf16> to vector<16x180xbf16>
    %247 = arith.extf %246 : vector<16x180xbf16> to vector<16x180xf32>
    %248 = vector.broadcast %244 : f32 to vector<16x180xf32>
    %249 = arith.mulf %248, %247 : vector<16x180xf32>
    %c1_145 = arith.constant 1 : index
    %c3_146 = arith.constant 3 : index
    %250 = memref.load %arg1[%c1_145, %c3_146] : memref<8x8xf32, #tpu.memory_space<smem>>
    %c1_147 = arith.constant 1 : index
    %c0_148 = arith.constant 0 : index
    %c0_149 = arith.constant 0 : index
    %251 = vector.load %arg2[%c1_147, %c0_148, %c0_149] : memref<8x16x180xbf16, #tpu.memory_space<vmem>>, vector<1x16x180xbf16>
    %252 = vector.shape_cast %251 : vector<1x16x180xbf16> to vector<16x180xbf16>
    %253 = arith.extf %252 : vector<16x180xbf16> to vector<16x180xf32>
    %254 = vector.broadcast %250 : f32 to vector<16x180xf32>
    %255 = arith.mulf %254, %253 : vector<16x180xf32>
    %256 = arith.addf %249, %255 : vector<16x180xf32>
    %c2_150 = arith.constant 2 : index
    %c3_151 = arith.constant 3 : index
    %257 = memref.load %arg1[%c2_150, %c3_151] : memref<8x8xf32, #tpu.memory_space<smem>>
    %c2_152 = arith.constant 2 : index
    %c0_153 = arith.constant 0 : index
    %c0_154 = arith.constant 0 : index
    %258 = vector.load %arg2[%c2_152, %c0_153, %c0_154] : memref<8x16x180xbf16, #tpu.memory_space<vmem>>, vector<1x16x180xbf16>
    %259 = vector.shape_cast %258 : vector<1x16x180xbf16> to vector<16x180xbf16>
    %260 = arith.extf %259 : vector<16x180xbf16> to vector<16x180xf32>
    %261 = vector.broadcast %257 : f32 to vector<16x180xf32>
    %262 = arith.mulf %261, %260 : vector<16x180xf32>
    %263 = arith.addf %256, %262 : vector<16x180xf32>
    %c3_155 = arith.constant 3 : index
    %c3_156 = arith.constant 3 : index
    %264 = memref.load %arg1[%c3_155, %c3_156] : memref<8x8xf32, #tpu.memory_space<smem>>
    %c3_157 = arith.constant 3 : index
    %c0_158 = arith.constant 0 : index
    %c0_159 = arith.constant 0 : index
    %265 = vector.load %arg2[%c3_157, %c0_158, %c0_159] : memref<8x16x180xbf16, #tpu.memory_space<vmem>>, vector<1x16x180xbf16>
    %266 = vector.shape_cast %265 : vector<1x16x180xbf16> to vector<16x180xbf16>
    %267 = arith.extf %266 : vector<16x180xbf16> to vector<16x180xf32>
    %268 = vector.broadcast %264 : f32 to vector<16x180xf32>
    %269 = arith.mulf %268, %267 : vector<16x180xf32>
    %270 = arith.addf %263, %269 : vector<16x180xf32>
    %c4_160 = arith.constant 4 : index
    %c3_161 = arith.constant 3 : index
    %271 = memref.load %arg1[%c4_160, %c3_161] : memref<8x8xf32, #tpu.memory_space<smem>>
    %c4_162 = arith.constant 4 : index
    %c0_163 = arith.constant 0 : index
    %c0_164 = arith.constant 0 : index
    %272 = vector.load %arg2[%c4_162, %c0_163, %c0_164] : memref<8x16x180xbf16, #tpu.memory_space<vmem>>, vector<1x16x180xbf16>
    %273 = vector.shape_cast %272 : vector<1x16x180xbf16> to vector<16x180xbf16>
    %274 = arith.extf %273 : vector<16x180xbf16> to vector<16x180xf32>
    %275 = vector.broadcast %271 : f32 to vector<16x180xf32>
    %276 = arith.mulf %275, %274 : vector<16x180xf32>
    %277 = arith.addf %270, %276 : vector<16x180xf32>
    %c5_165 = arith.constant 5 : index
    %c3_166 = arith.constant 3 : index
    %278 = memref.load %arg1[%c5_165, %c3_166] : memref<8x8xf32, #tpu.memory_space<smem>>
    %c5_167 = arith.constant 5 : index
    %c0_168 = arith.constant 0 : index
    %c0_169 = arith.constant 0 : index
    %279 = vector.load %arg2[%c5_167, %c0_168, %c0_169] : memref<8x16x180xbf16, #tpu.memory_space<vmem>>, vector<1x16x180xbf16>
    %280 = vector.shape_cast %279 : vector<1x16x180xbf16> to vector<16x180xbf16>
    %281 = arith.extf %280 : vector<16x180xbf16> to vector<16x180xf32>
    %282 = vector.broadcast %278 : f32 to vector<16x180xf32>
    %283 = arith.mulf %282, %281 : vector<16x180xf32>
    %284 = arith.addf %277, %283 : vector<16x180xf32>
    %c6_170 = arith.constant 6 : index
    %c3_171 = arith.constant 3 : index
    %285 = memref.load %arg1[%c6_170, %c3_171] : memref<8x8xf32, #tpu.memory_space<smem>>
    %c6_172 = arith.constant 6 : index
    %c0_173 = arith.constant 0 : index
    %c0_174 = arith.constant 0 : index
    %286 = vector.load %arg2[%c6_172, %c0_173, %c0_174] : memref<8x16x180xbf16, #tpu.memory_space<vmem>>, vector<1x16x180xbf16>
    %287 = vector.shape_cast %286 : vector<1x16x180xbf16> to vector<16x180xbf16>
    %288 = arith.extf %287 : vector<16x180xbf16> to vector<16x180xf32>
    %289 = vector.broadcast %285 : f32 to vector<16x180xf32>
    %290 = arith.mulf %289, %288 : vector<16x180xf32>
    %291 = arith.addf %284, %290 : vector<16x180xf32>
    %c7_175 = arith.constant 7 : index
    %c3_176 = arith.constant 3 : index
    %292 = memref.load %arg1[%c7_175, %c3_176] : memref<8x8xf32, #tpu.memory_space<smem>>
    %c7_177 = arith.constant 7 : index
    %c0_178 = arith.constant 0 : index
    %c0_179 = arith.constant 0 : index
    %293 = vector.load %arg2[%c7_177, %c0_178, %c0_179] : memref<8x16x180xbf16, #tpu.memory_space<vmem>>, vector<1x16x180xbf16>
    %294 = vector.shape_cast %293 : vector<1x16x180xbf16> to vector<16x180xbf16>
    %295 = arith.extf %294 : vector<16x180xbf16> to vector<16x180xf32>
    %296 = vector.broadcast %292 : f32 to vector<16x180xf32>
    %297 = arith.mulf %296, %295 : vector<16x180xf32>
    %298 = arith.addf %291, %297 : vector<16x180xf32>
    %299 = arith.mulf %298, %298 : vector<16x180xf32>
    %cst_180 = arith.constant dense<0.000000e+00> : vector<16xf32>
    %300 = vector.multi_reduction <add>, %299, %cst_180 [1] : vector<16x180xf32> to vector<16xf32>
    %301 = vector.shape_cast %300 : vector<16xf32> to vector<16x1xf32>
    %302 = arith.addf %222, %301 : vector<16x1xf32>
    %303 = arith.addf %1, %298 : vector<16x180xf32>
    %304 = vector.extract_strided_slice %303 {offsets = [0, 0], sizes = [16, 128], strides = [1, 1]} : vector<16x180xf32> to vector<16x128xf32>
    %305 = vector.extract_strided_slice %303 {offsets = [0, 128], sizes = [16, 52], strides = [1, 1]} : vector<16x180xf32> to vector<16x52xf32>
    %cst_181 = arith.constant dense<0.000000e+00> : vector<16x128xf32>
    %306 = tpu.matmul %305, %2, %cst_181 {dimension_numbers = #tpu.dot_dimension_numbers<[1], [0], [0], [1], [0, 0, 1, 1], [], []>} : vector<16x52xf32>, vector<52x128xf32>, vector<16x128xf32> -> vector<16x128xf32>
    %307 = arith.addf %304, %306 : vector<16x128xf32>
    %cst_182 = arith.constant dense<0xFF800000> : vector<16xf32>
    %308 = vector.multi_reduction <maximumf>, %307, %cst_182 [1] : vector<16x128xf32> to vector<16xf32>
    %309 = vector.shape_cast %308 : vector<16xf32> to vector<16x1xf32>
    %310 = vector.broadcast %309 : vector<16x1xf32> to vector<16x128xf32>
    %311 = arith.subf %307, %310 : vector<16x128xf32>
    %312 = math.exp %311 : vector<16x128xf32>
    %cst_183 = arith.constant dense<0.000000e+00> : vector<16xf32>
    %313 = vector.multi_reduction <add>, %312, %cst_183 [1] : vector<16x128xf32> to vector<16xf32>
    %314 = vector.shape_cast %313 : vector<16xf32> to vector<16x1xf32>
    %315 = math.log %314 : vector<16x1xf32>
    %316 = arith.addf %309, %315 : vector<16x1xf32>
    %317 = vector.broadcast %316 : vector<16x1xf32> to vector<16x128xf32>
    %318 = arith.subf %307, %317 : vector<16x128xf32>
    %cst_184 = arith.constant 3.21887589 : f32
    %319 = vector.broadcast %cst_184 : f32 to vector<16x128xf32>
    %320 = arith.subf %318, %319 : vector<16x128xf32>
    %c3_185 = arith.constant 3 : index
    %c0_186 = arith.constant 0 : index
    %c0_187 = arith.constant 0 : index
    %321 = vector.load %arg5[%c3_185, %c0_186, %c0_187] : memref<8x16x128xf32, #tpu.memory_space<vmem>>, vector<1x16x128xf32>
    %322 = vector.shape_cast %321 : vector<1x16x128xf32> to vector<16x128xf32>
    %323 = vector.shape_cast %320 : vector<16x128xf32> to vector<1x16x128xf32>
    tpu.vector_store %arg5[%c3_185, %c0_186, %c0_187], %323 {strides = array<i32>} : memref<8x16x128xf32, #tpu.memory_space<vmem>>, vector<1x16x128xf32>,
    %c0_188 = arith.constant 0 : index
    %c4_189 = arith.constant 4 : index
    %324 = memref.load %arg1[%c0_188, %c4_189] : memref<8x8xf32, #tpu.memory_space<smem>>
    %c0_190 = arith.constant 0 : index
    %c0_191 = arith.constant 0 : index
    %c0_192 = arith.constant 0 : index
    %325 = vector.load %arg2[%c0_190, %c0_191, %c0_192] : memref<8x16x180xbf16, #tpu.memory_space<vmem>>, vector<1x16x180xbf16>
    %326 = vector.shape_cast %325 : vector<1x16x180xbf16> to vector<16x180xbf16>
    %327 = arith.extf %326 : vector<16x180xbf16> to vector<16x180xf32>
    %328 = vector.broadcast %324 : f32 to vector<16x180xf32>
    %329 = arith.mulf %328, %327 : vector<16x180xf32>
    %c1_193 = arith.constant 1 : index
    %c4_194 = arith.constant 4 : index
    %330 = memref.load %arg1[%c1_193, %c4_194] : memref<8x8xf32, #tpu.memory_space<smem>>
    %c1_195 = arith.constant 1 : index
    %c0_196 = arith.constant 0 : index
    %c0_197 = arith.constant 0 : index
    %331 = vector.load %arg2[%c1_195, %c0_196, %c0_197] : memref<8x16x180xbf16, #tpu.memory_space<vmem>>, vector<1x16x180xbf16>
    %332 = vector.shape_cast %331 : vector<1x16x180xbf16> to vector<16x180xbf16>
    %333 = arith.extf %332 : vector<16x180xbf16> to vector<16x180xf32>
    %334 = vector.broadcast %330 : f32 to vector<16x180xf32>
    %335 = arith.mulf %334, %333 : vector<16x180xf32>
    %336 = arith.addf %329, %335 : vector<16x180xf32>
    %c2_198 = arith.constant 2 : index
    %c4_199 = arith.constant 4 : index
    %337 = memref.load %arg1[%c2_198, %c4_199] : memref<8x8xf32, #tpu.memory_space<smem>>
    %c2_200 = arith.constant 2 : index
    %c0_201 = arith.constant 0 : index
    %c0_202 = arith.constant 0 : index
    %338 = vector.load %arg2[%c2_200, %c0_201, %c0_202] : memref<8x16x180xbf16, #tpu.memory_space<vmem>>, vector<1x16x180xbf16>
    %339 = vector.shape_cast %338 : vector<1x16x180xbf16> to vector<16x180xbf16>
    %340 = arith.extf %339 : vector<16x180xbf16> to vector<16x180xf32>
    %341 = vector.broadcast %337 : f32 to vector<16x180xf32>
    %342 = arith.mulf %341, %340 : vector<16x180xf32>
    %343 = arith.addf %336, %342 : vector<16x180xf32>
    %c3_203 = arith.constant 3 : index
    %c4_204 = arith.constant 4 : index
    %344 = memref.load %arg1[%c3_203, %c4_204] : memref<8x8xf32, #tpu.memory_space<smem>>
    %c3_205 = arith.constant 3 : index
    %c0_206 = arith.constant 0 : index
    %c0_207 = arith.constant 0 : index
    %345 = vector.load %arg2[%c3_205, %c0_206, %c0_207] : memref<8x16x180xbf16, #tpu.memory_space<vmem>>, vector<1x16x180xbf16>
    %346 = vector.shape_cast %345 : vector<1x16x180xbf16> to vector<16x180xbf16>
    %347 = arith.extf %346 : vector<16x180xbf16> to vector<16x180xf32>
    %348 = vector.broadcast %344 : f32 to vector<16x180xf32>
    %349 = arith.mulf %348, %347 : vector<16x180xf32>
    %350 = arith.addf %343, %349 : vector<16x180xf32>
    %c4_208 = arith.constant 4 : index
    %c4_209 = arith.constant 4 : index
    %351 = memref.load %arg1[%c4_208, %c4_209] : memref<8x8xf32, #tpu.memory_space<smem>>
    %c4_210 = arith.constant 4 : index
    %c0_211 = arith.constant 0 : index
    %c0_212 = arith.constant 0 : index
    %352 = vector.load %arg2[%c4_210, %c0_211, %c0_212] : memref<8x16x180xbf16, #tpu.memory_space<vmem>>, vector<1x16x180xbf16>
    %353 = vector.shape_cast %352 : vector<1x16x180xbf16> to vector<16x180xbf16>
    %354 = arith.extf %353 : vector<16x180xbf16> to vector<16x180xf32>
    %355 = vector.broadcast %351 : f32 to vector<16x180xf32>
    %356 = arith.mulf %355, %354 : vector<16x180xf32>
    %357 = arith.addf %350, %356 : vector<16x180xf32>
    %c5_213 = arith.constant 5 : index
    %c4_214 = arith.constant 4 : index
    %358 = memref.load %arg1[%c5_213, %c4_214] : memref<8x8xf32, #tpu.memory_space<smem>>
    %c5_215 = arith.constant 5 : index
    %c0_216 = arith.constant 0 : index
    %c0_217 = arith.constant 0 : index
    %359 = vector.load %arg2[%c5_215, %c0_216, %c0_217] : memref<8x16x180xbf16, #tpu.memory_space<vmem>>, vector<1x16x180xbf16>
    %360 = vector.shape_cast %359 : vector<1x16x180xbf16> to vector<16x180xbf16>
    %361 = arith.extf %360 : vector<16x180xbf16> to vector<16x180xf32>
    %362 = vector.broadcast %358 : f32 to vector<16x180xf32>
    %363 = arith.mulf %362, %361 : vector<16x180xf32>
    %364 = arith.addf %357, %363 : vector<16x180xf32>
    %c6_218 = arith.constant 6 : index
    %c4_219 = arith.constant 4 : index
    %365 = memref.load %arg1[%c6_218, %c4_219] : memref<8x8xf32, #tpu.memory_space<smem>>
    %c6_220 = arith.constant 6 : index
    %c0_221 = arith.constant 0 : index
    %c0_222 = arith.constant 0 : index
    %366 = vector.load %arg2[%c6_220, %c0_221, %c0_222] : memref<8x16x180xbf16, #tpu.memory_space<vmem>>, vector<1x16x180xbf16>
    %367 = vector.shape_cast %366 : vector<1x16x180xbf16> to vector<16x180xbf16>
    %368 = arith.extf %367 : vector<16x180xbf16> to vector<16x180xf32>
    %369 = vector.broadcast %365 : f32 to vector<16x180xf32>
    %370 = arith.mulf %369, %368 : vector<16x180xf32>
    %371 = arith.addf %364, %370 : vector<16x180xf32>
    %c7_223 = arith.constant 7 : index
    %c4_224 = arith.constant 4 : index
    %372 = memref.load %arg1[%c7_223, %c4_224] : memref<8x8xf32, #tpu.memory_space<smem>>
    %c7_225 = arith.constant 7 : index
    %c0_226 = arith.constant 0 : index
    %c0_227 = arith.constant 0 : index
    %373 = vector.load %arg2[%c7_225, %c0_226, %c0_227] : memref<8x16x180xbf16, #tpu.memory_space<vmem>>, vector<1x16x180xbf16>
    %374 = vector.shape_cast %373 : vector<1x16x180xbf16> to vector<16x180xbf16>
    %375 = arith.extf %374 : vector<16x180xbf16> to vector<16x180xf32>
    %376 = vector.broadcast %372 : f32 to vector<16x180xf32>
    %377 = arith.mulf %376, %375 : vector<16x180xf32>
    %378 = arith.addf %371, %377 : vector<16x180xf32>
    %379 = arith.mulf %378, %378 : vector<16x180xf32>
    %cst_228 = arith.constant dense<0.000000e+00> : vector<16xf32>
    %380 = vector.multi_reduction <add>, %379, %cst_228 [1] : vector<16x180xf32> to vector<16xf32>
    %381 = vector.shape_cast %380 : vector<16xf32> to vector<16x1xf32>
    %382 = arith.addf %302, %381 : vector<16x1xf32>
    %383 = arith.addf %1, %378 : vector<16x180xf32>
    %384 = vector.extract_strided_slice %383 {offsets = [0, 0], sizes = [16, 128], strides = [1, 1]} : vector<16x180xf32> to vector<16x128xf32>
    %385 = vector.extract_strided_slice %383 {offsets = [0, 128], sizes = [16, 52], strides = [1, 1]} : vector<16x180xf32> to vector<16x52xf32>
    %cst_229 = arith.constant dense<0.000000e+00> : vector<16x128xf32>
    %386 = tpu.matmul %385, %2, %cst_229 {dimension_numbers = #tpu.dot_dimension_numbers<[1], [0], [0], [1], [0, 0, 1, 1], [], []>} : vector<16x52xf32>, vector<52x128xf32>, vector<16x128xf32> -> vector<16x128xf32>
    %387 = arith.addf %384, %386 : vector<16x128xf32>
    %cst_230 = arith.constant dense<0xFF800000> : vector<16xf32>
    %388 = vector.multi_reduction <maximumf>, %387, %cst_230 [1] : vector<16x128xf32> to vector<16xf32>
    %389 = vector.shape_cast %388 : vector<16xf32> to vector<16x1xf32>
    %390 = vector.broadcast %389 : vector<16x1xf32> to vector<16x128xf32>
    %391 = arith.subf %387, %390 : vector<16x128xf32>
    %392 = math.exp %391 : vector<16x128xf32>
    %cst_231 = arith.constant dense<0.000000e+00> : vector<16xf32>
    %393 = vector.multi_reduction <add>, %392, %cst_231 [1] : vector<16x128xf32> to vector<16xf32>
    %394 = vector.shape_cast %393 : vector<16xf32> to vector<16x1xf32>
    %395 = math.log %394 : vector<16x1xf32>
    %396 = arith.addf %389, %395 : vector<16x1xf32>
    %397 = vector.broadcast %396 : vector<16x1xf32> to vector<16x128xf32>
    %398 = arith.subf %387, %397 : vector<16x128xf32>
    %cst_232 = arith.constant 3.21887589 : f32
    %399 = vector.broadcast %cst_232 : f32 to vector<16x128xf32>
    %400 = arith.subf %398, %399 : vector<16x128xf32>
    %c4_233 = arith.constant 4 : index
    %c0_234 = arith.constant 0 : index
    %c0_235 = arith.constant 0 : index
    %401 = vector.load %arg5[%c4_233, %c0_234, %c0_235] : memref<8x16x128xf32, #tpu.memory_space<vmem>>, vector<1x16x128xf32>
    %402 = vector.shape_cast %401 : vector<1x16x128xf32> to vector<16x128xf32>
    %403 = vector.shape_cast %400 : vector<16x128xf32> to vector<1x16x128xf32>
    tpu.vector_store %arg5[%c4_233, %c0_234, %c0_235], %403 {strides = array<i32>} : memref<8x16x128xf32, #tpu.memory_space<vmem>>, vector<1x16x128xf32>,
    %c0_236 = arith.constant 0 : index
    %c5_237 = arith.constant 5 : index
    %404 = memref.load %arg1[%c0_236, %c5_237] : memref<8x8xf32, #tpu.memory_space<smem>>
    %c0_238 = arith.constant 0 : index
    %c0_239 = arith.constant 0 : index
    %c0_240 = arith.constant 0 : index
    %405 = vector.load %arg2[%c0_238, %c0_239, %c0_240] : memref<8x16x180xbf16, #tpu.memory_space<vmem>>, vector<1x16x180xbf16>
    %406 = vector.shape_cast %405 : vector<1x16x180xbf16> to vector<16x180xbf16>
    %407 = arith.extf %406 : vector<16x180xbf16> to vector<16x180xf32>
    %408 = vector.broadcast %404 : f32 to vector<16x180xf32>
    %409 = arith.mulf %408, %407 : vector<16x180xf32>
    %c1_241 = arith.constant 1 : index
    %c5_242 = arith.constant 5 : index
    %410 = memref.load %arg1[%c1_241, %c5_242] : memref<8x8xf32, #tpu.memory_space<smem>>
    %c1_243 = arith.constant 1 : index
    %c0_244 = arith.constant 0 : index
    %c0_245 = arith.constant 0 : index
    %411 = vector.load %arg2[%c1_243, %c0_244, %c0_245] : memref<8x16x180xbf16, #tpu.memory_space<vmem>>, vector<1x16x180xbf16>
    %412 = vector.shape_cast %411 : vector<1x16x180xbf16> to vector<16x180xbf16>
    %413 = arith.extf %412 : vector<16x180xbf16> to vector<16x180xf32>
    %414 = vector.broadcast %410 : f32 to vector<16x180xf32>
    %415 = arith.mulf %414, %413 : vector<16x180xf32>
    %416 = arith.addf %409, %415 : vector<16x180xf32>
    %c2_246 = arith.constant 2 : index
    %c5_247 = arith.constant 5 : index
    %417 = memref.load %arg1[%c2_246, %c5_247] : memref<8x8xf32, #tpu.memory_space<smem>>
    %c2_248 = arith.constant 2 : index
    %c0_249 = arith.constant 0 : index
    %c0_250 = arith.constant 0 : index
    %418 = vector.load %arg2[%c2_248, %c0_249, %c0_250] : memref<8x16x180xbf16, #tpu.memory_space<vmem>>, vector<1x16x180xbf16>
    %419 = vector.shape_cast %418 : vector<1x16x180xbf16> to vector<16x180xbf16>
    %420 = arith.extf %419 : vector<16x180xbf16> to vector<16x180xf32>
    %421 = vector.broadcast %417 : f32 to vector<16x180xf32>
    %422 = arith.mulf %421, %420 : vector<16x180xf32>
    %423 = arith.addf %416, %422 : vector<16x180xf32>
    %c3_251 = arith.constant 3 : index
    %c5_252 = arith.constant 5 : index
    %424 = memref.load %arg1[%c3_251, %c5_252] : memref<8x8xf32, #tpu.memory_space<smem>>
    %c3_253 = arith.constant 3 : index
    %c0_254 = arith.constant 0 : index
    %c0_255 = arith.constant 0 : index
    %425 = vector.load %arg2[%c3_253, %c0_254, %c0_255] : memref<8x16x180xbf16, #tpu.memory_space<vmem>>, vector<1x16x180xbf16>
    %426 = vector.shape_cast %425 : vector<1x16x180xbf16> to vector<16x180xbf16>
    %427 = arith.extf %426 : vector<16x180xbf16> to vector<16x180xf32>
    %428 = vector.broadcast %424 : f32 to vector<16x180xf32>
    %429 = arith.mulf %428, %427 : vector<16x180xf32>
    %430 = arith.addf %423, %429 : vector<16x180xf32>
    %c4_256 = arith.constant 4 : index
    %c5_257 = arith.constant 5 : index
    %431 = memref.load %arg1[%c4_256, %c5_257] : memref<8x8xf32, #tpu.memory_space<smem>>
    %c4_258 = arith.constant 4 : index
    %c0_259 = arith.constant 0 : index
    %c0_260 = arith.constant 0 : index
    %432 = vector.load %arg2[%c4_258, %c0_259, %c0_260] : memref<8x16x180xbf16, #tpu.memory_space<vmem>>, vector<1x16x180xbf16>
    %433 = vector.shape_cast %432 : vector<1x16x180xbf16> to vector<16x180xbf16>
    %434 = arith.extf %433 : vector<16x180xbf16> to vector<16x180xf32>
    %435 = vector.broadcast %431 : f32 to vector<16x180xf32>
    %436 = arith.mulf %435, %434 : vector<16x180xf32>
    %437 = arith.addf %430, %436 : vector<16x180xf32>
    %c5_261 = arith.constant 5 : index
    %c5_262 = arith.constant 5 : index
    %438 = memref.load %arg1[%c5_261, %c5_262] : memref<8x8xf32, #tpu.memory_space<smem>>
    %c5_263 = arith.constant 5 : index
    %c0_264 = arith.constant 0 : index
    %c0_265 = arith.constant 0 : index
    %439 = vector.load %arg2[%c5_263, %c0_264, %c0_265] : memref<8x16x180xbf16, #tpu.memory_space<vmem>>, vector<1x16x180xbf16>
    %440 = vector.shape_cast %439 : vector<1x16x180xbf16> to vector<16x180xbf16>
    %441 = arith.extf %440 : vector<16x180xbf16> to vector<16x180xf32>
    %442 = vector.broadcast %438 : f32 to vector<16x180xf32>
    %443 = arith.mulf %442, %441 : vector<16x180xf32>
    %444 = arith.addf %437, %443 : vector<16x180xf32>
    %c6_266 = arith.constant 6 : index
    %c5_267 = arith.constant 5 : index
    %445 = memref.load %arg1[%c6_266, %c5_267] : memref<8x8xf32, #tpu.memory_space<smem>>
    %c6_268 = arith.constant 6 : index
    %c0_269 = arith.constant 0 : index
    %c0_270 = arith.constant 0 : index
    %446 = vector.load %arg2[%c6_268, %c0_269, %c0_270] : memref<8x16x180xbf16, #tpu.memory_space<vmem>>, vector<1x16x180xbf16>
    %447 = vector.shape_cast %446 : vector<1x16x180xbf16> to vector<16x180xbf16>
    %448 = arith.extf %447 : vector<16x180xbf16> to vector<16x180xf32>
    %449 = vector.broadcast %445 : f32 to vector<16x180xf32>
    %450 = arith.mulf %449, %448 : vector<16x180xf32>
    %451 = arith.addf %444, %450 : vector<16x180xf32>
    %c7_271 = arith.constant 7 : index
    %c5_272 = arith.constant 5 : index
    %452 = memref.load %arg1[%c7_271, %c5_272] : memref<8x8xf32, #tpu.memory_space<smem>>
    %c7_273 = arith.constant 7 : index
    %c0_274 = arith.constant 0 : index
    %c0_275 = arith.constant 0 : index
    %453 = vector.load %arg2[%c7_273, %c0_274, %c0_275] : memref<8x16x180xbf16, #tpu.memory_space<vmem>>, vector<1x16x180xbf16>
    %454 = vector.shape_cast %453 : vector<1x16x180xbf16> to vector<16x180xbf16>
    %455 = arith.extf %454 : vector<16x180xbf16> to vector<16x180xf32>
    %456 = vector.broadcast %452 : f32 to vector<16x180xf32>
    %457 = arith.mulf %456, %455 : vector<16x180xf32>
    %458 = arith.addf %451, %457 : vector<16x180xf32>
    %459 = arith.mulf %458, %458 : vector<16x180xf32>
    %cst_276 = arith.constant dense<0.000000e+00> : vector<16xf32>
    %460 = vector.multi_reduction <add>, %459, %cst_276 [1] : vector<16x180xf32> to vector<16xf32>
    %461 = vector.shape_cast %460 : vector<16xf32> to vector<16x1xf32>
    %462 = arith.addf %382, %461 : vector<16x1xf32>
    %463 = arith.addf %1, %458 : vector<16x180xf32>
    %464 = vector.extract_strided_slice %463 {offsets = [0, 0], sizes = [16, 128], strides = [1, 1]} : vector<16x180xf32> to vector<16x128xf32>
    %465 = vector.extract_strided_slice %463 {offsets = [0, 128], sizes = [16, 52], strides = [1, 1]} : vector<16x180xf32> to vector<16x52xf32>
    %cst_277 = arith.constant dense<0.000000e+00> : vector<16x128xf32>
    %466 = tpu.matmul %465, %2, %cst_277 {dimension_numbers = #tpu.dot_dimension_numbers<[1], [0], [0], [1], [0, 0, 1, 1], [], []>} : vector<16x52xf32>, vector<52x128xf32>, vector<16x128xf32> -> vector<16x128xf32>
    %467 = arith.addf %464, %466 : vector<16x128xf32>
    %cst_278 = arith.constant dense<0xFF800000> : vector<16xf32>
    %468 = vector.multi_reduction <maximumf>, %467, %cst_278 [1] : vector<16x128xf32> to vector<16xf32>
    %469 = vector.shape_cast %468 : vector<16xf32> to vector<16x1xf32>
    %470 = vector.broadcast %469 : vector<16x1xf32> to vector<16x128xf32>
    %471 = arith.subf %467, %470 : vector<16x128xf32>
    %472 = math.exp %471 : vector<16x128xf32>
    %cst_279 = arith.constant dense<0.000000e+00> : vector<16xf32>
    %473 = vector.multi_reduction <add>, %472, %cst_279 [1] : vector<16x128xf32> to vector<16xf32>
    %474 = vector.shape_cast %473 : vector<16xf32> to vector<16x1xf32>
    %475 = math.log %474 : vector<16x1xf32>
    %476 = arith.addf %469, %475 : vector<16x1xf32>
    %477 = vector.broadcast %476 : vector<16x1xf32> to vector<16x128xf32>
    %478 = arith.subf %467, %477 : vector<16x128xf32>
    %cst_280 = arith.constant 3.21887589 : f32
    %479 = vector.broadcast %cst_280 : f32 to vector<16x128xf32>
    %480 = arith.subf %478, %479 : vector<16x128xf32>
    %c5_281 = arith.constant 5 : index
    %c0_282 = arith.constant 0 : index
    %c0_283 = arith.constant 0 : index
    %481 = vector.load %arg5[%c5_281, %c0_282, %c0_283] : memref<8x16x128xf32, #tpu.memory_space<vmem>>, vector<1x16x128xf32>
    %482 = vector.shape_cast %481 : vector<1x16x128xf32> to vector<16x128xf32>
    %483 = vector.shape_cast %480 : vector<16x128xf32> to vector<1x16x128xf32>
    tpu.vector_store %arg5[%c5_281, %c0_282, %c0_283], %483 {strides = array<i32>} : memref<8x16x128xf32, #tpu.memory_space<vmem>>, vector<1x16x128xf32>,
    %c0_284 = arith.constant 0 : index
    %c6_285 = arith.constant 6 : index
    %484 = memref.load %arg1[%c0_284, %c6_285] : memref<8x8xf32, #tpu.memory_space<smem>>
    %c0_286 = arith.constant 0 : index
    %c0_287 = arith.constant 0 : index
    %c0_288 = arith.constant 0 : index
    %485 = vector.load %arg2[%c0_286, %c0_287, %c0_288] : memref<8x16x180xbf16, #tpu.memory_space<vmem>>, vector<1x16x180xbf16>
    %486 = vector.shape_cast %485 : vector<1x16x180xbf16> to vector<16x180xbf16>
    %487 = arith.extf %486 : vector<16x180xbf16> to vector<16x180xf32>
    %488 = vector.broadcast %484 : f32 to vector<16x180xf32>
    %489 = arith.mulf %488, %487 : vector<16x180xf32>
    %c1_289 = arith.constant 1 : index
    %c6_290 = arith.constant 6 : index
    %490 = memref.load %arg1[%c1_289, %c6_290] : memref<8x8xf32, #tpu.memory_space<smem>>
    %c1_291 = arith.constant 1 : index
    %c0_292 = arith.constant 0 : index
    %c0_293 = arith.constant 0 : index
    %491 = vector.load %arg2[%c1_291, %c0_292, %c0_293] : memref<8x16x180xbf16, #tpu.memory_space<vmem>>, vector<1x16x180xbf16>
    %492 = vector.shape_cast %491 : vector<1x16x180xbf16> to vector<16x180xbf16>
    %493 = arith.extf %492 : vector<16x180xbf16> to vector<16x180xf32>
    %494 = vector.broadcast %490 : f32 to vector<16x180xf32>
    %495 = arith.mulf %494, %493 : vector<16x180xf32>
    %496 = arith.addf %489, %495 : vector<16x180xf32>
    %c2_294 = arith.constant 2 : index
    %c6_295 = arith.constant 6 : index
    %497 = memref.load %arg1[%c2_294, %c6_295] : memref<8x8xf32, #tpu.memory_space<smem>>
    %c2_296 = arith.constant 2 : index
    %c0_297 = arith.constant 0 : index
    %c0_298 = arith.constant 0 : index
    %498 = vector.load %arg2[%c2_296, %c0_297, %c0_298] : memref<8x16x180xbf16, #tpu.memory_space<vmem>>, vector<1x16x180xbf16>
    %499 = vector.shape_cast %498 : vector<1x16x180xbf16> to vector<16x180xbf16>
    %500 = arith.extf %499 : vector<16x180xbf16> to vector<16x180xf32>
    %501 = vector.broadcast %497 : f32 to vector<16x180xf32>
    %502 = arith.mulf %501, %500 : vector<16x180xf32>
    %503 = arith.addf %496, %502 : vector<16x180xf32>
    %c3_299 = arith.constant 3 : index
    %c6_300 = arith.constant 6 : index
    %504 = memref.load %arg1[%c3_299, %c6_300] : memref<8x8xf32, #tpu.memory_space<smem>>
    %c3_301 = arith.constant 3 : index
    %c0_302 = arith.constant 0 : index
    %c0_303 = arith.constant 0 : index
    %505 = vector.load %arg2[%c3_301, %c0_302, %c0_303] : memref<8x16x180xbf16, #tpu.memory_space<vmem>>, vector<1x16x180xbf16>
    %506 = vector.shape_cast %505 : vector<1x16x180xbf16> to vector<16x180xbf16>
    %507 = arith.extf %506 : vector<16x180xbf16> to vector<16x180xf32>
    %508 = vector.broadcast %504 : f32 to vector<16x180xf32>
    %509 = arith.mulf %508, %507 : vector<16x180xf32>
    %510 = arith.addf %503, %509 : vector<16x180xf32>
    %c4_304 = arith.constant 4 : index
    %c6_305 = arith.constant 6 : index
    %511 = memref.load %arg1[%c4_304, %c6_305] : memref<8x8xf32, #tpu.memory_space<smem>>
    %c4_306 = arith.constant 4 : index
    %c0_307 = arith.constant 0 : index
    %c0_308 = arith.constant 0 : index
    %512 = vector.load %arg2[%c4_306, %c0_307, %c0_308] : memref<8x16x180xbf16, #tpu.memory_space<vmem>>, vector<1x16x180xbf16>
    %513 = vector.shape_cast %512 : vector<1x16x180xbf16> to vector<16x180xbf16>
    %514 = arith.extf %513 : vector<16x180xbf16> to vector<16x180xf32>
    %515 = vector.broadcast %511 : f32 to vector<16x180xf32>
    %516 = arith.mulf %515, %514 : vector<16x180xf32>
    %517 = arith.addf %510, %516 : vector<16x180xf32>
    %c5_309 = arith.constant 5 : index
    %c6_310 = arith.constant 6 : index
    %518 = memref.load %arg1[%c5_309, %c6_310] : memref<8x8xf32, #tpu.memory_space<smem>>
    %c5_311 = arith.constant 5 : index
    %c0_312 = arith.constant 0 : index
    %c0_313 = arith.constant 0 : index
    %519 = vector.load %arg2[%c5_311, %c0_312, %c0_313] : memref<8x16x180xbf16, #tpu.memory_space<vmem>>, vector<1x16x180xbf16>
    %520 = vector.shape_cast %519 : vector<1x16x180xbf16> to vector<16x180xbf16>
    %521 = arith.extf %520 : vector<16x180xbf16> to vector<16x180xf32>
    %522 = vector.broadcast %518 : f32 to vector<16x180xf32>
    %523 = arith.mulf %522, %521 : vector<16x180xf32>
    %524 = arith.addf %517, %523 : vector<16x180xf32>
    %c6_314 = arith.constant 6 : index
    %c6_315 = arith.constant 6 : index
    %525 = memref.load %arg1[%c6_314, %c6_315] : memref<8x8xf32, #tpu.memory_space<smem>>
    %c6_316 = arith.constant 6 : index
    %c0_317 = arith.constant 0 : index
    %c0_318 = arith.constant 0 : index
    %526 = vector.load %arg2[%c6_316, %c0_317, %c0_318] : memref<8x16x180xbf16, #tpu.memory_space<vmem>>, vector<1x16x180xbf16>
    %527 = vector.shape_cast %526 : vector<1x16x180xbf16> to vector<16x180xbf16>
    %528 = arith.extf %527 : vector<16x180xbf16> to vector<16x180xf32>
    %529 = vector.broadcast %525 : f32 to vector<16x180xf32>
    %530 = arith.mulf %529, %528 : vector<16x180xf32>
    %531 = arith.addf %524, %530 : vector<16x180xf32>
    %c7_319 = arith.constant 7 : index
    %c6_320 = arith.constant 6 : index
    %532 = memref.load %arg1[%c7_319, %c6_320] : memref<8x8xf32, #tpu.memory_space<smem>>
    %c7_321 = arith.constant 7 : index
    %c0_322 = arith.constant 0 : index
    %c0_323 = arith.constant 0 : index
    %533 = vector.load %arg2[%c7_321, %c0_322, %c0_323] : memref<8x16x180xbf16, #tpu.memory_space<vmem>>, vector<1x16x180xbf16>
    %534 = vector.shape_cast %533 : vector<1x16x180xbf16> to vector<16x180xbf16>
    %535 = arith.extf %534 : vector<16x180xbf16> to vector<16x180xf32>
    %536 = vector.broadcast %532 : f32 to vector<16x180xf32>
    %537 = arith.mulf %536, %535 : vector<16x180xf32>
    %538 = arith.addf %531, %537 : vector<16x180xf32>
    %539 = arith.mulf %538, %538 : vector<16x180xf32>
    %cst_324 = arith.constant dense<0.000000e+00> : vector<16xf32>
    %540 = vector.multi_reduction <add>, %539, %cst_324 [1] : vector<16x180xf32> to vector<16xf32>
    %541 = vector.shape_cast %540 : vector<16xf32> to vector<16x1xf32>
    %542 = arith.addf %462, %541 : vector<16x1xf32>
    %543 = arith.addf %1, %538 : vector<16x180xf32>
    %544 = vector.extract_strided_slice %543 {offsets = [0, 0], sizes = [16, 128], strides = [1, 1]} : vector<16x180xf32> to vector<16x128xf32>
    %545 = vector.extract_strided_slice %543 {offsets = [0, 128], sizes = [16, 52], strides = [1, 1]} : vector<16x180xf32> to vector<16x52xf32>
    %cst_325 = arith.constant dense<0.000000e+00> : vector<16x128xf32>
    %546 = tpu.matmul %545, %2, %cst_325 {dimension_numbers = #tpu.dot_dimension_numbers<[1], [0], [0], [1], [0, 0, 1, 1], [], []>} : vector<16x52xf32>, vector<52x128xf32>, vector<16x128xf32> -> vector<16x128xf32>
    %547 = arith.addf %544, %546 : vector<16x128xf32>
    %cst_326 = arith.constant dense<0xFF800000> : vector<16xf32>
    %548 = vector.multi_reduction <maximumf>, %547, %cst_326 [1] : vector<16x128xf32> to vector<16xf32>
    %549 = vector.shape_cast %548 : vector<16xf32> to vector<16x1xf32>
    %550 = vector.broadcast %549 : vector<16x1xf32> to vector<16x128xf32>
    %551 = arith.subf %547, %550 : vector<16x128xf32>
    %552 = math.exp %551 : vector<16x128xf32>
    %cst_327 = arith.constant dense<0.000000e+00> : vector<16xf32>
    %553 = vector.multi_reduction <add>, %552, %cst_327 [1] : vector<16x128xf32> to vector<16xf32>
    %554 = vector.shape_cast %553 : vector<16xf32> to vector<16x1xf32>
    %555 = math.log %554 : vector<16x1xf32>
    %556 = arith.addf %549, %555 : vector<16x1xf32>
    %557 = vector.broadcast %556 : vector<16x1xf32> to vector<16x128xf32>
    %558 = arith.subf %547, %557 : vector<16x128xf32>
    %cst_328 = arith.constant 3.21887589 : f32
    %559 = vector.broadcast %cst_328 : f32 to vector<16x128xf32>
    %560 = arith.subf %558, %559 : vector<16x128xf32>
    %c6_329 = arith.constant 6 : index
    %c0_330 = arith.constant 0 : index
    %c0_331 = arith.constant 0 : index
    %561 = vector.load %arg5[%c6_329, %c0_330, %c0_331] : memref<8x16x128xf32, #tpu.memory_space<vmem>>, vector<1x16x128xf32>
    %562 = vector.shape_cast %561 : vector<1x16x128xf32> to vector<16x128xf32>
    %563 = vector.shape_cast %560 : vector<16x128xf32> to vector<1x16x128xf32>
    tpu.vector_store %arg5[%c6_329, %c0_330, %c0_331], %563 {strides = array<i32>} : memref<8x16x128xf32, #tpu.memory_space<vmem>>, vector<1x16x128xf32>,
    %c0_332 = arith.constant 0 : index
    %c7_333 = arith.constant 7 : index
    %564 = memref.load %arg1[%c0_332, %c7_333] : memref<8x8xf32, #tpu.memory_space<smem>>
    %c0_334 = arith.constant 0 : index
    %c0_335 = arith.constant 0 : index
    %c0_336 = arith.constant 0 : index
    %565 = vector.load %arg2[%c0_334, %c0_335, %c0_336] : memref<8x16x180xbf16, #tpu.memory_space<vmem>>, vector<1x16x180xbf16>
    %566 = vector.shape_cast %565 : vector<1x16x180xbf16> to vector<16x180xbf16>
    %567 = arith.extf %566 : vector<16x180xbf16> to vector<16x180xf32>
    %568 = vector.broadcast %564 : f32 to vector<16x180xf32>
    %569 = arith.mulf %568, %567 : vector<16x180xf32>
    %c1_337 = arith.constant 1 : index
    %c7_338 = arith.constant 7 : index
    %570 = memref.load %arg1[%c1_337, %c7_338] : memref<8x8xf32, #tpu.memory_space<smem>>
    %c1_339 = arith.constant 1 : index
    %c0_340 = arith.constant 0 : index
    %c0_341 = arith.constant 0 : index
    %571 = vector.load %arg2[%c1_339, %c0_340, %c0_341] : memref<8x16x180xbf16, #tpu.memory_space<vmem>>, vector<1x16x180xbf16>
    %572 = vector.shape_cast %571 : vector<1x16x180xbf16> to vector<16x180xbf16>
    %573 = arith.extf %572 : vector<16x180xbf16> to vector<16x180xf32>
    %574 = vector.broadcast %570 : f32 to vector<16x180xf32>
    %575 = arith.mulf %574, %573 : vector<16x180xf32>
    %576 = arith.addf %569, %575 : vector<16x180xf32>
    %c2_342 = arith.constant 2 : index
    %c7_343 = arith.constant 7 : index
    %577 = memref.load %arg1[%c2_342, %c7_343] : memref<8x8xf32, #tpu.memory_space<smem>>
    %c2_344 = arith.constant 2 : index
    %c0_345 = arith.constant 0 : index
    %c0_346 = arith.constant 0 : index
    %578 = vector.load %arg2[%c2_344, %c0_345, %c0_346] : memref<8x16x180xbf16, #tpu.memory_space<vmem>>, vector<1x16x180xbf16>
    %579 = vector.shape_cast %578 : vector<1x16x180xbf16> to vector<16x180xbf16>
    %580 = arith.extf %579 : vector<16x180xbf16> to vector<16x180xf32>
    %581 = vector.broadcast %577 : f32 to vector<16x180xf32>
    %582 = arith.mulf %581, %580 : vector<16x180xf32>
    %583 = arith.addf %576, %582 : vector<16x180xf32>
    %c3_347 = arith.constant 3 : index
    %c7_348 = arith.constant 7 : index
    %584 = memref.load %arg1[%c3_347, %c7_348] : memref<8x8xf32, #tpu.memory_space<smem>>
    %c3_349 = arith.constant 3 : index
    %c0_350 = arith.constant 0 : index
    %c0_351 = arith.constant 0 : index
    %585 = vector.load %arg2[%c3_349, %c0_350, %c0_351] : memref<8x16x180xbf16, #tpu.memory_space<vmem>>, vector<1x16x180xbf16>
    %586 = vector.shape_cast %585 : vector<1x16x180xbf16> to vector<16x180xbf16>
    %587 = arith.extf %586 : vector<16x180xbf16> to vector<16x180xf32>
    %588 = vector.broadcast %584 : f32 to vector<16x180xf32>
    %589 = arith.mulf %588, %587 : vector<16x180xf32>
    %590 = arith.addf %583, %589 : vector<16x180xf32>
    %c4_352 = arith.constant 4 : index
    %c7_353 = arith.constant 7 : index
    %591 = memref.load %arg1[%c4_352, %c7_353] : memref<8x8xf32, #tpu.memory_space<smem>>
    %c4_354 = arith.constant 4 : index
    %c0_355 = arith.constant 0 : index
    %c0_356 = arith.constant 0 : index
    %592 = vector.load %arg2[%c4_354, %c0_355, %c0_356] : memref<8x16x180xbf16, #tpu.memory_space<vmem>>, vector<1x16x180xbf16>
    %593 = vector.shape_cast %592 : vector<1x16x180xbf16> to vector<16x180xbf16>
    %594 = arith.extf %593 : vector<16x180xbf16> to vector<16x180xf32>
    %595 = vector.broadcast %591 : f32 to vector<16x180xf32>
    %596 = arith.mulf %595, %594 : vector<16x180xf32>
    %597 = arith.addf %590, %596 : vector<16x180xf32>
    %c5_357 = arith.constant 5 : index
    %c7_358 = arith.constant 7 : index
    %598 = memref.load %arg1[%c5_357, %c7_358] : memref<8x8xf32, #tpu.memory_space<smem>>
    %c5_359 = arith.constant 5 : index
    %c0_360 = arith.constant 0 : index
    %c0_361 = arith.constant 0 : index
    %599 = vector.load %arg2[%c5_359, %c0_360, %c0_361] : memref<8x16x180xbf16, #tpu.memory_space<vmem>>, vector<1x16x180xbf16>
    %600 = vector.shape_cast %599 : vector<1x16x180xbf16> to vector<16x180xbf16>
    %601 = arith.extf %600 : vector<16x180xbf16> to vector<16x180xf32>
    %602 = vector.broadcast %598 : f32 to vector<16x180xf32>
    %603 = arith.mulf %602, %601 : vector<16x180xf32>
    %604 = arith.addf %597, %603 : vector<16x180xf32>
    %c6_362 = arith.constant 6 : index
    %c7_363 = arith.constant 7 : index
    %605 = memref.load %arg1[%c6_362, %c7_363] : memref<8x8xf32, #tpu.memory_space<smem>>
    %c6_364 = arith.constant 6 : index
    %c0_365 = arith.constant 0 : index
    %c0_366 = arith.constant 0 : index
    %606 = vector.load %arg2[%c6_364, %c0_365, %c0_366] : memref<8x16x180xbf16, #tpu.memory_space<vmem>>, vector<1x16x180xbf16>
    %607 = vector.shape_cast %606 : vector<1x16x180xbf16> to vector<16x180xbf16>
    %608 = arith.extf %607 : vector<16x180xbf16> to vector<16x180xf32>
    %609 = vector.broadcast %605 : f32 to vector<16x180xf32>
    %610 = arith.mulf %609, %608 : vector<16x180xf32>
    %611 = arith.addf %604, %610 : vector<16x180xf32>
    %c7_367 = arith.constant 7 : index
    %c7_368 = arith.constant 7 : index
    %612 = memref.load %arg1[%c7_367, %c7_368] : memref<8x8xf32, #tpu.memory_space<smem>>
    %c7_369 = arith.constant 7 : index
    %c0_370 = arith.constant 0 : index
    %c0_371 = arith.constant 0 : index
    %613 = vector.load %arg2[%c7_369, %c0_370, %c0_371] : memref<8x16x180xbf16, #tpu.memory_space<vmem>>, vector<1x16x180xbf16>
    %614 = vector.shape_cast %613 : vector<1x16x180xbf16> to vector<16x180xbf16>
    %615 = arith.extf %614 : vector<16x180xbf16> to vector<16x180xf32>
    %616 = vector.broadcast %612 : f32 to vector<16x180xf32>
    %617 = arith.mulf %616, %615 : vector<16x180xf32>
    %618 = arith.addf %611, %617 : vector<16x180xf32>
    %619 = arith.mulf %618, %618 : vector<16x180xf32>
    %cst_372 = arith.constant dense<0.000000e+00> : vector<16xf32>
    %620 = vector.multi_reduction <add>, %619, %cst_372 [1] : vector<16x180xf32> to vector<16xf32>
    %621 = vector.shape_cast %620 : vector<16xf32> to vector<16x1xf32>
    %622 = arith.addf %542, %621 : vector<16x1xf32>
    %623 = arith.addf %1, %618 : vector<16x180xf32>
    %624 = vector.extract_strided_slice %623 {offsets = [0, 0], sizes = [16, 128], strides = [1, 1]} : vector<16x180xf32> to vector<16x128xf32>
    %625 = vector.extract_strided_slice %623 {offsets = [0, 128], sizes = [16, 52], strides = [1, 1]} : vector<16x180xf32> to vector<16x52xf32>
    %cst_373 = arith.constant dense<0.000000e+00> : vector<16x128xf32>
    %626 = tpu.matmul %625, %2, %cst_373 {dimension_numbers = #tpu.dot_dimension_numbers<[1], [0], [0], [1], [0, 0, 1, 1], [], []>} : vector<16x52xf32>, vector<52x128xf32>, vector<16x128xf32> -> vector<16x128xf32>
    %627 = arith.addf %624, %626 : vector<16x128xf32>
    %cst_374 = arith.constant dense<0xFF800000> : vector<16xf32>
    %628 = vector.multi_reduction <maximumf>, %627, %cst_374 [1] : vector<16x128xf32> to vector<16xf32>
    %629 = vector.shape_cast %628 : vector<16xf32> to vector<16x1xf32>
    %630 = vector.broadcast %629 : vector<16x1xf32> to vector<16x128xf32>
    %631 = arith.subf %627, %630 : vector<16x128xf32>
    %632 = math.exp %631 : vector<16x128xf32>
    %cst_375 = arith.constant dense<0.000000e+00> : vector<16xf32>
    %633 = vector.multi_reduction <add>, %632, %cst_375 [1] : vector<16x128xf32> to vector<16xf32>
    %634 = vector.shape_cast %633 : vector<16xf32> to vector<16x1xf32>
    %635 = math.log %634 : vector<16x1xf32>
    %636 = arith.addf %629, %635 : vector<16x1xf32>
    %637 = vector.broadcast %636 : vector<16x1xf32> to vector<16x128xf32>
    %638 = arith.subf %627, %637 : vector<16x128xf32>
    %cst_376 = arith.constant 3.21887589 : f32
    %639 = vector.broadcast %cst_376 : f32 to vector<16x128xf32>
    %640 = arith.subf %638, %639 : vector<16x128xf32>
    %c7_377 = arith.constant 7 : index
    %c0_378 = arith.constant 0 : index
    %c0_379 = arith.constant 0 : index
    %641 = vector.load %arg5[%c7_377, %c0_378, %c0_379] : memref<8x16x128xf32, #tpu.memory_space<vmem>>, vector<1x16x128xf32>
    %642 = vector.shape_cast %641 : vector<1x16x128xf32> to vector<16x128xf32>
    %643 = vector.shape_cast %640 : vector<16x128xf32> to vector<1x16x128xf32>
    tpu.vector_store %arg5[%c7_377, %c0_378, %c0_379], %643 {strides = array<i32>} : memref<8x16x128xf32, #tpu.memory_space<vmem>>, vector<1x16x128xf32>,
    %c0_380 = arith.constant 0 : index
    %c0_381 = arith.constant 0 : index
    %644 = vector.load %arg6[%c0_380, %c0_381] : memref<16x1xf32, #tpu.memory_space<vmem>>, vector<16x1xf32>
    tpu.vector_store %arg6[%c0_380, %c0_381], %622 {strides = array<i32>} : memref<16x1xf32, #tpu.memory_space<vmem>>, vector<16x1xf32>,
    return
  }
  func.func @transform_0(%arg0: i32) -> (i32, i32) {
    %c0_i32 = arith.constant 0 : i32
    %c0_i32_0 = arith.constant 0 : i32
    %c0_i32_1 = arith.constant 0 : i32
    return %c0_i32, %c0_i32_0 : i32, i32
  }
  func.func @transform_1(%arg0: i32) -> (i32, i32, i32) {
    %c0_i32 = arith.constant 0 : i32
    %c0_i32_0 = arith.constant 0 : i32
    %c0_i32_1 = arith.constant 0 : i32
    return %c0_i32, %arg0, %c0_i32_0 : i32, i32, i32
  }
  func.func @transform_2(%arg0: i32) -> (i32, i32) {
    %c0_i32 = arith.constant 0 : i32
    %c0_i32_0 = arith.constant 0 : i32
    return %arg0, %c0_i32 : i32, i32
  }
  func.func @transform_3(%arg0: i32) -> (i32, i32) {
    %c0_i32 = arith.constant 0 : i32
    %c0_i32_0 = arith.constant 0 : i32
    %c0_i32_1 = arith.constant 0 : i32
    return %c0_i32, %c0_i32_0 : i32, i32
  }
  func.func @transform_4(%arg0: i32) -> (i32, i32, i32) {
    %c0_i32 = arith.constant 0 : i32
    %c0_i32_0 = arith.constant 0 : i32
    %c0_i32_1 = arith.constant 0 : i32
    return %c0_i32, %arg0, %c0_i32_0 : i32, i32, i32
  }
  func.func @transform_5(%arg0: i32) -> (i32, i32) {
    %c0_i32 = arith.constant 0 : i32
    %c0_i32_0 = arith.constant 0 : i32
    return %arg0, %c0_i32 : i32, i32
  }
}

</mosaic_0001>

<llo_original>
// kernel: tpu_custom_call.1
$region0: #{tpu_custom_call.1}
  #allocation0 [shape = 'u32[]', space=smem, size = 0x4, offset = 0x4, fixed_abs, tag = 'smem constant byte address 0x4 - core index']
  #allocation1 [shape = 'u32[144,128]{1,0:T(1,128)}', space=vmem, size = 0x12000, scoped, tag = 'internal scratch']
  #allocation11 [shape = 's32[]', space=sflag, size = 0x4, offset = 0, fixed_abs, tag = 'sflag constant byte address 0x0 - dummy sync flag']
  #allocation13 [shape = 's32[]', space=sflag, size = 0x4, offset = 0, fixed_abs, tag = 'sflag constant byte address 0x0 - dummy sync flag']
  %s0 = inlined_call_operand.hbm [shape: f32[8,8], index: 0, kind: input, shape index: {}]
  %s1 = inlined_call_operand.hbm [shape: bf16[8,32,180], index: 1, kind: input, shape index: {}]
  %s2 = inlined_call_operand.hbm [shape: bf16[32,180], index: 2, kind: input, shape index: {}]
  %s3 = inlined_call_operand.hbm [shape: f32[52,128], index: 3, kind: input, shape index: {}]
  %s4 = inlined_call_operand.hbm [shape: f32[8,32,128], index: 4, kind: output, shape index: {0}]
  %s5 = inlined_call_operand.vmem [shape: f32[32,1], index: 5, kind: output, shape index: {1}]
  %6 = xla_tuple %s4, %s5
  %s7 = sld [smem:[#allocation0]]
  $region73: #{tpu_custom_call.1} parent=0
    _
  %s9 = ssub.s32 1, %s7
  %s10 = scalar_select 0, %s9, %s7
  $region1: #{tpu_custom_call.1} parent=0
    #allocation2 [shape = 'u8[4096]{0}', space=smem, size = 0x1000, scoped, tag = 'input window, operand 0, single buffered']
    #allocation3 [shape = 's32[2]{0}', space=sflag, size = 0x8, scoped, tag = 'scoped memory for tpu_custom_call.1']
    #allocation4 [shape = 's32[2]{0}', space=sflag, size = 0x8, scoped, tag = 'scoped memory for tpu_custom_call.1']
    #allocation5 [shape = 's32[2]{0}', space=sflag, size = 0x8, scoped, tag = 'scoped memory for tpu_custom_call.1']
    #allocation6 [shape = 'u8[131072]{0}', space=vmem, size = 0x20000, scoped, tag = 'input window, operand 1']
    #allocation7 [shape = 'u8[16384]{0}', space=vmem, size = 0x4000, scoped, tag = 'input window, operand 2']
    #allocation8 [shape = 's32[2]{0}', space=sflag, size = 0x8, scoped, tag = 'scoped memory for tpu_custom_call.1']
    #allocation9 [shape = 'u8[28672]{0}', space=vmem, size = 0x7000, scoped, tag = 'input window, operand 3, single buffered']
    #allocation10 [shape = 'u8[131072]{0}', space=vmem, size = 0x20000, scoped, tag = 'output window, operand 0']
    %11 = vsyncpa [#allocation5], 0
    %12 = vsyncpa [#allocation3], 0
    %s13 = scalar_lea.sflag [#allocation3], 1
    %14 = vsyncpa %s13, 0
    %15 = vsyncpa [#allocation8], 0
    %s16 = scalar_lea.sflag [#allocation8], 1
    %17 = vsyncpa %s16, 0
    %18 = vsyncpa [#allocation4], 0
    %s19 = scalar_lea.sflag [#allocation4], 1
    %20 = vsyncpa %s19, 0
    loop: start=0, step=1, limit=4
    $region2: #{tpu_custom_call.1} parent=1 // loop_pre_header
      _
    $region3: #{tpu_custom_call.1} parent=1 // loop_header
      %s22 = sphi 0, %s26
      %p23 = scmp.ge.s32.totalorder %s22, 4
      %s30 = sphi 0, %s30
      %s32 = sphi 0, %s30
      %s33 = sphi 0, %s32
      %s47 = sphi 0, %s33
      %s53 = sphi 0, %s55
      %s56 = sphi 0, %s53
      %s57 = sphi 0, %s56
      %s73 = sphi 0, %s57
      %s79 = sphi 0, %s81
      %s82 = sphi 0, %s79
      %s83 = sphi 0, %s82
      %s99 = sphi 0, %s83
      %s103 = sphi 0, %s103
      %s105 = sphi 0, %s103
      %s106 = sphi 0, %s105
      %s120 = sphi 0, %s106
      %s126 = sphi 0, %s128
      %s129 = sphi 0, %s126
      %s130 = sphi 0, %s129
      %s146 = sphi 0, %s130
      %s152 = sphi 0, %s154
      %s155 = sphi 0, %s152
      %s156 = sphi 0, %s155
      %s172 = sphi 0, %s156
    $region4: #{tpu_custom_call.1} parent=1 // loop_header_branch
      %25 = sbr.rel (%p23) target = $region8
    $region5: #{tpu_custom_call.1} parent=1 // loop_body
      %s27 = ssub.s32 %s22, 1
      %s28 = ssub.s32 %s22, 2
      %s29 = sadd.s32 %s22, 1
      %s31 = sadd.s32 %s30, 1
      %p34 = scmp.eq.s32.totalorder %s22, 1
      %p35 = scmp.ne.s32.totalorder %s30, %s32
      %p36 = scmp.eq.s32.totalorder %s22, 0
      %p37 = por %p35, %p36
      %p38 = scmp.ne.s32.totalorder %s30, %s32
      %p39 = scmp.eq.s32.totalorder %s27, 1
      %p40 = por %p38, %p39
      %p41 = scmp.ne.s32.totalorder %s32, %s33
      %p42 = scmp.eq.s32.totalorder %s27, 0
      %p43 = por %p41, %p42
      %p44 = scmp.ne.s32.totalorder %s32, %s33
      %p45 = scmp.eq.s32.totalorder %s28, 1
      %p46 = por %p44, %p45
      %p48 = scmp.ne.s32.totalorder %s33, %s47
      %p49 = scmp.eq.s32.totalorder %s28, 0
      %p50 = por %p48, %p49
      %s51 = ssub.s32 %s22, %s29
      %p52 = scmp.eq.s32.totalorder %s51, 0
      %s54 = sadd.s32 %s53, 1
      %s55 = scalar_select %p52, %s53, %s54
      %p58 = pneg %p52
      %p59 = scmp.eq.s32.totalorder %s22, 1
      %p60 = por %p58, %p59
      %p61 = scmp.ne.s32.totalorder %s53, %s56
      %p62 = scmp.eq.s32.totalorder %s22, 0
      %p63 = por %p61, %p62
      %p64 = scmp.ne.s32.totalorder %s53, %s56
      %p65 = scmp.eq.s32.totalorder %s27, 1
      %p66 = por %p64, %p65
      %p67 = scmp.ne.s32.totalorder %s56, %s57
      %p68 = scmp.eq.s32.totalorder %s27, 0
      %p69 = por %p67, %p68
      %p70 = scmp.ne.s32.totalorder %s56, %s57
      %p71 = scmp.eq.s32.totalorder %s28, 1
      %p72 = por %p70, %p71
      %p74 = scmp.ne.s32.totalorder %s57, %s73
      %p75 = scmp.eq.s32.totalorder %s28, 0
      %p76 = por %p74, %p75
      %s77 = ssub.s32 %s22, %s29
      %p78 = scmp.eq.s32.totalorder %s77, 0
      %s80 = sadd.s32 %s79, 1
      %s81 = scalar_select %p78, %s79, %s80
      %p84 = pneg %p78
      %p85 = scmp.eq.s32.totalorder %s22, 1
      %p86 = por %p84, %p85
      %p87 = scmp.ne.s32.totalorder %s79, %s82
      %p88 = scmp.eq.s32.totalorder %s22, 0
      %p89 = por %p87, %p88
      %p90 = scmp.ne.s32.totalorder %s79, %s82
      %p91 = scmp.eq.s32.totalorder %s27, 1
      %p92 = por %p90, %p91
      %p93 = scmp.ne.s32.totalorder %s82, %s83
      %p94 = scmp.eq.s32.totalorder %s27, 0
      %p95 = por %p93, %p94
      %p96 = scmp.ne.s32.totalorder %s82, %s83
      %p97 = scmp.eq.s32.totalorder %s28, 1
      %p98 = por %p96, %p97
      %p100 = scmp.ne.s32.totalorder %s83, %s99
      %p101 = scmp.eq.s32.totalorder %s28, 0
      %p102 = por %p100, %p101
      %s104 = sadd.s32 %s103, 1
      %p107 = scmp.eq.s32.totalorder %s22, 1
      %p108 = scmp.ne.s32.totalorder %s103, %s105
      %p109 = scmp.eq.s32.totalorder %s22, 0
      %p110 = por %p108, %p109
      %p111 = scmp.ne.s32.totalorder %s103, %s105
      %p112 = scmp.eq.s32.totalorder %s27, 1
      %p113 = por %p111, %p112
      %p114 = scmp.ne.s32.totalorder %s105, %s106
      %p115 = scmp.eq.s32.totalorder %s27, 0
      %p116 = por %p114, %p115
      %p117 = scmp.ne.s32.totalorder %s105, %s106
      %p118 = scmp.eq.s32.totalorder %s28, 1
      %p119 = por %p117, %p118
      %p121 = scmp.ne.s32.totalorder %s106, %s120
      %p122 = scmp.eq.s32.totalorder %s28, 0
      %p123 = por %p121, %p122
      %s124 = ssub.s32 %s22, %s29
      %p125 = scmp.eq.s32.totalorder %s124, 0
      %s127 = sadd.s32 %s126, 1
      %s128 = scalar_select %p125, %s126, %s127
      %p131 = pneg %p125
      %p132 = scmp.eq.s32.totalorder %s22, 1
      %p133 = por %p131, %p132
      %p134 = scmp.ne.s32.totalorder %s126, %s129
      %p135 = scmp.eq.s32.totalorder %s22, 0
      %p136 = por %p134, %p135
      %p137 = scmp.ne.s32.totalorder %s126, %s129
      %p138 = scmp.eq.s32.totalorder %s27, 1
      %p139 = por %p137, %p138
      %p140 = scmp.ne.s32.totalorder %s129, %s130
      %p141 = scmp.eq.s32.totalorder %s27, 0
      %p142 = por %p140, %p141
      %p143 = scmp.ne.s32.totalorder %s129, %s130
      %p144 = scmp.eq.s32.totalorder %s28, 1
      %p145 = por %p143, %p144
      %p147 = scmp.ne.s32.totalorder %s130, %s146
      %p148 = scmp.eq.s32.totalorder %s28, 0
      %p149 = por %p147, %p148
      %s150 = ssub.s32 %s22, %s29
      %p151 = scmp.eq.s32.totalorder %s150, 0
      %s153 = sadd.s32 %s152, 1
      %s154 = scalar_select %p151, %s152, %s153
      %p157 = pneg %p151
      %p158 = scmp.eq.s32.totalorder %s22, 1
      %p159 = por %p157, %p158
      %p160 = scmp.ne.s32.totalorder %s152, %s155
      %p161 = scmp.eq.s32.totalorder %s22, 0
      %p162 = por %p160, %p161
      %p163 = scmp.ne.s32.totalorder %s152, %s155
      %p164 = scmp.eq.s32.totalorder %s27, 1
      %p165 = por %p163, %p164
      %p166 = scmp.ne.s32.totalorder %s155, %s156
      %p167 = scmp.eq.s32.totalorder %s27, 0
      %p168 = por %p166, %p167
      %p169 = scmp.ne.s32.totalorder %s155, %s156
      %p170 = scmp.eq.s32.totalorder %s28, 1
      %p171 = por %p169, %p170
      %p173 = scmp.ne.s32.totalorder %s156, %s172
      %p174 = scmp.eq.s32.totalorder %s28, 0
      %p175 = por %p173, %p174
      %p176 = scmp.le.s32.totalorder 1, %s22
      %p177 = scmp.lt.s32.totalorder %s22, 3
      %p178 = pnand %p176, %p177
      %p179 = pneg %p178
      // Predicated region
      $region9: #{tpu_custom_call.1} parent=5 // pred_check
        _
      $region10: #{tpu_custom_call.1} parent=5 // pred_check_branch
        %181 = sbr.rel (%p178) target = $region12
      $region11: #{tpu_custom_call.1} parent=5 // pred_region
        %s182 = ssub.s32 %s22, 1
        // Predicated region
        $region13: #{tpu_custom_call.1} parent=11 // pred_check
          %p183 = pneg %p43
        $region14: #{tpu_custom_call.1} parent=11 // pred_check_branch
          %185 = sbr.rel (%p183) target = $region16
        $region15: #{tpu_custom_call.1} parent=11 // pred_region
          %s187 = ssub.s32 128, 128
          %188 = vsyncadd [#allocation5], %s187
          %191 = dma.hbm_to_smem %s0, 128, [#allocation2], [#allocation5]
        $region16: #{tpu_custom_call.1} parent=11 // pred_fallthru
          _
        // Predicated region
        $region17: #{tpu_custom_call.1} parent=11 // pred_check
          %p192 = pneg %p116
        $region18: #{tpu_custom_call.1} parent=11 // pred_check_branch
          %194 = sbr.rel (%p192) target = $region20
        $region19: #{tpu_custom_call.1} parent=11 // pred_region
          %s196 = ssub.s32 896, 896
          %197 = vsyncadd [#allocation8], %s196
          %s198 = sshll.u32 [#allocation9], 4
          %s199 = int_to_ptr.vmem [resolvable:$true] %s198
          %204 = dma.hbm_to_vmem [thread:$0]  %s3, 896, %s199, [#allocation8], 128, 128, 8
        $region20: #{tpu_custom_call.1} parent=11 // pred_fallthru
          _
      $region12: #{tpu_custom_call.1} parent=5 // pred_fallthru
        _
      %p205 = scmp.lt.s32.totalorder %s22, 2
      // Predicated region
      $region21: #{tpu_custom_call.1} parent=5 // pred_check
        %p206 = pneg %p205
      $region22: #{tpu_custom_call.1} parent=5 // pred_check_branch
        %208 = sbr.rel (%p206) target = $region24
      $region23: #{tpu_custom_call.1} parent=5 // pred_region
        // Predicated region
        $region25: #{tpu_custom_call.1} parent=23 // pred_check
          %p209 = pneg %p63
        $region26: #{tpu_custom_call.1} parent=23 // pred_check_branch
          %211 = sbr.rel (%p209) target = $region28
        $region27: #{tpu_custom_call.1} parent=23 // pred_region
          #allocation12 [shape = 'u32[6]{0}', space=smem, size = 0x18, scoped, tag = 'DMA stride descriptor']
          %s212 = sand.u32 %s53, 1
          %s213 = scalar_lea.sflag [#allocation3], %s212
          %s214 = sand.u32 %s53, 1
          %s215 = smul.addr %s214, 128
          %s216 = scalar_lea.vmem [#allocation6], %s215
          %s217 = smul.u32 2, %s22
          %s219 = ssub.s32 2048, 2048
          %220 = vsyncadd %s213, %s219
          %s221 = smul.addr %s217, 2
          %s222 = smul.addr %s221, 64
          %s223 = scalar_lea.hbm %s1, %s222
          %s225 = sshll.u32 1, 14
          %s226 = sxor.u32 4294967295, %s225
          %s228 = sld [smem:[#allocation0]]
          %s229 = sadd.s32 2, %s228
          %s231 = sshll.u32 7, 26
          %s232 = sxor.u32 4294967295, %s231
          %s233 = sand.u32 0, %s232
          %s234 = sshll.u32 %s229, 26
          %s235 = sor.u32 %s233, %s234
          %s236 = sshll.u32 %s216, 4
          %s237 = int_to_ptr.vmem [resolvable:$true] %s236
          %243 = sst [smem:[#allocation12]] 512
          %s244 = scalar_lea.smem [#allocation12], 1
          %245 = sst [smem:[%s244]] 256
          %s246 = scalar_lea.smem [#allocation12], 2
          %247 = sst [smem:[%s246]] 2
          %s248 = scalar_lea.smem [#allocation12], 3
          %249 = sst [smem:[%s248]] 128
          %s250 = scalar_lea.smem [#allocation12], 4
          %251 = sst [smem:[%s250]] 128
          %s252 = scalar_lea.smem [#allocation12], 5
          %253 = sst [smem:[%s252]] 8
          %255 = dma.general %s223, 2048, %s237, %s213, [#allocation11], [#allocation12], %s235, 0
        $region28: #{tpu_custom_call.1} parent=23 // pred_fallthru
          _
        // Predicated region
        $region29: #{tpu_custom_call.1} parent=23 // pred_check
          %p256 = pneg %p89
        $region30: #{tpu_custom_call.1} parent=23 // pred_check_branch
          %258 = sbr.rel (%p256) target = $region32
        $region31: #{tpu_custom_call.1} parent=23 // pred_region
          %s259 = sand.u32 %s22, 1
          %s260 = scalar_lea.sflag [#allocation8], %s259
          %s261 = sand.u32 %s79, 1
          %s262 = smul.addr %s261, 16
          %s263 = scalar_lea.vmem [#allocation7], %s262
          %s264 = smul.u32 2, %s22
          %s266 = ssub.s32 256, 256
          %267 = vsyncadd %s260, %s266
          %s268 = smul.addr %s264, 2
          %s269 = smul.addr %s268, 64
          %s270 = scalar_lea.hbm %s2, %s269
          %s271 = sshll.u32 %s263, 4
          %s272 = int_to_ptr.vmem [resolvable:$true] %s271
          %277 = dma.hbm_to_vmem [thread:$0]  %s270, 256, %s272, %s260, 128, 128, 8
        $region32: #{tpu_custom_call.1} parent=23 // pred_fallthru
          _
      $region24: #{tpu_custom_call.1} parent=5 // pred_fallthru
        _
      %p278 = scmp.le.s32.totalorder 1, %s22
      %p279 = scmp.lt.s32.totalorder %s22, 3
      %p280 = pnand %p278, %p279
      %p281 = pneg %p280
      // Predicated region
      $region33: #{tpu_custom_call.1} parent=5 // pred_check
        _
      $region34: #{tpu_custom_call.1} parent=5 // pred_check_branch
        %283 = sbr.rel (%p280) target = $region36
      $region35: #{tpu_custom_call.1} parent=5 // pred_region
        %s284 = ssub.s32 %s22, 1
        // Predicated region
        $region37: #{tpu_custom_call.1} parent=35 // pred_check
          %p285 = pneg %p43
        $region38: #{tpu_custom_call.1} parent=35 // pred_check_branch
          %287 = sbr.rel (%p285) target = $region40
        $region39: #{tpu_custom_call.1} parent=35 // pred_region
          %288 = dma.done [#allocation5], 128
        $region40: #{tpu_custom_call.1} parent=35 // pred_fallthru
          _
        %s289 = sand.u32 %s56, 1
        %s290 = scalar_lea.sflag [#allocation3], %s289
        %s291 = sand.u32 %s56, 1
        %s292 = smul.addr %s291, 128
        %s293 = scalar_lea.vmem [#allocation6], %s292
        // Predicated region
        $region41: #{tpu_custom_call.1} parent=35 // pred_check
          %p294 = pneg %p69
        $region42: #{tpu_custom_call.1} parent=35 // pred_check_branch
          %296 = sbr.rel (%p294) target = $region44
        $region43: #{tpu_custom_call.1} parent=35 // pred_region
          %297 = dma.done %s290, 2048
        $region44: #{tpu_custom_call.1} parent=35 // pred_fallthru
          _
        %s298 = sand.u32 %s27, 1
        %s299 = scalar_lea.sflag [#allocation8], %s298
        %s300 = sand.u32 %s82, 1
        %s301 = smul.addr %s300, 16
        %s302 = scalar_lea.vmem [#allocation7], %s301
        // Predicated region
        $region45: #{tpu_custom_call.1} parent=35 // pred_check
          %p303 = pneg %p95
        $region46: #{tpu_custom_call.1} parent=35 // pred_check_branch
          %305 = sbr.rel (%p303) target = $region48
        $region47: #{tpu_custom_call.1} parent=35 // pred_region
          %306 = dma.done %s299, 256
        $region48: #{tpu_custom_call.1} parent=35 // pred_fallthru
          _
        // Predicated region
        $region49: #{tpu_custom_call.1} parent=35 // pred_check
          %p307 = pneg %p116
        $region50: #{tpu_custom_call.1} parent=35 // pred_check_branch
          %309 = sbr.rel (%p307) target = $region52
        $region51: #{tpu_custom_call.1} parent=35 // pred_region
          %310 = dma.done [#allocation8], 896
        $region52: #{tpu_custom_call.1} parent=35 // pred_fallthru
          _
        %311 = sfence
        %p312 = pneg %p43
        %p313 = pneg %p40
        %s314 = sand.u32 %s56, 1
        %s315 = scalar_lea.sflag [#allocation3], %s314
        %s316 = sand.u32 %s56, 1
        %s317 = smul.addr %s316, 128
        %s318 = scalar_lea.vmem [#allocation6], %s317
        %p319 = pneg %p69
        %p320 = pneg %p66
        %s321 = sand.u32 %s27, 1
        %s322 = scalar_lea.sflag [#allocation8], %s321
        %s323 = sand.u32 %s82, 1
        %s324 = smul.addr %s323, 16
        %s325 = scalar_lea.vmem [#allocation7], %s324
        %p326 = pneg %p95
        %p327 = pneg %p92
        %p328 = pneg %p116
        %p329 = pneg %p113
        %p330 = pneg %p142
        %p331 = pneg %p139
        %s332 = sand.u32 %s129, 1
        %s333 = scalar_lea.sflag [#allocation4], %s332
        %s334 = sand.u32 %s129, 1
        %s335 = smul.addr %s334, 128
        %s336 = scalar_lea.vmem [#allocation10], %s335
        %p337 = pneg %p168
        %p338 = pneg %p165
        %s339 = smul.u32 2, %s27
        %p340 = scmp.lt.s32.totalorder %s339, 3
        %s341 = scalar_select %p340, %s339, 3
        %s342 = smul.addr %s341, 8
        %s343 = scalar_lea.vmem %s5, %s342
        %s344 = smul.u32 2, %s27
        %s345 = smul.u32 2, %s27
        %s346 = smul.u32 2, %s27
        %s347 = smul.u32 2, %s27
        %p348 = scmp.lt.s32.totalorder %s347, 3
        %s349 = scalar_select %p348, %s347, 3
        %s350 = smul.addr %s349, 8
        %s351 = scalar_lea.vmem %s5, %s350
        %s352 = smul.u32 2, %s27
        %v353 = vld [vmem:[%s302] sm:$0xff]
        %v354 = vld [vmem:[%s302 + $0x8] sm:$0xff]
        %v355 = vunpack.c.l.bf16 %v353
        %v356 = vunpack.c.h.bf16 %v353
        %v357 = vunpack.c.l.bf16 %v354
        %v358 = vunpack.c.h.bf16 %v354
        %v359 = vld [vmem:[#allocation9] sm:$0xff]
        %v360 = vld [vmem:[#allocation9 + $0x8] sm:$0xff]
        %v361 = vld [vmem:[#allocation9 + $0x10] sm:$0xff]
        %v362 = vld [vmem:[#allocation9 + $0x18] sm:$0xff]
        %v363 = vld [vmem:[#allocation9 + $0x20] sm:$0xff]
        %v364 = vld [vmem:[#allocation9 + $0x28] sm:$0xff]
        %v365 = vld [vmem:[#allocation9 + $0x30] sm:$0xf]
        %s366 = sld [smem:[#allocation2]]
        %v367 = vld [vmem:[%s293] sm:$0xff]
        %v368 = vld [vmem:[%s293 + $0x8] sm:$0xff]
        %v369 = vunpack.c.l.bf16 %v367
        %v370 = vunpack.c.h.bf16 %v367
        %v371 = vunpack.c.l.bf16 %v368
        %v372 = vunpack.c.h.bf16 %v368
        %v373 = vstv %s366
        %v374 = vmul.f32 %v373, %v369
        %v375 = vmul.f32 %v373, %v370
        %v376 = vmul.f32 %v373, %v371
        %v377 = vmul.f32 %v373, %v372
        %s378 = sld [smem:[#allocation2 + $0x80]]
        %s379 = scalar_lea.vmem %s293, 16 [#allocation6]
        %v380 = vld [vmem:[%s379] sm:$0xff]
        %v381 = vld [vmem:[%s379 + $0x8] sm:$0xff]
        %v382 = vunpack.c.l.bf16 %v380
        %v383 = vunpack.c.h.bf16 %v380
        %v384 = vunpack.c.l.bf16 %v381
        %v385 = vunpack.c.h.bf16 %v381
        %v386 = vstv %s378
        %v387 = vmul.f32 %v386, %v382
        %v388 = vmul.f32 %v386, %v383
        %v389 = vmul.f32 %v386, %v384
        %v390 = vmul.f32 %v386, %v385
        %v391 = vadd.f32 %v374, %v387
        %v392 = vadd.f32 %v375, %v388
        %v393 = vadd.f32 %v376, %v389
        %v394 = vadd.f32 %v377, %v390
        %s395 = sld [smem:[#allocation2 + $0x100]]
        %s396 = scalar_lea.vmem %s293, 32 [#allocation6]
        %v397 = vld [vmem:[%s396] sm:$0xff]
        %v398 = vld [vmem:[%s396 + $0x8] sm:$0xff]
        %v399 = vunpack.c.l.bf16 %v397
        %v400 = vunpack.c.h.bf16 %v397
        %v401 = vunpack.c.l.bf16 %v398
        %v402 = vunpack.c.h.bf16 %v398
        %v403 = vstv %s395
        %v404 = vmul.f32 %v403, %v399
        %v405 = vmul.f32 %v403, %v400
        %v406 = vmul.f32 %v403, %v401
        %v407 = vmul.f32 %v403, %v402
        %v408 = vadd.f32 %v391, %v404
        %v409 = vadd.f32 %v392, %v405
        %v410 = vadd.f32 %v393, %v406
        %v411 = vadd.f32 %v394, %v407
        %s412 = sld [smem:[#allocation2 + $0x180]]
        %s413 = scalar_lea.vmem %s293, 48 [#allocation6]
        %v414 = vld [vmem:[%s413] sm:$0xff]
        %v415 = vld [vmem:[%s413 + $0x8] sm:$0xff]
        %v416 = vunpack.c.l.bf16 %v414
        %v417 = vunpack.c.h.bf16 %v414
        %v418 = vunpack.c.l.bf16 %v415
        %v419 = vunpack.c.h.bf16 %v415
        %v420 = vstv %s412
        %v421 = vmul.f32 %v420, %v416
        %v422 = vmul.f32 %v420, %v417
        %v423 = vmul.f32 %v420, %v418
        %v424 = vmul.f32 %v420, %v419
        %v425 = vadd.f32 %v408, %v421
        %v426 = vadd.f32 %v409, %v422
        %v427 = vadd.f32 %v410, %v423
        %v428 = vadd.f32 %v411, %v424
        %s429 = sld [smem:[#allocation2 + $0x200]]
        %s430 = scalar_lea.vmem %s293, 64 [#allocation6]
        %v431 = vld [vmem:[%s430] sm:$0xff]
        %v432 = vld [vmem:[%s430 + $0x8] sm:$0xff]
        %v433 = vunpack.c.l.bf16 %v431
        %v434 = vunpack.c.h.bf16 %v431
        %v435 = vunpack.c.l.bf16 %v432
        %v436 = vunpack.c.h.bf16 %v432
        %v437 = vstv %s429
        %v438 = vmul.f32 %v437, %v433
        %v439 = vmul.f32 %v437, %v434
        %v440 = vmul.f32 %v437, %v435
        %v441 = vmul.f32 %v437, %v436
        %v442 = vadd.f32 %v425, %v438
        %v443 = vadd.f32 %v426, %v439
        %v444 = vadd.f32 %v427, %v440
        %v445 = vadd.f32 %v428, %v441
        %s446 = sld [smem:[#allocation2 + $0x280]]
        %s447 = scalar_lea.vmem %s293, 80 [#allocation6]
        %v448 = vld [vmem:[%s447] sm:$0xff]
        %v449 = vld [vmem:[%s447 + $0x8] sm:$0xff]
        %v450 = vunpack.c.l.bf16 %v448
        %v451 = vunpack.c.h.bf16 %v448
        %v452 = vunpack.c.l.bf16 %v449
        %v453 = vunpack.c.h.bf16 %v449
        %v454 = vstv %s446
        %v455 = vmul.f32 %v454, %v450
        %v456 = vmul.f32 %v454, %v451
        %v457 = vmul.f32 %v454, %v452
        %v458 = vmul.f32 %v454, %v453
        %v459 = vadd.f32 %v442, %v455
        %v460 = vadd.f32 %v443, %v456
        %v461 = vadd.f32 %v444, %v457
        %v462 = vadd.f32 %v445, %v458
        %s463 = sld [smem:[#allocation2 + $0x300]]
        %s464 = scalar_lea.vmem %s293, 96 [#allocation6]
        %v465 = vld [vmem:[%s464] sm:$0xff]
        %v466 = vld [vmem:[%s464 + $0x8] sm:$0xff]
        %v467 = vunpack.c.l.bf16 %v465
        %v468 = vunpack.c.h.bf16 %v465
        %v469 = vunpack.c.l.bf16 %v466
        %v470 = vunpack.c.h.bf16 %v466
        %v471 = vstv %s463
        %v472 = vmul.f32 %v471, %v467
        %v473 = vmul.f32 %v471, %v468
        %v474 = vmul.f32 %v471, %v469
        %v475 = vmul.f32 %v471, %v470
        %v476 = vadd.f32 %v459, %v472
        %v477 = vadd.f32 %v460, %v473
        %v478 = vadd.f32 %v461, %v474
        %v479 = vadd.f32 %v462, %v475
        %s480 = sld [smem:[#allocation2 + $0x380]]
        %s481 = scalar_lea.vmem %s293, 112 [#allocation6]
        %v482 = vld [vmem:[%s481] sm:$0xff]
        %v483 = vld [vmem:[%s481 + $0x8] sm:$0xff]
        %v484 = vunpack.c.l.bf16 %v482
        %v485 = vunpack.c.h.bf16 %v482
        %v486 = vunpack.c.l.bf16 %v483
        %v487 = vunpack.c.h.bf16 %v483
        %v488 = vstv %s480
        %v489 = vmul.f32 %v488, %v484
        %v490 = vmul.f32 %v488, %v485
        %v491 = vmul.f32 %v488, %v486
        %v492 = vmul.f32 %v488, %v487
        %v493 = vadd.f32 %v476, %v489
        %v494 = vadd.f32 %v477, %v490
        %v495 = vadd.f32 %v478, %v491
        %v496 = vadd.f32 %v479, %v492
        %v497 = vmul.f32 %v493, %v493
        %v498 = vmul.f32 %v494, %v494
        %v499 = vmul.f32 %v495, %v495
        %v500 = vmul.f32 %v496, %v496
        %vm501 = vcmask 424960
        %v502 = vsel %vm501, %v498, 0.0
        %v503 = vadd.f32 %v497, %v502
        %504 = vadd.xlane.f32.xlu0 %v503
        %v505 = vpop.xlane.xlu0 %504
        %v506 = vsel %vm501, %v500, 0.0
        %v507 = vadd.f32 %v499, %v506
        %508 = vadd.xlane.f32.xlu0 %v507
        %v509 = vpop.xlane.xlu0 %508
        %v510 = vadd.f32 %v505, 0.0
        %v511 = vadd.f32 %v509, 0.0
        %v512 = vadd.f32 %v355, %v493
        %v513 = vadd.f32 %v356, %v494
        %v514 = vadd.f32 %v357, %v495
        %v515 = vadd.f32 %v358, %v496
        %v517 = vsel %vm501, %v513, 0
        %v520 = vsel %vm501, %v515, 0
        %vm522 = vcmask 1043456
        %v524 = vsel %vm522, %v365, 0
        %526 = vmatprep.subr.mxu0 0.0
        %527 = vmatpush1.msra.mxu0 %v359
        %528 = vmatprep.subr.mxu0 0.0
        %529 = vmatpush1.msra.mxu0 %v360
        %530 = vmatprep.subr.mxu0 0.0
        %531 = vmatpush1.msra.mxu0 %v361
        %532 = vmatprep.subr.mxu0 0.0
        %533 = vmatpush1.msra.mxu0 %v362
        %534 = vmatprep.subr.mxu0 0.0
        %535 = vmatpush1.msra.mxu0 %v363
        %536 = vmatprep.subr.mxu0 0.0
        %537 = vmatpush1.msra.mxu0 %v364
        %538 = vmatprep.subr.mxu0 0.0
        %539 = vmatpush1.msra.mxu0 %v524
        %540 = vmatprep.subr.mxu0 0.0
        %541 = vmatpush1.msra.mxu0 0.0
        %542 = vmatprep.subr.mxu0 0.0
        %543 = vmatpush1.msra.mxu0 0.0
        %544 = vmatprep.subr.mxu0 0.0
        %545 = vmatpush1.msra.mxu0 0.0
        %546 = vmatprep.subr.mxu0 0.0
        %547 = vmatpush1.msra.mxu0 0.0
        %548 = vmatprep.subr.mxu0 0.0
        %549 = vmatpush1.msra.mxu0 0.0
        %550 = vmatprep.subr.mxu0 0.0
        %551 = vmatpush1.msra.mxu0 0.0
        %552 = vmatprep.subr.mxu0 0.0
        %553 = vmatpush1.msra.mxu0 0.0
        %554 = vmatprep.subr.mxu0 0.0
        %555 = vmatpush1.msra.mxu0 0.0
        %556 = vmatprep.subr.mxu0 0.0
        %557 = vmatpush1.msra.mxu0 0.0
        %558 = vmatprep.subr.mxu0 0.0
        %559 = vmatpush1.msra.mxu0 0.0
        %560 = vmatprep.subr.mxu0 0.0
        %561 = vmatpush1.msra.mxu0 0.0
        %562 = vmatprep.subr.mxu0 0.0
        %563 = vmatpush1.msra.mxu0 0.0
        %564 = vmatprep.subr.mxu0 0.0
        %565 = vmatpush1.msra.mxu0 0.0
        %566 = vmatprep.subr.mxu0 0.0
        %567 = vmatpush1.msra.mxu0 0.0
        %568 = vmatprep.subr.mxu0 0.0
        %569 = vmatpush1.msra.mxu0 0.0
        %570 = vmatprep.subr.mxu0 0.0
        %571 = vmatpush1.msra.mxu0 0.0
        %572 = vmatprep.subr.mxu0 0.0
        %573 = vmatpush1.msra.mxu0 0.0
        %574 = vmatprep.subr.mxu0 0.0
        %575 = vmatpush1.msra.mxu0 0.0
        %576 = vmatprep.subr.mxu0 0.0
        %577 = vmatpush1.msra.mxu0 0.0
        %578 = vmatprep.subr.mxu0 0.0
        %579 = vmatpush1.msra.mxu0 0.0
        %580 = vmatprep.subr.mxu0 0.0
        %581 = vmatpush1.msra.mxu0 0.0
        %582 = vmatprep.subr.mxu0 0.0
        %583 = vmatpush1.msra.mxu0 0.0
        %584 = vmatprep.subr.mxu0 0.0
        %585 = vmatpush1.msra.mxu0 0.0
        %586 = vmatprep.subr.mxu0 0.0
        %587 = vmatpush1.msra.mxu0 0.0
        %588 = vmatprep.subr.mxu0 0.0
        %589 = vmatpush1.msra.mxu0 0.0
        %590 = vmatprep.mubr.f32.mxu0 0.0
        %591 = vmatmul.mubr.f32.gmra.mrb[0].mxu0 %v517
        %v592 = vpop.f32.mrb[0].mxu0
        %v593 = vadd.f32 0.0, %v592
        %v594 = vpop.f32.mrb[0].mxu0
        %595 = vmatprep.mubr.f32.mxu0 0.0
        %596 = vmatmul.mubr.f32.gmra.mrb[0].mxu0 %v520
        %v597 = vpop.f32.mrb[0].mxu0
        %v598 = vadd.f32 0.0, %v597
        %v599 = vpop.f32.mrb[0].mxu0
        %600 = vdwg.mxu0
        %v601 = vadd.f32 %v512, %v593
        %v602 = vadd.f32 %v514, %v598
        %603 = vmax.xlane.f32.xlu0 %v601
        %v604 = vpop.xlane.xlu0 %603
        %605 = vmax.xlane.f32.xlu0 %v602
        %v606 = vpop.xlane.xlu0 %605
        %v607 = vsub.f32 %v601, %v604
        %v608 = vsub.f32 %v602, %v606
        %v609 = vmul.f32 %v607, 1.442695
        %v610 = vpow.pop %v609
        %v611 = vmul.f32 %v608, 1.442695
        %v612 = vpow.pop %v611
        %613 = vadd.xlane.f32.xlu0 %v610
        %v614 = vpop.xlane.xlu0 %613
        %615 = vadd.xlane.f32.xlu0 %v612
        %v616 = vpop.xlane.xlu0 %615
        %v617 = vlog2.pop %v614
        %v618 = vmul.f32 %v617, 0.6931472
        %v619 = vlog2.pop %v616
        %v620 = vmul.f32 %v619, 0.6931472
        %v621 = vadd.f32 %v604, %v618
        %v622 = vadd.f32 %v606, %v620
        %v623 = vsub.f32 %v601, %v621
        %v624 = vsub.f32 %v602, %v622
        %v625 = vsub.f32 %v623, 3.218876
        %v626 = vsub.f32 %v624, 3.218876
        %627 = vst [vmem:[%s336] sm:$0xff] %v625
        %628 = vst [vmem:[%s336 + $0x8] sm:$0xff] %v626
        %s629 = sld [smem:[#allocation2 + $0x1]]
        %v630 = vld [vmem:[%s293] sm:$0xff]
        %v631 = vld [vmem:[%s293 + $0x8] sm:$0xff]
        %v632 = vunpack.c.l.bf16 %v630
        %v633 = vunpack.c.h.bf16 %v630
        %v634 = vunpack.c.l.bf16 %v631
        %v635 = vunpack.c.h.bf16 %v631
        %v636 = vstv %s629
        %v637 = vmul.f32 %v636, %v632
        %v638 = vmul.f32 %v636, %v633
        %v639 = vmul.f32 %v636, %v634
        %v640 = vmul.f32 %v636, %v635
        %s641 = sld [smem:[#allocation2 + $0x81]]
        %v642 = vld [vmem:[%s379] sm:$0xff]
        %v643 = vld [vmem:[%s379 + $0x8] sm:$0xff]
        %v644 = vunpack.c.l.bf16 %v642
        %v645 = vunpack.c.h.bf16 %v642
        %v646 = vunpack.c.l.bf16 %v643
        %v647 = vunpack.c.h.bf16 %v643
        %v648 = vstv %s641
        %v649 = vmul.f32 %v648, %v644
        %v650 = vmul.f32 %v648, %v645
        %v651 = vmul.f32 %v648, %v646
        %v652 = vmul.f32 %v648, %v647
        %v653 = vadd.f32 %v637, %v649
        %v654 = vadd.f32 %v638, %v650
        %v655 = vadd.f32 %v639, %v651
        %v656 = vadd.f32 %v640, %v652
        %s657 = sld [smem:[#allocation2 + $0x101]]
        %v658 = vld [vmem:[%s396] sm:$0xff]
        %v659 = vld [vmem:[%s396 + $0x8] sm:$0xff]
        %v660 = vunpack.c.l.bf16 %v658
        %v661 = vunpack.c.h.bf16 %v658
        %v662 = vunpack.c.l.bf16 %v659
        %v663 = vunpack.c.h.bf16 %v659
        %v664 = vstv %s657
        %v665 = vmul.f32 %v664, %v660
        %v666 = vmul.f32 %v664, %v661
        %v667 = vmul.f32 %v664, %v662
        %v668 = vmul.f32 %v664, %v663
        %v669 = vadd.f32 %v653, %v665
        %v670 = vadd.f32 %v654, %v666
        %v671 = vadd.f32 %v655, %v667
        %v672 = vadd.f32 %v656, %v668
        %s673 = sld [smem:[#allocation2 + $0x181]]
        %v674 = vld [vmem:[%s413] sm:$0xff]
        %v675 = vld [vmem:[%s413 + $0x8] sm:$0xff]
        %v676 = vunpack.c.l.bf16 %v674
        %v677 = vunpack.c.h.bf16 %v674
        %v678 = vunpack.c.l.bf16 %v675
        %v679 = vunpack.c.h.bf16 %v675
        %v680 = vstv %s673
        %v681 = vmul.f32 %v680, %v676
        %v682 = vmul.f32 %v680, %v677
        %v683 = vmul.f32 %v680, %v678
        %v684 = vmul.f32 %v680, %v679
        %v685 = vadd.f32 %v669, %v681
        %v686 = vadd.f32 %v670, %v682
        %v687 = vadd.f32 %v671, %v683
        %v688 = vadd.f32 %v672, %v684
        %s689 = sld [smem:[#allocation2 + $0x201]]
        %v690 = vld [vmem:[%s430] sm:$0xff]
        %v691 = vld [vmem:[%s430 + $0x8] sm:$0xff]
        %v692 = vunpack.c.l.bf16 %v690
        %v693 = vunpack.c.h.bf16 %v690
        %v694 = vunpack.c.l.bf16 %v691
        %v695 = vunpack.c.h.bf16 %v691
        %v696 = vstv %s689
        %v697 = vmul.f32 %v696, %v692
        %v698 = vmul.f32 %v696, %v693
        %v699 = vmul.f32 %v696, %v694
        %v700 = vmul.f32 %v696, %v695
        %v701 = vadd.f32 %v685, %v697
        %v702 = vadd.f32 %v686, %v698
        %v703 = vadd.f32 %v687, %v699
        %v704 = vadd.f32 %v688, %v700
        %s705 = sld [smem:[#allocation2 + $0x281]]
        %v706 = vld [vmem:[%s447] sm:$0xff]
        %v707 = vld [vmem:[%s447 + $0x8] sm:$0xff]
        %v708 = vunpack.c.l.bf16 %v706
        %v709 = vunpack.c.h.bf16 %v706
        %v710 = vunpack.c.l.bf16 %v707
        %v711 = vunpack.c.h.bf16 %v707
        %v712 = vstv %s705
        %v713 = vmul.f32 %v712, %v708
        %v714 = vmul.f32 %v712, %v709
        %v715 = vmul.f32 %v712, %v710
        %v716 = vmul.f32 %v712, %v711
        %v717 = vadd.f32 %v701, %v713
        %v718 = vadd.f32 %v702, %v714
        %v719 = vadd.f32 %v703, %v715
        %v720 = vadd.f32 %v704, %v716
        %s721 = sld [smem:[#allocation2 + $0x301]]
        %v722 = vld [vmem:[%s464] sm:$0xff]
        %v723 = vld [vmem:[%s464 + $0x8] sm:$0xff]
        %v724 = vunpack.c.l.bf16 %v722
        %v725 = vunpack.c.h.bf16 %v722
        %v726 = vunpack.c.l.bf16 %v723
        %v727 = vunpack.c.h.bf16 %v723
        %v728 = vstv %s721
        %v729 = vmul.f32 %v728, %v724
        %v730 = vmul.f32 %v728, %v725
        %v731 = vmul.f32 %v728, %v726
        %v732 = vmul.f32 %v728, %v727
        %v733 = vadd.f32 %v717, %v729
        %v734 = vadd.f32 %v718, %v730
        %v735 = vadd.f32 %v719, %v731
        %v736 = vadd.f32 %v720, %v732
        %s737 = sld [smem:[#allocation2 + $0x381]]
        %v738 = vld [vmem:[%s481] sm:$0xff]
        %v739 = vld [vmem:[%s481 + $0x8] sm:$0xff]
        %v740 = vunpack.c.l.bf16 %v738
        %v741 = vunpack.c.h.bf16 %v738
        %v742 = vunpack.c.l.bf16 %v739
        %v743 = vunpack.c.h.bf16 %v739
        %v744 = vstv %s737
        %v745 = vmul.f32 %v744, %v740
        %v746 = vmul.f32 %v744, %v741
        %v747 = vmul.f32 %v744, %v742
        %v748 = vmul.f32 %v744, %v743
        %v749 = vadd.f32 %v733, %v745
        %v750 = vadd.f32 %v734, %v746
        %v751 = vadd.f32 %v735, %v747
        %v752 = vadd.f32 %v736, %v748
        %v753 = vmul.f32 %v749, %v749
        %v754 = vmul.f32 %v750, %v750
        %v755 = vmul.f32 %v751, %v751
        %v756 = vmul.f32 %v752, %v752
        %v757 = vsel %vm501, %v754, 0.0
        %v758 = vadd.f32 %v753, %v757
        %759 = vadd.xlane.f32.xlu0 %v758
        %v760 = vpop.xlane.xlu0 %759
        %v761 = vsel %vm501, %v756, 0.0
        %v762 = vadd.f32 %v755, %v761
        %763 = vadd.xlane.f32.xlu0 %v762
        %v764 = vpop.xlane.xlu0 %763
        %v765 = vadd.f32 %v510, %v760
        %v766 = vadd.f32 %v511, %v764
        %v767 = vadd.f32 %v355, %v749
        %v768 = vadd.f32 %v356, %v750
        %v769 = vadd.f32 %v357, %v751
        %v770 = vadd.f32 %v358, %v752
        %v772 = vsel %vm501, %v768, 0
        %v775 = vsel %vm501, %v770, 0
        %777 = vmatprep.subr.mxu0 0.0
        %778 = vmatpush1.msra.mxu0 %v359
        %779 = vmatprep.subr.mxu0 0.0
        %780 = vmatpush1.msra.mxu0 %v360
        %781 = vmatprep.subr.mxu0 0.0
        %782 = vmatpush1.msra.mxu0 %v361
        %783 = vmatprep.subr.mxu0 0.0
        %784 = vmatpush1.msra.mxu0 %v362
        %785 = vmatprep.subr.mxu0 0.0
        %786 = vmatpush1.msra.mxu0 %v363
        %787 = vmatprep.subr.mxu0 0.0
        %788 = vmatpush1.msra.mxu0 %v364
        %789 = vmatprep.subr.mxu0 0.0
        %790 = vmatpush1.msra.mxu0 %v524
        %791 = vmatprep.subr.mxu0 0.0
        %792 = vmatpush1.msra.mxu0 0.0
        %793 = vmatprep.subr.mxu0 0.0
        %794 = vmatpush1.msra.mxu0 0.0
        %795 = vmatprep.subr.mxu0 0.0
        %796 = vmatpush1.msra.mxu0 0.0
        %797 = vmatprep.subr.mxu0 0.0
        %798 = vmatpush1.msra.mxu0 0.0
        %799 = vmatprep.subr.mxu0 0.0
        %800 = vmatpush1.msra.mxu0 0.0
        %801 = vmatprep.subr.mxu0 0.0
        %802 = vmatpush1.msra.mxu0 0.0
        %803 = vmatprep.subr.mxu0 0.0
        %804 = vmatpush1.msra.mxu0 0.0
        %805 = vmatprep.subr.mxu0 0.0
        %806 = vmatpush1.msra.mxu0 0.0
        %807 = vmatprep.subr.mxu0 0.0
        %808 = vmatpush1.msra.mxu0 0.0
        %809 = vmatprep.subr.mxu0 0.0
        %810 = vmatpush1.msra.mxu0 0.0
        %811 = vmatprep.subr.mxu0 0.0
        %812 = vmatpush1.msra.mxu0 0.0
        %813 = vmatprep.subr.mxu0 0.0
        %814 = vmatpush1.msra.mxu0 0.0
        %815 = vmatprep.subr.mxu0 0.0
        %816 = vmatpush1.msra.mxu0 0.0
        %817 = vmatprep.subr.mxu0 0.0
        %818 = vmatpush1.msra.mxu0 0.0
        %819 = vmatprep.subr.mxu0 0.0
        %820 = vmatpush1.msra.mxu0 0.0
        %821 = vmatprep.subr.mxu0 0.0
        %822 = vmatpush1.msra.mxu0 0.0
        %823 = vmatprep.subr.mxu0 0.0
        %824 = vmatpush1.msra.mxu0 0.0
        %825 = vmatprep.subr.mxu0 0.0
        %826 = vmatpush1.msra.mxu0 0.0
        %827 = vmatprep.subr.mxu0 0.0
        %828 = vmatpush1.msra.mxu0 0.0
        %829 = vmatprep.subr.mxu0 0.0
        %830 = vmatpush1.msra.mxu0 0.0
        %831 = vmatprep.subr.mxu0 0.0
        %832 = vmatpush1.msra.mxu0 0.0
        %833 = vmatprep.subr.mxu0 0.0
        %834 = vmatpush1.msra.mxu0 0.0
        %835 = vmatprep.subr.mxu0 0.0
        %836 = vmatpush1.msra.mxu0 0.0
        %837 = vmatprep.subr.mxu0 0.0
        %838 = vmatpush1.msra.mxu0 0.0
        %839 = vmatprep.subr.mxu0 0.0
        %840 = vmatpush1.msra.mxu0 0.0
        %841 = vmatprep.mubr.f32.mxu0 0.0
        %842 = vmatmul.mubr.f32.gmra.mrb[0].mxu0 %v772
        %v843 = vpop.f32.mrb[0].mxu0
        %v844 = vadd.f32 0.0, %v843
        %v845 = vpop.f32.mrb[0].mxu0
        %846 = vmatprep.mubr.f32.mxu0 0.0
        %847 = vmatmul.mubr.f32.gmra.mrb[0].mxu0 %v775
        %v848 = vpop.f32.mrb[0].mxu0
        %v849 = vadd.f32 0.0, %v848
        %v850 = vpop.f32.mrb[0].mxu0
        %851 = vdwg.mxu0
        %v852 = vadd.f32 %v767, %v844
        %v853 = vadd.f32 %v769, %v849
        %854 = vmax.xlane.f32.xlu0 %v852
        %v855 = vpop.xlane.xlu0 %854
        %856 = vmax.xlane.f32.xlu0 %v853
        %v857 = vpop.xlane.xlu0 %856
        %v858 = vsub.f32 %v852, %v855
        %v859 = vsub.f32 %v853, %v857
        %v860 = vmul.f32 %v858, 1.442695
        %v861 = vpow.pop %v860
        %v862 = vmul.f32 %v859, 1.442695
        %v863 = vpow.pop %v862
        %864 = vadd.xlane.f32.xlu0 %v861
        %v865 = vpop.xlane.xlu0 %864
        %866 = vadd.xlane.f32.xlu0 %v863
        %v867 = vpop.xlane.xlu0 %866
        %v868 = vlog2.pop %v865
        %v869 = vmul.f32 %v868, 0.6931472
        %v870 = vlog2.pop %v867
        %v871 = vmul.f32 %v870, 0.6931472
        %v872 = vadd.f32 %v855, %v869
        %v873 = vadd.f32 %v857, %v871
        %v874 = vsub.f32 %v852, %v872
        %v875 = vsub.f32 %v853, %v873
        %v876 = vsub.f32 %v874, 3.218876
        %v877 = vsub.f32 %v875, 3.218876
        %s878 = scalar_lea.vmem %s336, 16 [#allocation10]
        %879 = vst [vmem:[%s878] sm:$0xff] %v876
        %880 = vst [vmem:[%s878 + $0x8] sm:$0xff] %v877
        %s881 = sld [smem:[#allocation2 + $0x2]]
        %v882 = vld [vmem:[%s293] sm:$0xff]
        %v883 = vld [vmem:[%s293 + $0x8] sm:$0xff]
        %v884 = vunpack.c.l.bf16 %v882
        %v885 = vunpack.c.h.bf16 %v882
        %v886 = vunpack.c.l.bf16 %v883
        %v887 = vunpack.c.h.bf16 %v883
        %v888 = vstv %s881
        %v889 = vmul.f32 %v888, %v884
        %v890 = vmul.f32 %v888, %v885
        %v891 = vmul.f32 %v888, %v886
        %v892 = vmul.f32 %v888, %v887
        %s893 = sld [smem:[#allocation2 + $0x82]]
        %v894 = vld [vmem:[%s379] sm:$0xff]
        %v895 = vld [vmem:[%s379 + $0x8] sm:$0xff]
        %v896 = vunpack.c.l.bf16 %v894
        %v897 = vunpack.c.h.bf16 %v894
        %v898 = vunpack.c.l.bf16 %v895
        %v899 = vunpack.c.h.bf16 %v895
        %v900 = vstv %s893
        %v901 = vmul.f32 %v900, %v896
        %v902 = vmul.f32 %v900, %v897
        %v903 = vmul.f32 %v900, %v898
        %v904 = vmul.f32 %v900, %v899
        %v905 = vadd.f32 %v889, %v901
        %v906 = vadd.f32 %v890, %v902
        %v907 = vadd.f32 %v891, %v903
        %v908 = vadd.f32 %v892, %v904
        %s909 = sld [smem:[#allocation2 + $0x102]]
        %v910 = vld [vmem:[%s396] sm:$0xff]
        %v911 = vld [vmem:[%s396 + $0x8] sm:$0xff]
        %v912 = vunpack.c.l.bf16 %v910
        %v913 = vunpack.c.h.bf16 %v910
        %v914 = vunpack.c.l.bf16 %v911
        %v915 = vunpack.c.h.bf16 %v911
        %v916 = vstv %s909
        %v917 = vmul.f32 %v916, %v912
        %v918 = vmul.f32 %v916, %v913
        %v919 = vmul.f32 %v916, %v914
        %v920 = vmul.f32 %v916, %v915
        %v921 = vadd.f32 %v905, %v917
        %v922 = vadd.f32 %v906, %v918
        %v923 = vadd.f32 %v907, %v919
        %v924 = vadd.f32 %v908, %v920
        %s925 = sld [smem:[#allocation2 + $0x182]]
        %v926 = vld [vmem:[%s413] sm:$0xff]
        %v927 = vld [vmem:[%s413 + $0x8] sm:$0xff]
        %v928 = vunpack.c.l.bf16 %v926
        %v929 = vunpack.c.h.bf16 %v926
        %v930 = vunpack.c.l.bf16 %v927
        %v931 = vunpack.c.h.bf16 %v927
        %v932 = vstv %s925
        %v933 = vmul.f32 %v932, %v928
        %v934 = vmul.f32 %v932, %v929
        %v935 = vmul.f32 %v932, %v930
        %v936 = vmul.f32 %v932, %v931
        %v937 = vadd.f32 %v921, %v933
        %v938 = vadd.f32 %v922, %v934
        %v939 = vadd.f32 %v923, %v935
        %v940 = vadd.f32 %v924, %v936
        %s941 = sld [smem:[#allocation2 + $0x202]]
        %v942 = vld [vmem:[%s430] sm:$0xff]
        %v943 = vld [vmem:[%s430 + $0x8] sm:$0xff]
        %v944 = vunpack.c.l.bf16 %v942
        %v945 = vunpack.c.h.bf16 %v942
        %v946 = vunpack.c.l.bf16 %v943
        %v947 = vunpack.c.h.bf16 %v943
        %v948 = vstv %s941
        %v949 = vmul.f32 %v948, %v944
        %v950 = vmul.f32 %v948, %v945
        %v951 = vmul.f32 %v948, %v946
        %v952 = vmul.f32 %v948, %v947
        %v953 = vadd.f32 %v937, %v949
        %v954 = vadd.f32 %v938, %v950
        %v955 = vadd.f32 %v939, %v951
        %v956 = vadd.f32 %v940, %v952
        %s957 = sld [smem:[#allocation2 + $0x282]]
        %v958 = vld [vmem:[%s447] sm:$0xff]
        %v959 = vld [vmem:[%s447 + $0x8] sm:$0xff]
        %v960 = vunpack.c.l.bf16 %v958
        %v961 = vunpack.c.h.bf16 %v958
        %v962 = vunpack.c.l.bf16 %v959
        %v963 = vunpack.c.h.bf16 %v959
        %v964 = vstv %s957
        %v965 = vmul.f32 %v964, %v960
        %v966 = vmul.f32 %v964, %v961
        %v967 = vmul.f32 %v964, %v962
        %v968 = vmul.f32 %v964, %v963
        %v969 = vadd.f32 %v953, %v965
        %v970 = vadd.f32 %v954, %v966
        %v971 = vadd.f32 %v955, %v967
        %v972 = vadd.f32 %v956, %v968
        %s973 = sld [smem:[#allocation2 + $0x302]]
        %v974 = vld [vmem:[%s464] sm:$0xff]
        %v975 = vld [vmem:[%s464 + $0x8] sm:$0xff]
        %v976 = vunpack.c.l.bf16 %v974
        %v977 = vunpack.c.h.bf16 %v974
        %v978 = vunpack.c.l.bf16 %v975
        %v979 = vunpack.c.h.bf16 %v975
        %v980 = vstv %s973
        %v981 = vmul.f32 %v980, %v976
        %v982 = vmul.f32 %v980, %v977
        %v983 = vmul.f32 %v980, %v978
        %v984 = vmul.f32 %v980, %v979
        %v985 = vadd.f32 %v969, %v981
        %v986 = vadd.f32 %v970, %v982
        %v987 = vadd.f32 %v971, %v983
        %v988 = vadd.f32 %v972, %v984
        %s989 = sld [smem:[#allocation2 + $0x382]]
        %v990 = vld [vmem:[%s481] sm:$0xff]
        %v991 = vld [vmem:[%s481 + $0x8] sm:$0xff]
        %v992 = vunpack.c.l.bf16 %v990
        %v993 = vunpack.c.h.bf16 %v990
        %v994 = vunpack.c.l.bf16 %v991
        %v995 = vunpack.c.h.bf16 %v991
        %v996 = vstv %s989
        %v997 = vmul.f32 %v996, %v992
        %v998 = vmul.f32 %v996, %v993
        %v999 = vmul.f32 %v996, %v994
        %v1000 = vmul.f32 %v996, %v995
        %v1001 = vadd.f32 %v985, %v997
        %v1002 = vadd.f32 %v986, %v998
        %v1003 = vadd.f32 %v987, %v999
        %v1004 = vadd.f32 %v988, %v1000
        %v1005 = vmul.f32 %v1001, %v1001
        %v1006 = vmul.f32 %v1002, %v1002
        %v1007 = vmul.f32 %v1003, %v1003
        %v1008 = vmul.f32 %v1004, %v1004
        %v1009 = vsel %vm501, %v1006, 0.0
        %v1010 = vadd.f32 %v1005, %v1009
        %1011 = vadd.xlane.f32.xlu0 %v1010
        %v1012 = vpop.xlane.xlu0 %1011
        %v1013 = vsel %vm501, %v1008, 0.0
        %v1014 = vadd.f32 %v1007, %v1013
        %1015 = vadd.xlane.f32.xlu0 %v1014
        %v1016 = vpop.xlane.xlu0 %1015
        %v1017 = vadd.f32 %v765, %v1012
        %v1018 = vadd.f32 %v766, %v1016
        %v1019 = vadd.f32 %v355, %v1001
        %v1020 = vadd.f32 %v356, %v1002
        %v1021 = vadd.f32 %v357, %v1003
        %v1022 = vadd.f32 %v358, %v1004
        %v1024 = vsel %vm501, %v1020, 0
        %v1027 = vsel %vm501, %v1022, 0
        %1029 = vmatprep.subr.mxu0 0.0
        %1030 = vmatpush1.msra.mxu0 %v359
        %1031 = vmatprep.subr.mxu0 0.0
        %1032 = vmatpush1.msra.mxu0 %v360
        %1033 = vmatprep.subr.mxu0 0.0
        %1034 = vmatpush1.msra.mxu0 %v361
        %1035 = vmatprep.subr.mxu0 0.0
        %1036 = vmatpush1.msra.mxu0 %v362
        %1037 = vmatprep.subr.mxu0 0.0
        %1038 = vmatpush1.msra.mxu0 %v363
        %1039 = vmatprep.subr.mxu0 0.0
        %1040 = vmatpush1.msra.mxu0 %v364
        %1041 = vmatprep.subr.mxu0 0.0
        %1042 = vmatpush1.msra.mxu0 %v524
        %1043 = vmatprep.subr.mxu0 0.0
        %1044 = vmatpush1.msra.mxu0 0.0
        %1045 = vmatprep.subr.mxu0 0.0
        %1046 = vmatpush1.msra.mxu0 0.0
        %1047 = vmatprep.subr.mxu0 0.0
        %1048 = vmatpush1.msra.mxu0 0.0
        %1049 = vmatprep.subr.mxu0 0.0
        %1050 = vmatpush1.msra.mxu0 0.0
        %1051 = vmatprep.subr.mxu0 0.0
        %1052 = vmatpush1.msra.mxu0 0.0
        %1053 = vmatprep.subr.mxu0 0.0
        %1054 = vmatpush1.msra.mxu0 0.0
        %1055 = vmatprep.subr.mxu0 0.0
        %1056 = vmatpush1.msra.mxu0 0.0
        %1057 = vmatprep.subr.mxu0 0.0
        %1058 = vmatpush1.msra.mxu0 0.0
        %1059 = vmatprep.subr.mxu0 0.0
        %1060 = vmatpush1.msra.mxu0 0.0
        %1061 = vmatprep.subr.mxu0 0.0
        %1062 = vmatpush1.msra.mxu0 0.0
        %1063 = vmatprep.subr.mxu0 0.0
        %1064 = vmatpush1.msra.mxu0 0.0
        %1065 = vmatprep.subr.mxu0 0.0
        %1066 = vmatpush1.msra.mxu0 0.0
        %1067 = vmatprep.subr.mxu0 0.0
        %1068 = vmatpush1.msra.mxu0 0.0
        %1069 = vmatprep.subr.mxu0 0.0
        %1070 = vmatpush1.msra.mxu0 0.0
        %1071 = vmatprep.subr.mxu0 0.0
        %1072 = vmatpush1.msra.mxu0 0.0
        %1073 = vmatprep.subr.mxu0 0.0
        %1074 = vmatpush1.msra.mxu0 0.0
        %1075 = vmatprep.subr.mxu0 0.0
        %1076 = vmatpush1.msra.mxu0 0.0
        %1077 = vmatprep.subr.mxu0 0.0
        %1078 = vmatpush1.msra.mxu0 0.0
        %1079 = vmatprep.subr.mxu0 0.0
        %1080 = vmatpush1.msra.mxu0 0.0
        %1081 = vmatprep.subr.mxu0 0.0
        %1082 = vmatpush1.msra.mxu0 0.0
        %1083 = vmatprep.subr.mxu0 0.0
        %1084 = vmatpush1.msra.mxu0 0.0
        %1085 = vmatprep.subr.mxu0 0.0
        %1086 = vmatpush1.msra.mxu0 0.0
        %1087 = vmatprep.subr.mxu0 0.0
        %1088 = vmatpush1.msra.mxu0 0.0
        %1089 = vmatprep.subr.mxu0 0.0
        %1090 = vmatpush1.msra.mxu0 0.0
        %1091 = vmatprep.subr.mxu0 0.0
        %1092 = vmatpush1.msra.mxu0 0.0
        %1093 = vmatprep.mubr.f32.mxu0 0.0
        %1094 = vmatmul.mubr.f32.gmra.mrb[0].mxu0 %v1024
        %v1095 = vpop.f32.mrb[0].mxu0
        %v1096 = vadd.f32 0.0, %v1095
        %v1097 = vpop.f32.mrb[0].mxu0
        %1098 = vmatprep.mubr.f32.mxu0 0.0
        %1099 = vmatmul.mubr.f32.gmra.mrb[0].mxu0 %v1027
        %v1100 = vpop.f32.mrb[0].mxu0
        %v1101 = vadd.f32 0.0, %v1100
        %v1102 = vpop.f32.mrb[0].mxu0
        %1103 = vdwg.mxu0
        %v1104 = vadd.f32 %v1019, %v1096
        %v1105 = vadd.f32 %v1021, %v1101
        %1106 = vmax.xlane.f32.xlu0 %v1104
        %v1107 = vpop.xlane.xlu0 %1106
        %1108 = vmax.xlane.f32.xlu0 %v1105
        %v1109 = vpop.xlane.xlu0 %1108
        %v1110 = vsub.f32 %v1104, %v1107
        %v1111 = vsub.f32 %v1105, %v1109
        %v1112 = vmul.f32 %v1110, 1.442695
        %v1113 = vpow.pop %v1112
        %v1114 = vmul.f32 %v1111, 1.442695
        %v1115 = vpow.pop %v1114
        %1116 = vadd.xlane.f32.xlu0 %v1113
        %v1117 = vpop.xlane.xlu0 %1116
        %1118 = vadd.xlane.f32.xlu0 %v1115
        %v1119 = vpop.xlane.xlu0 %1118
        %v1120 = vlog2.pop %v1117
        %v1121 = vmul.f32 %v1120, 0.6931472
        %v1122 = vlog2.pop %v1119
        %v1123 = vmul.f32 %v1122, 0.6931472
        %v1124 = vadd.f32 %v1107, %v1121
        %v1125 = vadd.f32 %v1109, %v1123
        %v1126 = vsub.f32 %v1104, %v1124
        %v1127 = vsub.f32 %v1105, %v1125
        %v1128 = vsub.f32 %v1126, 3.218876
        %v1129 = vsub.f32 %v1127, 3.218876
        %s1130 = scalar_lea.vmem %s336, 32 [#allocation10]
        %1131 = vst [vmem:[%s1130] sm:$0xff] %v1128
        %1132 = vst [vmem:[%s1130 + $0x8] sm:$0xff] %v1129
        %s1133 = sld [smem:[#allocation2 + $0x3]]
        %v1134 = vld [vmem:[%s293] sm:$0xff]
        %v1135 = vld [vmem:[%s293 + $0x8] sm:$0xff]
        %v1136 = vunpack.c.l.bf16 %v1134
        %v1137 = vunpack.c.h.bf16 %v1134
        %v1138 = vunpack.c.l.bf16 %v1135
        %v1139 = vunpack.c.h.bf16 %v1135
        %v1140 = vstv %s1133
        %v1141 = vmul.f32 %v1140, %v1136
        %v1142 = vmul.f32 %v1140, %v1137
        %v1143 = vmul.f32 %v1140, %v1138
        %v1144 = vmul.f32 %v1140, %v1139
        %s1145 = sld [smem:[#allocation2 + $0x83]]
        %v1146 = vld [vmem:[%s379] sm:$0xff]
        %v1147 = vld [vmem:[%s379 + $0x8] sm:$0xff]
        %v1148 = vunpack.c.l.bf16 %v1146
        %v1149 = vunpack.c.h.bf16 %v1146
        %v1150 = vunpack.c.l.bf16 %v1147
        %v1151 = vunpack.c.h.bf16 %v1147
        %v1152 = vstv %s1145
        %v1153 = vmul.f32 %v1152, %v1148
        %v1154 = vmul.f32 %v1152, %v1149
        %v1155 = vmul.f32 %v1152, %v1150
        %v1156 = vmul.f32 %v1152, %v1151
        %v1157 = vadd.f32 %v1141, %v1153
        %v1158 = vadd.f32 %v1142, %v1154
        %v1159 = vadd.f32 %v1143, %v1155
        %v1160 = vadd.f32 %v1144, %v1156
        %s1161 = sld [smem:[#allocation2 + $0x103]]
        %v1162 = vld [vmem:[%s396] sm:$0xff]
        %v1163 = vld [vmem:[%s396 + $0x8] sm:$0xff]
        %v1164 = vunpack.c.l.bf16 %v1162
        %v1165 = vunpack.c.h.bf16 %v1162
        %v1166 = vunpack.c.l.bf16 %v1163
        %v1167 = vunpack.c.h.bf16 %v1163
        %v1168 = vstv %s1161
        %v1169 = vmul.f32 %v1168, %v1164
        %v1170 = vmul.f32 %v1168, %v1165
        %v1171 = vmul.f32 %v1168, %v1166
        %v1172 = vmul.f32 %v1168, %v1167
        %v1173 = vadd.f32 %v1157, %v1169
        %v1174 = vadd.f32 %v1158, %v1170
        %v1175 = vadd.f32 %v1159, %v1171
        %v1176 = vadd.f32 %v1160, %v1172
        %s1177 = sld [smem:[#allocation2 + $0x183]]
        %v1178 = vld [vmem:[%s413] sm:$0xff]
        %v1179 = vld [vmem:[%s413 + $0x8] sm:$0xff]
        %v1180 = vunpack.c.l.bf16 %v1178
        %v1181 = vunpack.c.h.bf16 %v1178
        %v1182 = vunpack.c.l.bf16 %v1179
        %v1183 = vunpack.c.h.bf16 %v1179
        %v1184 = vstv %s1177
        %v1185 = vmul.f32 %v1184, %v1180
        %v1186 = vmul.f32 %v1184, %v1181
        %v1187 = vmul.f32 %v1184, %v1182
        %v1188 = vmul.f32 %v1184, %v1183
        %v1189 = vadd.f32 %v1173, %v1185
        %v1190 = vadd.f32 %v1174, %v1186
        %v1191 = vadd.f32 %v1175, %v1187
        %v1192 = vadd.f32 %v1176, %v1188
        %s1193 = sld [smem:[#allocation2 + $0x203]]
        %v1194 = vld [vmem:[%s430] sm:$0xff]
        %v1195 = vld [vmem:[%s430 + $0x8] sm:$0xff]
        %v1196 = vunpack.c.l.bf16 %v1194
        %v1197 = vunpack.c.h.bf16 %v1194
        %v1198 = vunpack.c.l.bf16 %v1195
        %v1199 = vunpack.c.h.bf16 %v1195
        %v1200 = vstv %s1193
        %v1201 = vmul.f32 %v1200, %v1196
        %v1202 = vmul.f32 %v1200, %v1197
        %v1203 = vmul.f32 %v1200, %v1198
        %v1204 = vmul.f32 %v1200, %v1199
        %v1205 = vadd.f32 %v1189, %v1201
        %v1206 = vadd.f32 %v1190, %v1202
        %v1207 = vadd.f32 %v1191, %v1203
        %v1208 = vadd.f32 %v1192, %v1204
        %s1209 = sld [smem:[#allocation2 + $0x283]]
        %v1210 = vld [vmem:[%s447] sm:$0xff]
        %v1211 = vld [vmem:[%s447 + $0x8] sm:$0xff]
        %v1212 = vunpack.c.l.bf16 %v1210
        %v1213 = vunpack.c.h.bf16 %v1210
        %v1214 = vunpack.c.l.bf16 %v1211
        %v1215 = vunpack.c.h.bf16 %v1211
        %v1216 = vstv %s1209
        %v1217 = vmul.f32 %v1216, %v1212
        %v1218 = vmul.f32 %v1216, %v1213
        %v1219 = vmul.f32 %v1216, %v1214
        %v1220 = vmul.f32 %v1216, %v1215
        %v1221 = vadd.f32 %v1205, %v1217
        %v1222 = vadd.f32 %v1206, %v1218
        %v1223 = vadd.f32 %v1207, %v1219
        %v1224 = vadd.f32 %v1208, %v1220
        %s1225 = sld [smem:[#allocation2 + $0x303]]
        %v1226 = vld [vmem:[%s464] sm:$0xff]
        %v1227 = vld [vmem:[%s464 + $0x8] sm:$0xff]
        %v1228 = vunpack.c.l.bf16 %v1226
        %v1229 = vunpack.c.h.bf16 %v1226
        %v1230 = vunpack.c.l.bf16 %v1227
        %v1231 = vunpack.c.h.bf16 %v1227
        %v1232 = vstv %s1225
        %v1233 = vmul.f32 %v1232, %v1228
        %v1234 = vmul.f32 %v1232, %v1229
        %v1235 = vmul.f32 %v1232, %v1230
        %v1236 = vmul.f32 %v1232, %v1231
        %v1237 = vadd.f32 %v1221, %v1233
        %v1238 = vadd.f32 %v1222, %v1234
        %v1239 = vadd.f32 %v1223, %v1235
        %v1240 = vadd.f32 %v1224, %v1236
        %s1241 = sld [smem:[#allocation2 + $0x383]]
        %v1242 = vld [vmem:[%s481] sm:$0xff]
        %v1243 = vld [vmem:[%s481 + $0x8] sm:$0xff]
        %v1244 = vunpack.c.l.bf16 %v1242
        %v1245 = vunpack.c.h.bf16 %v1242
        %v1246 = vunpack.c.l.bf16 %v1243
        %v1247 = vunpack.c.h.bf16 %v1243
        %v1248 = vstv %s1241
        %v1249 = vmul.f32 %v1248, %v1244
        %v1250 = vmul.f32 %v1248, %v1245
        %v1251 = vmul.f32 %v1248, %v1246
        %v1252 = vmul.f32 %v1248, %v1247
        %v1253 = vadd.f32 %v1237, %v1249
        %v1254 = vadd.f32 %v1238, %v1250
        %v1255 = vadd.f32 %v1239, %v1251
        %v1256 = vadd.f32 %v1240, %v1252
        %v1257 = vmul.f32 %v1253, %v1253
        %v1258 = vmul.f32 %v1254, %v1254
        %v1259 = vmul.f32 %v1255, %v1255
        %v1260 = vmul.f32 %v1256, %v1256
        %v1261 = vsel %vm501, %v1258, 0.0
        %v1262 = vadd.f32 %v1257, %v1261
        %1263 = vadd.xlane.f32.xlu0 %v1262
        %v1264 = vpop.xlane.xlu0 %1263
        %v1265 = vsel %vm501, %v1260, 0.0
        %v1266 = vadd.f32 %v1259, %v1265
        %1267 = vadd.xlane.f32.xlu0 %v1266
        %v1268 = vpop.xlane.xlu0 %1267
        %v1269 = vadd.f32 %v1017, %v1264
        %v1270 = vadd.f32 %v1018, %v1268
        %v1271 = vadd.f32 %v355, %v1253
        %v1272 = vadd.f32 %v356, %v1254
        %v1273 = vadd.f32 %v357, %v1255
        %v1274 = vadd.f32 %v358, %v1256
        %v1276 = vsel %vm501, %v1272, 0
        %v1279 = vsel %vm501, %v1274, 0
        %1281 = vmatprep.subr.mxu0 0.0
        %1282 = vmatpush1.msra.mxu0 %v359
        %1283 = vmatprep.subr.mxu0 0.0
        %1284 = vmatpush1.msra.mxu0 %v360
        %1285 = vmatprep.subr.mxu0 0.0
        %1286 = vmatpush1.msra.mxu0 %v361
        %1287 = vmatprep.subr.mxu0 0.0
        %1288 = vmatpush1.msra.mxu0 %v362
        %1289 = vmatprep.subr.mxu0 0.0
        %1290 = vmatpush1.msra.mxu0 %v363
        %1291 = vmatprep.subr.mxu0 0.0
        %1292 = vmatpush1.msra.mxu0 %v364
        %1293 = vmatprep.subr.mxu0 0.0
        %1294 = vmatpush1.msra.mxu0 %v524
        %1295 = vmatprep.subr.mxu0 0.0
        %1296 = vmatpush1.msra.mxu0 0.0
        %1297 = vmatprep.subr.mxu0 0.0
        %1298 = vmatpush1.msra.mxu0 0.0
        %1299 = vmatprep.subr.mxu0 0.0
        %1300 = vmatpush1.msra.mxu0 0.0
        %1301 = vmatprep.subr.mxu0 0.0
        %1302 = vmatpush1.msra.mxu0 0.0
        %1303 = vmatprep.subr.mxu0 0.0
        %1304 = vmatpush1.msra.mxu0 0.0
        %1305 = vmatprep.subr.mxu0 0.0
        %1306 = vmatpush1.msra.mxu0 0.0
        %1307 = vmatprep.subr.mxu0 0.0
        %1308 = vmatpush1.msra.mxu0 0.0
        %1309 = vmatprep.subr.mxu0 0.0
        %1310 = vmatpush1.msra.mxu0 0.0
        %1311 = vmatprep.subr.mxu0 0.0
        %1312 = vmatpush1.msra.mxu0 0.0
        %1313 = vmatprep.subr.mxu0 0.0
        %1314 = vmatpush1.msra.mxu0 0.0
        %1315 = vmatprep.subr.mxu0 0.0
        %1316 = vmatpush1.msra.mxu0 0.0
        %1317 = vmatprep.subr.mxu0 0.0
        %1318 = vmatpush1.msra.mxu0 0.0
        %1319 = vmatprep.subr.mxu0 0.0
        %1320 = vmatpush1.msra.mxu0 0.0
        %1321 = vmatprep.subr.mxu0 0.0
        %1322 = vmatpush1.msra.mxu0 0.0
        %1323 = vmatprep.subr.mxu0 0.0
        %1324 = vmatpush1.msra.mxu0 0.0
        %1325 = vmatprep.subr.mxu0 0.0
        %1326 = vmatpush1.msra.mxu0 0.0
        %1327 = vmatprep.subr.mxu0 0.0
        %1328 = vmatpush1.msra.mxu0 0.0
        %1329 = vmatprep.subr.mxu0 0.0
        %1330 = vmatpush1.msra.mxu0 0.0
        %1331 = vmatprep.subr.mxu0 0.0
        %1332 = vmatpush1.msra.mxu0 0.0
        %1333 = vmatprep.subr.mxu0 0.0
        %1334 = vmatpush1.msra.mxu0 0.0
        %1335 = vmatprep.subr.mxu0 0.0
        %1336 = vmatpush1.msra.mxu0 0.0
        %1337 = vmatprep.subr.mxu0 0.0
        %1338 = vmatpush1.msra.mxu0 0.0
        %1339 = vmatprep.subr.mxu0 0.0
        %1340 = vmatpush1.msra.mxu0 0.0
        %1341 = vmatprep.subr.mxu0 0.0
        %1342 = vmatpush1.msra.mxu0 0.0
        %1343 = vmatprep.subr.mxu0 0.0
        %1344 = vmatpush1.msra.mxu0 0.0
        %1345 = vmatprep.mubr.f32.mxu0 0.0
        %1346 = vmatmul.mubr.f32.gmra.mrb[0].mxu0 %v1276
        %v1347 = vpop.f32.mrb[0].mxu0
        %v1348 = vadd.f32 0.0, %v1347
        %v1349 = vpop.f32.mrb[0].mxu0
        %1350 = vmatprep.mubr.f32.mxu0 0.0
        %1351 = vmatmul.mubr.f32.gmra.mrb[0].mxu0 %v1279
        %v1352 = vpop.f32.mrb[0].mxu0
        %v1353 = vadd.f32 0.0, %v1352
        %v1354 = vpop.f32.mrb[0].mxu0
        %1355 = vdwg.mxu0
        %v1356 = vadd.f32 %v1271, %v1348
        %v1357 = vadd.f32 %v1273, %v1353
        %1358 = vmax.xlane.f32.xlu0 %v1356
        %v1359 = vpop.xlane.xlu0 %1358
        %1360 = vmax.xlane.f32.xlu0 %v1357
        %v1361 = vpop.xlane.xlu0 %1360
        %v1362 = vsub.f32 %v1356, %v1359
        %v1363 = vsub.f32 %v1357, %v1361
        %v1364 = vmul.f32 %v1362, 1.442695
        %v1365 = vpow.pop %v1364
        %v1366 = vmul.f32 %v1363, 1.442695
        %v1367 = vpow.pop %v1366
        %1368 = vadd.xlane.f32.xlu0 %v1365
        %v1369 = vpop.xlane.xlu0 %1368
        %1370 = vadd.xlane.f32.xlu0 %v1367
        %v1371 = vpop.xlane.xlu0 %1370
        %v1372 = vlog2.pop %v1369
        %v1373 = vmul.f32 %v1372, 0.6931472
        %v1374 = vlog2.pop %v1371
        %v1375 = vmul.f32 %v1374, 0.6931472
        %v1376 = vadd.f32 %v1359, %v1373
        %v1377 = vadd.f32 %v1361, %v1375
        %v1378 = vsub.f32 %v1356, %v1376
        %v1379 = vsub.f32 %v1357, %v1377
        %v1380 = vsub.f32 %v1378, 3.218876
        %v1381 = vsub.f32 %v1379, 3.218876
        %s1382 = scalar_lea.vmem %s336, 48 [#allocation10]
        %1383 = vst [vmem:[%s1382] sm:$0xff] %v1380
        %1384 = vst [vmem:[%s1382 + $0x8] sm:$0xff] %v1381
        %s1385 = sld [smem:[#allocation2 + $0x4]]
        %v1386 = vld [vmem:[%s293] sm:$0xff]
        %v1387 = vld [vmem:[%s293 + $0x8] sm:$0xff]
        %v1388 = vunpack.c.l.bf16 %v1386
        %v1389 = vunpack.c.h.bf16 %v1386
        %v1390 = vunpack.c.l.bf16 %v1387
        %v1391 = vunpack.c.h.bf16 %v1387
        %v1392 = vstv %s1385
        %v1393 = vmul.f32 %v1392, %v1388
        %v1394 = vmul.f32 %v1392, %v1389
        %v1395 = vmul.f32 %v1392, %v1390
        %v1396 = vmul.f32 %v1392, %v1391
        %s1397 = sld [smem:[#allocation2 + $0x84]]
        %v1398 = vld [vmem:[%s379] sm:$0xff]
        %v1399 = vld [vmem:[%s379 + $0x8] sm:$0xff]
        %v1400 = vunpack.c.l.bf16 %v1398
        %v1401 = vunpack.c.h.bf16 %v1398
        %v1402 = vunpack.c.l.bf16 %v1399
        %v1403 = vunpack.c.h.bf16 %v1399
        %v1404 = vstv %s1397
        %v1405 = vmul.f32 %v1404, %v1400
        %v1406 = vmul.f32 %v1404, %v1401
        %v1407 = vmul.f32 %v1404, %v1402
        %v1408 = vmul.f32 %v1404, %v1403
        %v1409 = vadd.f32 %v1393, %v1405
        %v1410 = vadd.f32 %v1394, %v1406
        %v1411 = vadd.f32 %v1395, %v1407
        %v1412 = vadd.f32 %v1396, %v1408
        %s1413 = sld [smem:[#allocation2 + $0x104]]
        %v1414 = vld [vmem:[%s396] sm:$0xff]
        %v1415 = vld [vmem:[%s396 + $0x8] sm:$0xff]
        %v1416 = vunpack.c.l.bf16 %v1414
        %v1417 = vunpack.c.h.bf16 %v1414
        %v1418 = vunpack.c.l.bf16 %v1415
        %v1419 = vunpack.c.h.bf16 %v1415
        %v1420 = vstv %s1413
        %v1421 = vmul.f32 %v1420, %v1416
        %v1422 = vmul.f32 %v1420, %v1417
        %v1423 = vmul.f32 %v1420, %v1418
        %v1424 = vmul.f32 %v1420, %v1419
        %v1425 = vadd.f32 %v1409, %v1421
        %v1426 = vadd.f32 %v1410, %v1422
        %v1427 = vadd.f32 %v1411, %v1423
        %v1428 = vadd.f32 %v1412, %v1424
        %s1429 = sld [smem:[#allocation2 + $0x184]]
        %v1430 = vld [vmem:[%s413] sm:$0xff]
        %v1431 = vld [vmem:[%s413 + $0x8] sm:$0xff]
        %v1432 = vunpack.c.l.bf16 %v1430
        %v1433 = vunpack.c.h.bf16 %v1430
        %v1434 = vunpack.c.l.bf16 %v1431
        %v1435 = vunpack.c.h.bf16 %v1431
        %v1436 = vstv %s1429
        %v1437 = vmul.f32 %v1436, %v1432
        %v1438 = vmul.f32 %v1436, %v1433
        %v1439 = vmul.f32 %v1436, %v1434
        %v1440 = vmul.f32 %v1436, %v1435
        %v1441 = vadd.f32 %v1425, %v1437
        %v1442 = vadd.f32 %v1426, %v1438
        %v1443 = vadd.f32 %v1427, %v1439
        %v1444 = vadd.f32 %v1428, %v1440
        %s1445 = sld [smem:[#allocation2 + $0x204]]
        %v1446 = vld [vmem:[%s430] sm:$0xff]
        %v1447 = vld [vmem:[%s430 + $0x8] sm:$0xff]
        %v1448 = vunpack.c.l.bf16 %v1446
        %v1449 = vunpack.c.h.bf16 %v1446
        %v1450 = vunpack.c.l.bf16 %v1447
        %v1451 = vunpack.c.h.bf16 %v1447
        %v1452 = vstv %s1445
        %v1453 = vmul.f32 %v1452, %v1448
        %v1454 = vmul.f32 %v1452, %v1449
        %v1455 = vmul.f32 %v1452, %v1450
        %v1456 = vmul.f32 %v1452, %v1451
        %v1457 = vadd.f32 %v1441, %v1453
        %v1458 = vadd.f32 %v1442, %v1454
        %v1459 = vadd.f32 %v1443, %v1455
        %v1460 = vadd.f32 %v1444, %v1456
        %s1461 = sld [smem:[#allocation2 + $0x284]]
        %v1462 = vld [vmem:[%s447] sm:$0xff]
        %v1463 = vld [vmem:[%s447 + $0x8] sm:$0xff]
        %v1464 = vunpack.c.l.bf16 %v1462
        %v1465 = vunpack.c.h.bf16 %v1462
        %v1466 = vunpack.c.l.bf16 %v1463
        %v1467 = vunpack.c.h.bf16 %v1463
        %v1468 = vstv %s1461
        %v1469 = vmul.f32 %v1468, %v1464
        %v1470 = vmul.f32 %v1468, %v1465
        %v1471 = vmul.f32 %v1468, %v1466
        %v1472 = vmul.f32 %v1468, %v1467
        %v1473 = vadd.f32 %v1457, %v1469
        %v1474 = vadd.f32 %v1458, %v1470
        %v1475 = vadd.f32 %v1459, %v1471
        %v1476 = vadd.f32 %v1460, %v1472
        %s1477 = sld [smem:[#allocation2 + $0x304]]
        %v1478 = vld [vmem:[%s464] sm:$0xff]
        %v1479 = vld [vmem:[%s464 + $0x8] sm:$0xff]
        %v1480 = vunpack.c.l.bf16 %v1478
        %v1481 = vunpack.c.h.bf16 %v1478
        %v1482 = vunpack.c.l.bf16 %v1479
        %v1483 = vunpack.c.h.bf16 %v1479
        %v1484 = vstv %s1477
        %v1485 = vmul.f32 %v1484, %v1480
        %v1486 = vmul.f32 %v1484, %v1481
        %v1487 = vmul.f32 %v1484, %v1482
        %v1488 = vmul.f32 %v1484, %v1483
        %v1489 = vadd.f32 %v1473, %v1485
        %v1490 = vadd.f32 %v1474, %v1486
        %v1491 = vadd.f32 %v1475, %v1487
        %v1492 = vadd.f32 %v1476, %v1488
        %s1493 = sld [smem:[#allocation2 + $0x384]]
        %v1494 = vld [vmem:[%s481] sm:$0xff]
        %v1495 = vld [vmem:[%s481 + $0x8] sm:$0xff]
        %v1496 = vunpack.c.l.bf16 %v1494
        %v1497 = vunpack.c.h.bf16 %v1494
        %v1498 = vunpack.c.l.bf16 %v1495
        %v1499 = vunpack.c.h.bf16 %v1495
        %v1500 = vstv %s1493
        %v1501 = vmul.f32 %v1500, %v1496
        %v1502 = vmul.f32 %v1500, %v1497
        %v1503 = vmul.f32 %v1500, %v1498
        %v1504 = vmul.f32 %v1500, %v1499
        %v1505 = vadd.f32 %v1489, %v1501
        %v1506 = vadd.f32 %v1490, %v1502
        %v1507 = vadd.f32 %v1491, %v1503
        %v1508 = vadd.f32 %v1492, %v1504
        %v1509 = vmul.f32 %v1505, %v1505
        %v1510 = vmul.f32 %v1506, %v1506
        %v1511 = vmul.f32 %v1507, %v1507
        %v1512 = vmul.f32 %v1508, %v1508
        %v1513 = vsel %vm501, %v1510, 0.0
        %v1514 = vadd.f32 %v1509, %v1513
        %1515 = vadd.xlane.f32.xlu0 %v1514
        %v1516 = vpop.xlane.xlu0 %1515
        %v1517 = vsel %vm501, %v1512, 0.0
        %v1518 = vadd.f32 %v1511, %v1517
        %1519 = vadd.xlane.f32.xlu0 %v1518
        %v1520 = vpop.xlane.xlu0 %1519
        %v1521 = vadd.f32 %v1269, %v1516
        %v1522 = vadd.f32 %v1270, %v1520
        %v1523 = vadd.f32 %v355, %v1505
        %v1524 = vadd.f32 %v356, %v1506
        %v1525 = vadd.f32 %v357, %v1507
        %v1526 = vadd.f32 %v358, %v1508
        %v1528 = vsel %vm501, %v1524, 0
        %v1531 = vsel %vm501, %v1526, 0
        %1533 = vmatprep.subr.mxu0 0.0
        %1534 = vmatpush1.msra.mxu0 %v359
        %1535 = vmatprep.subr.mxu0 0.0
        %1536 = vmatpush1.msra.mxu0 %v360
        %1537 = vmatprep.subr.mxu0 0.0
        %1538 = vmatpush1.msra.mxu0 %v361
        %1539 = vmatprep.subr.mxu0 0.0
        %1540 = vmatpush1.msra.mxu0 %v362
        %1541 = vmatprep.subr.mxu0 0.0
        %1542 = vmatpush1.msra.mxu0 %v363
        %1543 = vmatprep.subr.mxu0 0.0
        %1544 = vmatpush1.msra.mxu0 %v364
        %1545 = vmatprep.subr.mxu0 0.0
        %1546 = vmatpush1.msra.mxu0 %v524
        %1547 = vmatprep.subr.mxu0 0.0
        %1548 = vmatpush1.msra.mxu0 0.0
        %1549 = vmatprep.subr.mxu0 0.0
        %1550 = vmatpush1.msra.mxu0 0.0
        %1551 = vmatprep.subr.mxu0 0.0
        %1552 = vmatpush1.msra.mxu0 0.0
        %1553 = vmatprep.subr.mxu0 0.0
        %1554 = vmatpush1.msra.mxu0 0.0
        %1555 = vmatprep.subr.mxu0 0.0
        %1556 = vmatpush1.msra.mxu0 0.0
        %1557 = vmatprep.subr.mxu0 0.0
        %1558 = vmatpush1.msra.mxu0 0.0
        %1559 = vmatprep.subr.mxu0 0.0
        %1560 = vmatpush1.msra.mxu0 0.0
        %1561 = vmatprep.subr.mxu0 0.0
        %1562 = vmatpush1.msra.mxu0 0.0
        %1563 = vmatprep.subr.mxu0 0.0
        %1564 = vmatpush1.msra.mxu0 0.0
        %1565 = vmatprep.subr.mxu0 0.0
        %1566 = vmatpush1.msra.mxu0 0.0
        %1567 = vmatprep.subr.mxu0 0.0
        %1568 = vmatpush1.msra.mxu0 0.0
        %1569 = vmatprep.subr.mxu0 0.0
        %1570 = vmatpush1.msra.mxu0 0.0
        %1571 = vmatprep.subr.mxu0 0.0
        %1572 = vmatpush1.msra.mxu0 0.0
        %1573 = vmatprep.subr.mxu0 0.0
        %1574 = vmatpush1.msra.mxu0 0.0
        %1575 = vmatprep.subr.mxu0 0.0
        %1576 = vmatpush1.msra.mxu0 0.0
        %1577 = vmatprep.subr.mxu0 0.0
        %1578 = vmatpush1.msra.mxu0 0.0
        %1579 = vmatprep.subr.mxu0 0.0
        %1580 = vmatpush1.msra.mxu0 0.0
        %1581 = vmatprep.subr.mxu0 0.0
        %1582 = vmatpush1.msra.mxu0 0.0
        %1583 = vmatprep.subr.mxu0 0.0
        %1584 = vmatpush1.msra.mxu0 0.0
        %1585 = vmatprep.subr.mxu0 0.0
        %1586 = vmatpush1.msra.mxu0 0.0
        %1587 = vmatprep.subr.mxu0 0.0
        %1588 = vmatpush1.msra.mxu0 0.0
        %1589 = vmatprep.subr.mxu0 0.0
        %1590 = vmatpush1.msra.mxu0 0.0
        %1591 = vmatprep.subr.mxu0 0.0
        %1592 = vmatpush1.msra.mxu0 0.0
        %1593 = vmatprep.subr.mxu0 0.0
        %1594 = vmatpush1.msra.mxu0 0.0
        %1595 = vmatprep.subr.mxu0 0.0
        %1596 = vmatpush1.msra.mxu0 0.0
        %1597 = vmatprep.mubr.f32.mxu0 0.0
        %1598 = vmatmul.mubr.f32.gmra.mrb[0].mxu0 %v1528
        %v1599 = vpop.f32.mrb[0].mxu0
        %v1600 = vadd.f32 0.0, %v1599
        %v1601 = vpop.f32.mrb[0].mxu0
        %1602 = vmatprep.mubr.f32.mxu0 0.0
        %1603 = vmatmul.mubr.f32.gmra.mrb[0].mxu0 %v1531
        %v1604 = vpop.f32.mrb[0].mxu0
        %v1605 = vadd.f32 0.0, %v1604
        %v1606 = vpop.f32.mrb[0].mxu0
        %1607 = vdwg.mxu0
        %v1608 = vadd.f32 %v1523, %v1600
        %v1609 = vadd.f32 %v1525, %v1605
        %1610 = vmax.xlane.f32.xlu0 %v1608
        %v1611 = vpop.xlane.xlu0 %1610
        %1612 = vmax.xlane.f32.xlu0 %v1609
        %v1613 = vpop.xlane.xlu0 %1612
        %v1614 = vsub.f32 %v1608, %v1611
        %v1615 = vsub.f32 %v1609, %v1613
        %v1616 = vmul.f32 %v1614, 1.442695
        %v1617 = vpow.pop %v1616
        %v1618 = vmul.f32 %v1615, 1.442695
        %v1619 = vpow.pop %v1618
        %1620 = vadd.xlane.f32.xlu0 %v1617
        %v1621 = vpop.xlane.xlu0 %1620
        %1622 = vadd.xlane.f32.xlu0 %v1619
        %v1623 = vpop.xlane.xlu0 %1622
        %v1624 = vlog2.pop %v1621
        %v1625 = vmul.f32 %v1624, 0.6931472
        %v1626 = vlog2.pop %v1623
        %v1627 = vmul.f32 %v1626, 0.6931472
        %v1628 = vadd.f32 %v1611, %v1625
        %v1629 = vadd.f32 %v1613, %v1627
        %v1630 = vsub.f32 %v1608, %v1628
        %v1631 = vsub.f32 %v1609, %v1629
        %v1632 = vsub.f32 %v1630, 3.218876
        %v1633 = vsub.f32 %v1631, 3.218876
        %s1634 = scalar_lea.vmem %s336, 64 [#allocation10]
        %1635 = vst [vmem:[%s1634] sm:$0xff] %v1632
        %1636 = vst [vmem:[%s1634 + $0x8] sm:$0xff] %v1633
        %s1637 = sld [smem:[#allocation2 + $0x5]]
        %v1638 = vld [vmem:[%s293] sm:$0xff]
        %v1639 = vld [vmem:[%s293 + $0x8] sm:$0xff]
        %v1640 = vunpack.c.l.bf16 %v1638
        %v1641 = vunpack.c.h.bf16 %v1638
        %v1642 = vunpack.c.l.bf16 %v1639
        %v1643 = vunpack.c.h.bf16 %v1639
        %v1644 = vstv %s1637
        %v1645 = vmul.f32 %v1644, %v1640
        %v1646 = vmul.f32 %v1644, %v1641
        %v1647 = vmul.f32 %v1644, %v1642
        %v1648 = vmul.f32 %v1644, %v1643
        %s1649 = sld [smem:[#allocation2 + $0x85]]
        %v1650 = vld [vmem:[%s379] sm:$0xff]
        %v1651 = vld [vmem:[%s379 + $0x8] sm:$0xff]
        %v1652 = vunpack.c.l.bf16 %v1650
        %v1653 = vunpack.c.h.bf16 %v1650
        %v1654 = vunpack.c.l.bf16 %v1651
        %v1655 = vunpack.c.h.bf16 %v1651
        %v1656 = vstv %s1649
        %v1657 = vmul.f32 %v1656, %v1652
        %v1658 = vmul.f32 %v1656, %v1653
        %v1659 = vmul.f32 %v1656, %v1654
        %v1660 = vmul.f32 %v1656, %v1655
        %v1661 = vadd.f32 %v1645, %v1657
        %v1662 = vadd.f32 %v1646, %v1658
        %v1663 = vadd.f32 %v1647, %v1659
        %v1664 = vadd.f32 %v1648, %v1660
        %s1665 = sld [smem:[#allocation2 + $0x105]]
        %v1666 = vld [vmem:[%s396] sm:$0xff]
        %v1667 = vld [vmem:[%s396 + $0x8] sm:$0xff]
        %v1668 = vunpack.c.l.bf16 %v1666
        %v1669 = vunpack.c.h.bf16 %v1666
        %v1670 = vunpack.c.l.bf16 %v1667
        %v1671 = vunpack.c.h.bf16 %v1667
        %v1672 = vstv %s1665
        %v1673 = vmul.f32 %v1672, %v1668
        %v1674 = vmul.f32 %v1672, %v1669
        %v1675 = vmul.f32 %v1672, %v1670
        %v1676 = vmul.f32 %v1672, %v1671
        %v1677 = vadd.f32 %v1661, %v1673
        %v1678 = vadd.f32 %v1662, %v1674
        %v1679 = vadd.f32 %v1663, %v1675
        %v1680 = vadd.f32 %v1664, %v1676
        %s1681 = sld [smem:[#allocation2 + $0x185]]
        %v1682 = vld [vmem:[%s413] sm:$0xff]
        %v1683 = vld [vmem:[%s413 + $0x8] sm:$0xff]
        %v1684 = vunpack.c.l.bf16 %v1682
        %v1685 = vunpack.c.h.bf16 %v1682
        %v1686 = vunpack.c.l.bf16 %v1683
        %v1687 = vunpack.c.h.bf16 %v1683
        %v1688 = vstv %s1681
        %v1689 = vmul.f32 %v1688, %v1684
        %v1690 = vmul.f32 %v1688, %v1685
        %v1691 = vmul.f32 %v1688, %v1686
        %v1692 = vmul.f32 %v1688, %v1687
        %v1693 = vadd.f32 %v1677, %v1689
        %v1694 = vadd.f32 %v1678, %v1690
        %v1695 = vadd.f32 %v1679, %v1691
        %v1696 = vadd.f32 %v1680, %v1692
        %s1697 = sld [smem:[#allocation2 + $0x205]]
        %v1698 = vld [vmem:[%s430] sm:$0xff]
        %v1699 = vld [vmem:[%s430 + $0x8] sm:$0xff]
        %v1700 = vunpack.c.l.bf16 %v1698
        %v1701 = vunpack.c.h.bf16 %v1698
        %v1702 = vunpack.c.l.bf16 %v1699
        %v1703 = vunpack.c.h.bf16 %v1699
        %v1704 = vstv %s1697
        %v1705 = vmul.f32 %v1704, %v1700
        %v1706 = vmul.f32 %v1704, %v1701
        %v1707 = vmul.f32 %v1704, %v1702
        %v1708 = vmul.f32 %v1704, %v1703
        %v1709 = vadd.f32 %v1693, %v1705
        %v1710 = vadd.f32 %v1694, %v1706
        %v1711 = vadd.f32 %v1695, %v1707
        %v1712 = vadd.f32 %v1696, %v1708
        %s1713 = sld [smem:[#allocation2 + $0x285]]
        %v1714 = vld [vmem:[%s447] sm:$0xff]
        %v1715 = vld [vmem:[%s447 + $0x8] sm:$0xff]
        %v1716 = vunpack.c.l.bf16 %v1714
        %v1717 = vunpack.c.h.bf16 %v1714
        %v1718 = vunpack.c.l.bf16 %v1715
        %v1719 = vunpack.c.h.bf16 %v1715
        %v1720 = vstv %s1713
        %v1721 = vmul.f32 %v1720, %v1716
        %v1722 = vmul.f32 %v1720, %v1717
        %v1723 = vmul.f32 %v1720, %v1718
        %v1724 = vmul.f32 %v1720, %v1719
        %v1725 = vadd.f32 %v1709, %v1721
        %v1726 = vadd.f32 %v1710, %v1722
        %v1727 = vadd.f32 %v1711, %v1723
        %v1728 = vadd.f32 %v1712, %v1724
        %s1729 = sld [smem:[#allocation2 + $0x305]]
        %v1730 = vld [vmem:[%s464] sm:$0xff]
        %v1731 = vld [vmem:[%s464 + $0x8] sm:$0xff]
        %v1732 = vunpack.c.l.bf16 %v1730
        %v1733 = vunpack.c.h.bf16 %v1730
        %v1734 = vunpack.c.l.bf16 %v1731
        %v1735 = vunpack.c.h.bf16 %v1731
        %v1736 = vstv %s1729
        %v1737 = vmul.f32 %v1736, %v1732
        %v1738 = vmul.f32 %v1736, %v1733
        %v1739 = vmul.f32 %v1736, %v1734
        %v1740 = vmul.f32 %v1736, %v1735
        %v1741 = vadd.f32 %v1725, %v1737
        %v1742 = vadd.f32 %v1726, %v1738
        %v1743 = vadd.f32 %v1727, %v1739
        %v1744 = vadd.f32 %v1728, %v1740
        %s1745 = sld [smem:[#allocation2 + $0x385]]
        %v1746 = vld [vmem:[%s481] sm:$0xff]
        %v1747 = vld [vmem:[%s481 + $0x8] sm:$0xff]
        %v1748 = vunpack.c.l.bf16 %v1746
        %v1749 = vunpack.c.h.bf16 %v1746
        %v1750 = vunpack.c.l.bf16 %v1747
        %v1751 = vunpack.c.h.bf16 %v1747
        %v1752 = vstv %s1745
        %v1753 = vmul.f32 %v1752, %v1748
        %v1754 = vmul.f32 %v1752, %v1749
        %v1755 = vmul.f32 %v1752, %v1750
        %v1756 = vmul.f32 %v1752, %v1751
        %v1757 = vadd.f32 %v1741, %v1753
        %v1758 = vadd.f32 %v1742, %v1754
        %v1759 = vadd.f32 %v1743, %v1755
        %v1760 = vadd.f32 %v1744, %v1756
        %v1761 = vmul.f32 %v1757, %v1757
        %v1762 = vmul.f32 %v1758, %v1758
        %v1763 = vmul.f32 %v1759, %v1759
        %v1764 = vmul.f32 %v1760, %v1760
        %v1765 = vsel %vm501, %v1762, 0.0
        %v1766 = vadd.f32 %v1761, %v1765
        %1767 = vadd.xlane.f32.xlu0 %v1766
        %v1768 = vpop.xlane.xlu0 %1767
        %v1769 = vsel %vm501, %v1764, 0.0
        %v1770 = vadd.f32 %v1763, %v1769
        %1771 = vadd.xlane.f32.xlu0 %v1770
        %v1772 = vpop.xlane.xlu0 %1771
        %v1773 = vadd.f32 %v1521, %v1768
        %v1774 = vadd.f32 %v1522, %v1772
        %v1775 = vadd.f32 %v355, %v1757
        %v1776 = vadd.f32 %v356, %v1758
        %v1777 = vadd.f32 %v357, %v1759
        %v1778 = vadd.f32 %v358, %v1760
        %v1780 = vsel %vm501, %v1776, 0
        %v1783 = vsel %vm501, %v1778, 0
        %1785 = vmatprep.subr.mxu0 0.0
        %1786 = vmatpush1.msra.mxu0 %v359
        %1787 = vmatprep.subr.mxu0 0.0
        %1788 = vmatpush1.msra.mxu0 %v360
        %1789 = vmatprep.subr.mxu0 0.0
        %1790 = vmatpush1.msra.mxu0 %v361
        %1791 = vmatprep.subr.mxu0 0.0
        %1792 = vmatpush1.msra.mxu0 %v362
        %1793 = vmatprep.subr.mxu0 0.0
        %1794 = vmatpush1.msra.mxu0 %v363
        %1795 = vmatprep.subr.mxu0 0.0
        %1796 = vmatpush1.msra.mxu0 %v364
        %1797 = vmatprep.subr.mxu0 0.0
        %1798 = vmatpush1.msra.mxu0 %v524
        %1799 = vmatprep.subr.mxu0 0.0
        %1800 = vmatpush1.msra.mxu0 0.0
        %1801 = vmatprep.subr.mxu0 0.0
        %1802 = vmatpush1.msra.mxu0 0.0
        %1803 = vmatprep.subr.mxu0 0.0
        %1804 = vmatpush1.msra.mxu0 0.0
        %1805 = vmatprep.subr.mxu0 0.0
        %1806 = vmatpush1.msra.mxu0 0.0
        %1807 = vmatprep.subr.mxu0 0.0
        %1808 = vmatpush1.msra.mxu0 0.0
        %1809 = vmatprep.subr.mxu0 0.0
        %1810 = vmatpush1.msra.mxu0 0.0
        %1811 = vmatprep.subr.mxu0 0.0
        %1812 = vmatpush1.msra.mxu0 0.0
        %1813 = vmatprep.subr.mxu0 0.0
        %1814 = vmatpush1.msra.mxu0 0.0
        %1815 = vmatprep.subr.mxu0 0.0
        %1816 = vmatpush1.msra.mxu0 0.0
        %1817 = vmatprep.subr.mxu0 0.0
        %1818 = vmatpush1.msra.mxu0 0.0
        %1819 = vmatprep.subr.mxu0 0.0
        %1820 = vmatpush1.msra.mxu0 0.0
        %1821 = vmatprep.subr.mxu0 0.0
        %1822 = vmatpush1.msra.mxu0 0.0
        %1823 = vmatprep.subr.mxu0 0.0
        %1824 = vmatpush1.msra.mxu0 0.0
        %1825 = vmatprep.subr.mxu0 0.0
        %1826 = vmatpush1.msra.mxu0 0.0
        %1827 = vmatprep.subr.mxu0 0.0
        %1828 = vmatpush1.msra.mxu0 0.0
        %1829 = vmatprep.subr.mxu0 0.0
        %1830 = vmatpush1.msra.mxu0 0.0
        %1831 = vmatprep.subr.mxu0 0.0
        %1832 = vmatpush1.msra.mxu0 0.0
        %1833 = vmatprep.subr.mxu0 0.0
        %1834 = vmatpush1.msra.mxu0 0.0
        %1835 = vmatprep.subr.mxu0 0.0
        %1836 = vmatpush1.msra.mxu0 0.0
        %1837 = vmatprep.subr.mxu0 0.0
        %1838 = vmatpush1.msra.mxu0 0.0
        %1839 = vmatprep.subr.mxu0 0.0
        %1840 = vmatpush1.msra.mxu0 0.0
        %1841 = vmatprep.subr.mxu0 0.0
        %1842 = vmatpush1.msra.mxu0 0.0
        %1843 = vmatprep.subr.mxu0 0.0
        %1844 = vmatpush1.msra.mxu0 0.0
        %1845 = vmatprep.subr.mxu0 0.0
        %1846 = vmatpush1.msra.mxu0 0.0
        %1847 = vmatprep.subr.mxu0 0.0
        %1848 = vmatpush1.msra.mxu0 0.0
        %1849 = vmatprep.mubr.f32.mxu0 0.0
        %1850 = vmatmul.mubr.f32.gmra.mrb[0].mxu0 %v1780
        %v1851 = vpop.f32.mrb[0].mxu0
        %v1852 = vadd.f32 0.0, %v1851
        %v1853 = vpop.f32.mrb[0].mxu0
        %1854 = vmatprep.mubr.f32.mxu0 0.0
        %1855 = vmatmul.mubr.f32.gmra.mrb[0].mxu0 %v1783
        %v1856 = vpop.f32.mrb[0].mxu0
        %v1857 = vadd.f32 0.0, %v1856
        %v1858 = vpop.f32.mrb[0].mxu0
        %1859 = vdwg.mxu0
        %v1860 = vadd.f32 %v1775, %v1852
        %v1861 = vadd.f32 %v1777, %v1857
        %1862 = vmax.xlane.f32.xlu0 %v1860
        %v1863 = vpop.xlane.xlu0 %1862
        %1864 = vmax.xlane.f32.xlu0 %v1861
        %v1865 = vpop.xlane.xlu0 %1864
        %v1866 = vsub.f32 %v1860, %v1863
        %v1867 = vsub.f32 %v1861, %v1865
        %v1868 = vmul.f32 %v1866, 1.442695
        %v1869 = vpow.pop %v1868
        %v1870 = vmul.f32 %v1867, 1.442695
        %v1871 = vpow.pop %v1870
        %1872 = vadd.xlane.f32.xlu0 %v1869
        %v1873 = vpop.xlane.xlu0 %1872
        %1874 = vadd.xlane.f32.xlu0 %v1871
        %v1875 = vpop.xlane.xlu0 %1874
        %v1876 = vlog2.pop %v1873
        %v1877 = vmul.f32 %v1876, 0.6931472
        %v1878 = vlog2.pop %v1875
        %v1879 = vmul.f32 %v1878, 0.6931472
        %v1880 = vadd.f32 %v1863, %v1877
        %v1881 = vadd.f32 %v1865, %v1879
        %v1882 = vsub.f32 %v1860, %v1880
        %v1883 = vsub.f32 %v1861, %v1881
        %v1884 = vsub.f32 %v1882, 3.218876
        %v1885 = vsub.f32 %v1883, 3.218876
        %s1886 = scalar_lea.vmem %s336, 80 [#allocation10]
        %1887 = vst [vmem:[%s1886] sm:$0xff] %v1884
        %1888 = vst [vmem:[%s1886 + $0x8] sm:$0xff] %v1885
        %s1889 = sld [smem:[#allocation2 + $0x6]]
        %v1890 = vld [vmem:[%s293] sm:$0xff]
        %v1891 = vld [vmem:[%s293 + $0x8] sm:$0xff]
        %v1892 = vunpack.c.l.bf16 %v1890
        %v1893 = vunpack.c.h.bf16 %v1890
        %v1894 = vunpack.c.l.bf16 %v1891
        %v1895 = vunpack.c.h.bf16 %v1891
        %v1896 = vstv %s1889
        %v1897 = vmul.f32 %v1896, %v1892
        %v1898 = vmul.f32 %v1896, %v1893
        %v1899 = vmul.f32 %v1896, %v1894
        %v1900 = vmul.f32 %v1896, %v1895
        %s1901 = sld [smem:[#allocation2 + $0x86]]
        %v1902 = vld [vmem:[%s379] sm:$0xff]
        %v1903 = vld [vmem:[%s379 + $0x8] sm:$0xff]
        %v1904 = vunpack.c.l.bf16 %v1902
        %v1905 = vunpack.c.h.bf16 %v1902
        %v1906 = vunpack.c.l.bf16 %v1903
        %v1907 = vunpack.c.h.bf16 %v1903
        %v1908 = vstv %s1901
        %v1909 = vmul.f32 %v1908, %v1904
        %v1910 = vmul.f32 %v1908, %v1905
        %v1911 = vmul.f32 %v1908, %v1906
        %v1912 = vmul.f32 %v1908, %v1907
        %v1913 = vadd.f32 %v1897, %v1909
        %v1914 = vadd.f32 %v1898, %v1910
        %v1915 = vadd.f32 %v1899, %v1911
        %v1916 = vadd.f32 %v1900, %v1912
        %s1917 = sld [smem:[#allocation2 + $0x106]]
        %v1918 = vld [vmem:[%s396] sm:$0xff]
        %v1919 = vld [vmem:[%s396 + $0x8] sm:$0xff]
        %v1920 = vunpack.c.l.bf16 %v1918
        %v1921 = vunpack.c.h.bf16 %v1918
        %v1922 = vunpack.c.l.bf16 %v1919
        %v1923 = vunpack.c.h.bf16 %v1919
        %v1924 = vstv %s1917
        %v1925 = vmul.f32 %v1924, %v1920
        %v1926 = vmul.f32 %v1924, %v1921
        %v1927 = vmul.f32 %v1924, %v1922
        %v1928 = vmul.f32 %v1924, %v1923
        %v1929 = vadd.f32 %v1913, %v1925
        %v1930 = vadd.f32 %v1914, %v1926
        %v1931 = vadd.f32 %v1915, %v1927
        %v1932 = vadd.f32 %v1916, %v1928
        %s1933 = sld [smem:[#allocation2 + $0x186]]
        %v1934 = vld [vmem:[%s413] sm:$0xff]
        %v1935 = vld [vmem:[%s413 + $0x8] sm:$0xff]
        %v1936 = vunpack.c.l.bf16 %v1934
        %v1937 = vunpack.c.h.bf16 %v1934
        %v1938 = vunpack.c.l.bf16 %v1935
        %v1939 = vunpack.c.h.bf16 %v1935
        %v1940 = vstv %s1933
        %v1941 = vmul.f32 %v1940, %v1936
        %v1942 = vmul.f32 %v1940, %v1937
        %v1943 = vmul.f32 %v1940, %v1938
        %v1944 = vmul.f32 %v1940, %v1939
        %v1945 = vadd.f32 %v1929, %v1941
        %v1946 = vadd.f32 %v1930, %v1942
        %v1947 = vadd.f32 %v1931, %v1943
        %v1948 = vadd.f32 %v1932, %v1944
        %s1949 = sld [smem:[#allocation2 + $0x206]]
        %v1950 = vld [vmem:[%s430] sm:$0xff]
        %v1951 = vld [vmem:[%s430 + $0x8] sm:$0xff]
        %v1952 = vunpack.c.l.bf16 %v1950
        %v1953 = vunpack.c.h.bf16 %v1950
        %v1954 = vunpack.c.l.bf16 %v1951
        %v1955 = vunpack.c.h.bf16 %v1951
        %v1956 = vstv %s1949
        %v1957 = vmul.f32 %v1956, %v1952
        %v1958 = vmul.f32 %v1956, %v1953
        %v1959 = vmul.f32 %v1956, %v1954
        %v1960 = vmul.f32 %v1956, %v1955
        %v1961 = vadd.f32 %v1945, %v1957
        %v1962 = vadd.f32 %v1946, %v1958
        %v1963 = vadd.f32 %v1947, %v1959
        %v1964 = vadd.f32 %v1948, %v1960
        %s1965 = sld [smem:[#allocation2 + $0x286]]
        %v1966 = vld [vmem:[%s447] sm:$0xff]
        %v1967 = vld [vmem:[%s447 + $0x8] sm:$0xff]
        %v1968 = vunpack.c.l.bf16 %v1966
        %v1969 = vunpack.c.h.bf16 %v1966
        %v1970 = vunpack.c.l.bf16 %v1967
        %v1971 = vunpack.c.h.bf16 %v1967
        %v1972 = vstv %s1965
        %v1973 = vmul.f32 %v1972, %v1968
        %v1974 = vmul.f32 %v1972, %v1969
        %v1975 = vmul.f32 %v1972, %v1970
        %v1976 = vmul.f32 %v1972, %v1971
        %v1977 = vadd.f32 %v1961, %v1973
        %v1978 = vadd.f32 %v1962, %v1974
        %v1979 = vadd.f32 %v1963, %v1975
        %v1980 = vadd.f32 %v1964, %v1976
        %s1981 = sld [smem:[#allocation2 + $0x306]]
        %v1982 = vld [vmem:[%s464] sm:$0xff]
        %v1983 = vld [vmem:[%s464 + $0x8] sm:$0xff]
        %v1984 = vunpack.c.l.bf16 %v1982
        %v1985 = vunpack.c.h.bf16 %v1982
        %v1986 = vunpack.c.l.bf16 %v1983
        %v1987 = vunpack.c.h.bf16 %v1983
        %v1988 = vstv %s1981
        %v1989 = vmul.f32 %v1988, %v1984
        %v1990 = vmul.f32 %v1988, %v1985
        %v1991 = vmul.f32 %v1988, %v1986
        %v1992 = vmul.f32 %v1988, %v1987
        %v1993 = vadd.f32 %v1977, %v1989
        %v1994 = vadd.f32 %v1978, %v1990
        %v1995 = vadd.f32 %v1979, %v1991
        %v1996 = vadd.f32 %v1980, %v1992
        %s1997 = sld [smem:[#allocation2 + $0x386]]
        %v1998 = vld [vmem:[%s481] sm:$0xff]
        %v1999 = vld [vmem:[%s481 + $0x8] sm:$0xff]
        %v2000 = vunpack.c.l.bf16 %v1998
        %v2001 = vunpack.c.h.bf16 %v1998
        %v2002 = vunpack.c.l.bf16 %v1999
        %v2003 = vunpack.c.h.bf16 %v1999
        %v2004 = vstv %s1997
        %v2005 = vmul.f32 %v2004, %v2000
        %v2006 = vmul.f32 %v2004, %v2001
        %v2007 = vmul.f32 %v2004, %v2002
        %v2008 = vmul.f32 %v2004, %v2003
        %v2009 = vadd.f32 %v1993, %v2005
        %v2010 = vadd.f32 %v1994, %v2006
        %v2011 = vadd.f32 %v1995, %v2007
        %v2012 = vadd.f32 %v1996, %v2008
        %v2013 = vmul.f32 %v2009, %v2009
        %v2014 = vmul.f32 %v2010, %v2010
        %v2015 = vmul.f32 %v2011, %v2011
        %v2016 = vmul.f32 %v2012, %v2012
        %v2017 = vsel %vm501, %v2014, 0.0
        %v2018 = vadd.f32 %v2013, %v2017
        %2019 = vadd.xlane.f32.xlu0 %v2018
        %v2020 = vpop.xlane.xlu0 %2019
        %v2021 = vsel %vm501, %v2016, 0.0
        %v2022 = vadd.f32 %v2015, %v2021
        %2023 = vadd.xlane.f32.xlu0 %v2022
        %v2024 = vpop.xlane.xlu0 %2023
        %v2025 = vadd.f32 %v1773, %v2020
        %v2026 = vadd.f32 %v1774, %v2024
        %v2027 = vadd.f32 %v355, %v2009
        %v2028 = vadd.f32 %v356, %v2010
        %v2029 = vadd.f32 %v357, %v2011
        %v2030 = vadd.f32 %v358, %v2012
        %v2032 = vsel %vm501, %v2028, 0
        %v2035 = vsel %vm501, %v2030, 0
        %2037 = vmatprep.subr.mxu0 0.0
        %2038 = vmatpush1.msra.mxu0 %v359
        %2039 = vmatprep.subr.mxu0 0.0
        %2040 = vmatpush1.msra.mxu0 %v360
        %2041 = vmatprep.subr.mxu0 0.0
        %2042 = vmatpush1.msra.mxu0 %v361
        %2043 = vmatprep.subr.mxu0 0.0
        %2044 = vmatpush1.msra.mxu0 %v362
        %2045 = vmatprep.subr.mxu0 0.0
        %2046 = vmatpush1.msra.mxu0 %v363
        %2047 = vmatprep.subr.mxu0 0.0
        %2048 = vmatpush1.msra.mxu0 %v364
        %2049 = vmatprep.subr.mxu0 0.0
        %2050 = vmatpush1.msra.mxu0 %v524
        %2051 = vmatprep.subr.mxu0 0.0
        %2052 = vmatpush1.msra.mxu0 0.0
        %2053 = vmatprep.subr.mxu0 0.0
        %2054 = vmatpush1.msra.mxu0 0.0
        %2055 = vmatprep.subr.mxu0 0.0
        %2056 = vmatpush1.msra.mxu0 0.0
        %2057 = vmatprep.subr.mxu0 0.0
        %2058 = vmatpush1.msra.mxu0 0.0
        %2059 = vmatprep.subr.mxu0 0.0
        %2060 = vmatpush1.msra.mxu0 0.0
        %2061 = vmatprep.subr.mxu0 0.0
        %2062 = vmatpush1.msra.mxu0 0.0
        %2063 = vmatprep.subr.mxu0 0.0
        %2064 = vmatpush1.msra.mxu0 0.0
        %2065 = vmatprep.subr.mxu0 0.0
        %2066 = vmatpush1.msra.mxu0 0.0
        %2067 = vmatprep.subr.mxu0 0.0
        %2068 = vmatpush1.msra.mxu0 0.0
        %2069 = vmatprep.subr.mxu0 0.0
        %2070 = vmatpush1.msra.mxu0 0.0
        %2071 = vmatprep.subr.mxu0 0.0
        %2072 = vmatpush1.msra.mxu0 0.0
        %2073 = vmatprep.subr.mxu0 0.0
        %2074 = vmatpush1.msra.mxu0 0.0
        %2075 = vmatprep.subr.mxu0 0.0
        %2076 = vmatpush1.msra.mxu0 0.0
        %2077 = vmatprep.subr.mxu0 0.0
        %2078 = vmatpush1.msra.mxu0 0.0
        %2079 = vmatprep.subr.mxu0 0.0
        %2080 = vmatpush1.msra.mxu0 0.0
        %2081 = vmatprep.subr.mxu0 0.0
        %2082 = vmatpush1.msra.mxu0 0.0
        %2083 = vmatprep.subr.mxu0 0.0
        %2084 = vmatpush1.msra.mxu0 0.0
        %2085 = vmatprep.subr.mxu0 0.0
        %2086 = vmatpush1.msra.mxu0 0.0
        %2087 = vmatprep.subr.mxu0 0.0
        %2088 = vmatpush1.msra.mxu0 0.0
        %2089 = vmatprep.subr.mxu0 0.0
        %2090 = vmatpush1.msra.mxu0 0.0
        %2091 = vmatprep.subr.mxu0 0.0
        %2092 = vmatpush1.msra.mxu0 0.0
        %2093 = vmatprep.subr.mxu0 0.0
        %2094 = vmatpush1.msra.mxu0 0.0
        %2095 = vmatprep.subr.mxu0 0.0
        %2096 = vmatpush1.msra.mxu0 0.0
        %2097 = vmatprep.subr.mxu0 0.0
        %2098 = vmatpush1.msra.mxu0 0.0
        %2099 = vmatprep.subr.mxu0 0.0
        %2100 = vmatpush1.msra.mxu0 0.0
        %2101 = vmatprep.mubr.f32.mxu0 0.0
        %2102 = vmatmul.mubr.f32.gmra.mrb[0].mxu0 %v2032
        %v2103 = vpop.f32.mrb[0].mxu0
        %v2104 = vadd.f32 0.0, %v2103
        %v2105 = vpop.f32.mrb[0].mxu0
        %2106 = vmatprep.mubr.f32.mxu0 0.0
        %2107 = vmatmul.mubr.f32.gmra.mrb[0].mxu0 %v2035
        %v2108 = vpop.f32.mrb[0].mxu0
        %v2109 = vadd.f32 0.0, %v2108
        %v2110 = vpop.f32.mrb[0].mxu0
        %2111 = vdwg.mxu0
        %v2112 = vadd.f32 %v2027, %v2104
        %v2113 = vadd.f32 %v2029, %v2109
        %2114 = vmax.xlane.f32.xlu0 %v2112
        %v2115 = vpop.xlane.xlu0 %2114
        %2116 = vmax.xlane.f32.xlu0 %v2113
        %v2117 = vpop.xlane.xlu0 %2116
        %v2118 = vsub.f32 %v2112, %v2115
        %v2119 = vsub.f32 %v2113, %v2117
        %v2120 = vmul.f32 %v2118, 1.442695
        %v2121 = vpow.pop %v2120
        %v2122 = vmul.f32 %v2119, 1.442695
        %v2123 = vpow.pop %v2122
        %2124 = vadd.xlane.f32.xlu0 %v2121
        %v2125 = vpop.xlane.xlu0 %2124
        %2126 = vadd.xlane.f32.xlu0 %v2123
        %v2127 = vpop.xlane.xlu0 %2126
        %v2128 = vlog2.pop %v2125
        %v2129 = vmul.f32 %v2128, 0.6931472
        %v2130 = vlog2.pop %v2127
        %v2131 = vmul.f32 %v2130, 0.6931472
        %v2132 = vadd.f32 %v2115, %v2129
        %v2133 = vadd.f32 %v2117, %v2131
        %v2134 = vsub.f32 %v2112, %v2132
        %v2135 = vsub.f32 %v2113, %v2133
        %v2136 = vsub.f32 %v2134, 3.218876
        %v2137 = vsub.f32 %v2135, 3.218876
        %s2138 = scalar_lea.vmem %s336, 96 [#allocation10]
        %2139 = vst [vmem:[%s2138] sm:$0xff] %v2136
        %2140 = vst [vmem:[%s2138 + $0x8] sm:$0xff] %v2137
        %s2141 = sld [smem:[#allocation2 + $0x7]]
        %v2142 = vld [vmem:[%s293] sm:$0xff]
        %v2143 = vld [vmem:[%s293 + $0x8] sm:$0xff]
        %v2144 = vunpack.c.l.bf16 %v2142
        %v2145 = vunpack.c.h.bf16 %v2142
        %v2146 = vunpack.c.l.bf16 %v2143
        %v2147 = vunpack.c.h.bf16 %v2143
        %v2148 = vstv %s2141
        %v2149 = vmul.f32 %v2148, %v2144
        %v2150 = vmul.f32 %v2148, %v2145
        %v2151 = vmul.f32 %v2148, %v2146
        %v2152 = vmul.f32 %v2148, %v2147
        %s2153 = sld [smem:[#allocation2 + $0x87]]
        %v2154 = vld [vmem:[%s379] sm:$0xff]
        %v2155 = vld [vmem:[%s379 + $0x8] sm:$0xff]
        %v2156 = vunpack.c.l.bf16 %v2154
        %v2157 = vunpack.c.h.bf16 %v2154
        %v2158 = vunpack.c.l.bf16 %v2155
        %v2159 = vunpack.c.h.bf16 %v2155
        %v2160 = vstv %s2153
        %v2161 = vmul.f32 %v2160, %v2156
        %v2162 = vmul.f32 %v2160, %v2157
        %v2163 = vmul.f32 %v2160, %v2158
        %v2164 = vmul.f32 %v2160, %v2159
        %v2165 = vadd.f32 %v2149, %v2161
        %v2166 = vadd.f32 %v2150, %v2162
        %v2167 = vadd.f32 %v2151, %v2163
        %v2168 = vadd.f32 %v2152, %v2164
        %s2169 = sld [smem:[#allocation2 + $0x107]]
        %v2170 = vld [vmem:[%s396] sm:$0xff]
        %v2171 = vld [vmem:[%s396 + $0x8] sm:$0xff]
        %v2172 = vunpack.c.l.bf16 %v2170
        %v2173 = vunpack.c.h.bf16 %v2170
        %v2174 = vunpack.c.l.bf16 %v2171
        %v2175 = vunpack.c.h.bf16 %v2171
        %v2176 = vstv %s2169
        %v2177 = vmul.f32 %v2176, %v2172
        %v2178 = vmul.f32 %v2176, %v2173
        %v2179 = vmul.f32 %v2176, %v2174
        %v2180 = vmul.f32 %v2176, %v2175
        %v2181 = vadd.f32 %v2165, %v2177
        %v2182 = vadd.f32 %v2166, %v2178
        %v2183 = vadd.f32 %v2167, %v2179
        %v2184 = vadd.f32 %v2168, %v2180
        %s2185 = sld [smem:[#allocation2 + $0x187]]
        %v2186 = vld [vmem:[%s413] sm:$0xff]
        %v2187 = vld [vmem:[%s413 + $0x8] sm:$0xff]
        %v2188 = vunpack.c.l.bf16 %v2186
        %v2189 = vunpack.c.h.bf16 %v2186
        %v2190 = vunpack.c.l.bf16 %v2187
        %v2191 = vunpack.c.h.bf16 %v2187
        %v2192 = vstv %s2185
        %v2193 = vmul.f32 %v2192, %v2188
        %v2194 = vmul.f32 %v2192, %v2189
        %v2195 = vmul.f32 %v2192, %v2190
        %v2196 = vmul.f32 %v2192, %v2191
        %v2197 = vadd.f32 %v2181, %v2193
        %v2198 = vadd.f32 %v2182, %v2194
        %v2199 = vadd.f32 %v2183, %v2195
        %v2200 = vadd.f32 %v2184, %v2196
        %s2201 = sld [smem:[#allocation2 + $0x207]]
        %v2202 = vld [vmem:[%s430] sm:$0xff]
        %v2203 = vld [vmem:[%s430 + $0x8] sm:$0xff]
        %v2204 = vunpack.c.l.bf16 %v2202
        %v2205 = vunpack.c.h.bf16 %v2202
        %v2206 = vunpack.c.l.bf16 %v2203
        %v2207 = vunpack.c.h.bf16 %v2203
        %v2208 = vstv %s2201
        %v2209 = vmul.f32 %v2208, %v2204
        %v2210 = vmul.f32 %v2208, %v2205
        %v2211 = vmul.f32 %v2208, %v2206
        %v2212 = vmul.f32 %v2208, %v2207
        %v2213 = vadd.f32 %v2197, %v2209
        %v2214 = vadd.f32 %v2198, %v2210
        %v2215 = vadd.f32 %v2199, %v2211
        %v2216 = vadd.f32 %v2200, %v2212
        %s2217 = sld [smem:[#allocation2 + $0x287]]
        %v2218 = vld [vmem:[%s447] sm:$0xff]
        %v2219 = vld [vmem:[%s447 + $0x8] sm:$0xff]
        %v2220 = vunpack.c.l.bf16 %v2218
        %v2221 = vunpack.c.h.bf16 %v2218
        %v2222 = vunpack.c.l.bf16 %v2219
        %v2223 = vunpack.c.h.bf16 %v2219
        %v2224 = vstv %s2217
        %v2225 = vmul.f32 %v2224, %v2220
        %v2226 = vmul.f32 %v2224, %v2221
        %v2227 = vmul.f32 %v2224, %v2222
        %v2228 = vmul.f32 %v2224, %v2223
        %v2229 = vadd.f32 %v2213, %v2225
        %v2230 = vadd.f32 %v2214, %v2226
        %v2231 = vadd.f32 %v2215, %v2227
        %v2232 = vadd.f32 %v2216, %v2228
        %s2233 = sld [smem:[#allocation2 + $0x307]]
        %v2234 = vld [vmem:[%s464] sm:$0xff]
        %v2235 = vld [vmem:[%s464 + $0x8] sm:$0xff]
        %v2236 = vunpack.c.l.bf16 %v2234
        %v2237 = vunpack.c.h.bf16 %v2234
        %v2238 = vunpack.c.l.bf16 %v2235
        %v2239 = vunpack.c.h.bf16 %v2235
        %v2240 = vstv %s2233
        %v2241 = vmul.f32 %v2240, %v2236
        %v2242 = vmul.f32 %v2240, %v2237
        %v2243 = vmul.f32 %v2240, %v2238
        %v2244 = vmul.f32 %v2240, %v2239
        %v2245 = vadd.f32 %v2229, %v2241
        %v2246 = vadd.f32 %v2230, %v2242
        %v2247 = vadd.f32 %v2231, %v2243
        %v2248 = vadd.f32 %v2232, %v2244
        %s2249 = sld [smem:[#allocation2 + $0x387]]
        %v2250 = vld [vmem:[%s481] sm:$0xff]
        %v2251 = vld [vmem:[%s481 + $0x8] sm:$0xff]
        %v2252 = vunpack.c.l.bf16 %v2250
        %v2253 = vunpack.c.h.bf16 %v2250
        %v2254 = vunpack.c.l.bf16 %v2251
        %v2255 = vunpack.c.h.bf16 %v2251
        %v2256 = vstv %s2249
        %v2257 = vmul.f32 %v2256, %v2252
        %v2258 = vmul.f32 %v2256, %v2253
        %v2259 = vmul.f32 %v2256, %v2254
        %v2260 = vmul.f32 %v2256, %v2255
        %v2261 = vadd.f32 %v2245, %v2257
        %v2262 = vadd.f32 %v2246, %v2258
        %v2263 = vadd.f32 %v2247, %v2259
        %v2264 = vadd.f32 %v2248, %v2260
        %v2265 = vmul.f32 %v2261, %v2261
        %v2266 = vmul.f32 %v2262, %v2262
        %v2267 = vmul.f32 %v2263, %v2263
        %v2268 = vmul.f32 %v2264, %v2264
        %v2269 = vsel %vm501, %v2266, 0.0
        %v2270 = vadd.f32 %v2265, %v2269
        %2271 = vadd.xlane.f32.xlu0 %v2270
        %v2272 = vpop.xlane.xlu0 %2271
        %v2273 = vsel %vm501, %v2268, 0.0
        %v2274 = vadd.f32 %v2267, %v2273
        %2275 = vadd.xlane.f32.xlu0 %v2274
        %v2276 = vpop.xlane.xlu0 %2275
        %v2277 = vadd.f32 %v2025, %v2272
        %v2278 = vadd.f32 %v2026, %v2276
        %v2279 = vadd.f32 %v355, %v2261
        %v2280 = vadd.f32 %v356, %v2262
        %v2281 = vadd.f32 %v357, %v2263
        %v2282 = vadd.f32 %v358, %v2264
        %v2284 = vsel %vm501, %v2280, 0
        %v2287 = vsel %vm501, %v2282, 0
        %2289 = vmatprep.subr.mxu0 0.0
        %2290 = vmatpush1.msra.mxu0 %v359
        %2291 = vmatprep.subr.mxu0 0.0
        %2292 = vmatpush1.msra.mxu0 %v360
        %2293 = vmatprep.subr.mxu0 0.0
        %2294 = vmatpush1.msra.mxu0 %v361
        %2295 = vmatprep.subr.mxu0 0.0
        %2296 = vmatpush1.msra.mxu0 %v362
        %2297 = vmatprep.subr.mxu0 0.0
        %2298 = vmatpush1.msra.mxu0 %v363
        %2299 = vmatprep.subr.mxu0 0.0
        %2300 = vmatpush1.msra.mxu0 %v364
        %2301 = vmatprep.subr.mxu0 0.0
        %2302 = vmatpush1.msra.mxu0 %v524
        %2303 = vmatprep.subr.mxu0 0.0
        %2304 = vmatpush1.msra.mxu0 0.0
        %2305 = vmatprep.subr.mxu0 0.0
        %2306 = vmatpush1.msra.mxu0 0.0
        %2307 = vmatprep.subr.mxu0 0.0
        %2308 = vmatpush1.msra.mxu0 0.0
        %2309 = vmatprep.subr.mxu0 0.0
        %2310 = vmatpush1.msra.mxu0 0.0
        %2311 = vmatprep.subr.mxu0 0.0
        %2312 = vmatpush1.msra.mxu0 0.0
        %2313 = vmatprep.subr.mxu0 0.0
        %2314 = vmatpush1.msra.mxu0 0.0
        %2315 = vmatprep.subr.mxu0 0.0
        %2316 = vmatpush1.msra.mxu0 0.0
        %2317 = vmatprep.subr.mxu0 0.0
        %2318 = vmatpush1.msra.mxu0 0.0
        %2319 = vmatprep.subr.mxu0 0.0
        %2320 = vmatpush1.msra.mxu0 0.0
        %2321 = vmatprep.subr.mxu0 0.0
        %2322 = vmatpush1.msra.mxu0 0.0
        %2323 = vmatprep.subr.mxu0 0.0
        %2324 = vmatpush1.msra.mxu0 0.0
        %2325 = vmatprep.subr.mxu0 0.0
        %2326 = vmatpush1.msra.mxu0 0.0
        %2327 = vmatprep.subr.mxu0 0.0
        %2328 = vmatpush1.msra.mxu0 0.0
        %2329 = vmatprep.subr.mxu0 0.0
        %2330 = vmatpush1.msra.mxu0 0.0
        %2331 = vmatprep.subr.mxu0 0.0
        %2332 = vmatpush1.msra.mxu0 0.0
        %2333 = vmatprep.subr.mxu0 0.0
        %2334 = vmatpush1.msra.mxu0 0.0
        %2335 = vmatprep.subr.mxu0 0.0
        %2336 = vmatpush1.msra.mxu0 0.0
        %2337 = vmatprep.subr.mxu0 0.0
        %2338 = vmatpush1.msra.mxu0 0.0
        %2339 = vmatprep.subr.mxu0 0.0
        %2340 = vmatpush1.msra.mxu0 0.0
        %2341 = vmatprep.subr.mxu0 0.0
        %2342 = vmatpush1.msra.mxu0 0.0
        %2343 = vmatprep.subr.mxu0 0.0
        %2344 = vmatpush1.msra.mxu0 0.0
        %2345 = vmatprep.subr.mxu0 0.0
        %2346 = vmatpush1.msra.mxu0 0.0
        %2347 = vmatprep.subr.mxu0 0.0
        %2348 = vmatpush1.msra.mxu0 0.0
        %2349 = vmatprep.subr.mxu0 0.0
        %2350 = vmatpush1.msra.mxu0 0.0
        %2351 = vmatprep.subr.mxu0 0.0
        %2352 = vmatpush1.msra.mxu0 0.0
        %2353 = vmatprep.mubr.f32.mxu0 0.0
        %2354 = vmatmul.mubr.f32.gmra.mrb[0].mxu0 %v2284
        %v2355 = vpop.f32.mrb[0].mxu0
        %v2356 = vadd.f32 0.0, %v2355
        %v2357 = vpop.f32.mrb[0].mxu0
        %2358 = vmatprep.mubr.f32.mxu0 0.0
        %2359 = vmatmul.mubr.f32.gmra.mrb[0].mxu0 %v2287
        %v2360 = vpop.f32.mrb[0].mxu0
        %v2361 = vadd.f32 0.0, %v2360
        %v2362 = vpop.f32.mrb[0].mxu0
        %2363 = vdwg.mxu0
        %v2364 = vadd.f32 %v2279, %v2356
        %v2365 = vadd.f32 %v2281, %v2361
        %2366 = vmax.xlane.f32.xlu0 %v2364
        %v2367 = vpop.xlane.xlu0 %2366
        %2368 = vmax.xlane.f32.xlu0 %v2365
        %v2369 = vpop.xlane.xlu0 %2368
        %v2370 = vsub.f32 %v2364, %v2367
        %v2371 = vsub.f32 %v2365, %v2369
        %v2372 = vmul.f32 %v2370, 1.442695
        %v2373 = vpow.pop %v2372
        %v2374 = vmul.f32 %v2371, 1.442695
        %v2375 = vpow.pop %v2374
        %2376 = vadd.xlane.f32.xlu0 %v2373
        %v2377 = vpop.xlane.xlu0 %2376
        %2378 = vadd.xlane.f32.xlu0 %v2375
        %v2379 = vpop.xlane.xlu0 %2378
        %v2380 = vlog2.pop %v2377
        %v2381 = vmul.f32 %v2380, 0.6931472
        %v2382 = vlog2.pop %v2379
        %v2383 = vmul.f32 %v2382, 0.6931472
        %v2384 = vadd.f32 %v2367, %v2381
        %v2385 = vadd.f32 %v2369, %v2383
        %v2386 = vsub.f32 %v2364, %v2384
        %v2387 = vsub.f32 %v2365, %v2385
        %v2388 = vsub.f32 %v2386, 3.218876
        %v2389 = vsub.f32 %v2387, 3.218876
        %s2390 = scalar_lea.vmem %s336, 112 [#allocation10]
        %2391 = vst [vmem:[%s2390] sm:$0xff] %v2388
        %2392 = vst [vmem:[%s2390 + $0x8] sm:$0xff] %v2389
        %vm2393 = vcmask 7168
        %2394 = vst.msk [vmem:[%s351] sm:$0xff] %vm2393, %v2277
        %2395 = vst.msk [vmem:[%s351 + $0x8] sm:$0xff] %vm2393, %v2278
        %s2396 = sand.u32 %s129, 1
        %s2397 = scalar_lea.sflag [#allocation4], %s2396
        %s2398 = sand.u32 %s129, 1
        %s2399 = smul.addr %s2398, 128
        %s2400 = scalar_lea.vmem [#allocation10], %s2399
        %s2401 = smul.u32 2, %s27
        %p2402 = scmp.lt.s32.totalorder %s2401, 3
        %s2403 = scalar_select %p2402, %s2401, 3
        %s2404 = smul.addr %s2403, 8
        %s2405 = scalar_lea.vmem %s5, %s2404
        // Predicated region
        $region53: #{tpu_custom_call.1} parent=35 // pred_check
          %p2406 = pneg %p139
        $region54: #{tpu_custom_call.1} parent=35 // pred_check_branch
          %2408 = sbr.rel (%p2406) target = $region56
        $region55: #{tpu_custom_call.1} parent=35 // pred_region
          #allocation14 [shape = 'u32[6]{0}', space=smem, size = 0x18, scoped, tag = 'DMA stride descriptor']
          %s2409 = smul.u32 2, %s27
          %s2411 = ssub.s32 2048, 2048
          %2412 = vsyncadd %s2397, %s2411
          %s2413 = smul.addr %s2409, 128
          %s2414 = scalar_lea.hbm %s4, %s2413
          %s2416 = sshll.u32 1, 14
          %s2417 = sxor.u32 4294967295, %s2416
          %s2420 = sshll.u32 7, 18
          %s2421 = sxor.u32 4294967295, %s2420
          %s2422 = sand.u32 0, %s2421
          %s2424 = sor.u32 %s2422, 0
          %s2426 = sshll.u32 3, 24
          %s2427 = sxor.u32 4294967295, %s2426
          %s2428 = sand.u32 %s2424, %s2427
          %s2430 = sor.u32 %s2428, 0
          %s2431 = sshll.u32 %s2400, 4
          %s2432 = int_to_ptr.vmem [resolvable:$true] %s2431
          %2438 = sst [smem:[#allocation14]] 256
          %s2439 = scalar_lea.smem [#allocation14], 1
          %2440 = sst [smem:[%s2439]] 512
          %s2441 = scalar_lea.smem [#allocation14], 2
          %2442 = sst [smem:[%s2441]] 2
          %s2443 = scalar_lea.smem [#allocation14], 3
          %2444 = sst [smem:[%s2443]] 128
          %s2445 = scalar_lea.smem [#allocation14], 4
          %2446 = sst [smem:[%s2445]] 128
          %s2447 = scalar_lea.smem [#allocation14], 5
          %2448 = sst [smem:[%s2447]] 8
          %2450 = dma.general %s2432, 2048, %s2414, %s2397, [#allocation13], [#allocation14], %s2430, 0
        $region56: #{tpu_custom_call.1} parent=35 // pred_fallthru
          _
        // Predicated region
        $region57: #{tpu_custom_call.1} parent=35 // pred_check
          %p2451 = pneg %p165
        $region58: #{tpu_custom_call.1} parent=35 // pred_check_branch
          %2453 = sbr.rel (%p2451) target = $region60
        $region59: #{tpu_custom_call.1} parent=35 // pred_region
          %s2454 = smul.u32 2, %s27
        $region60: #{tpu_custom_call.1} parent=35 // pred_fallthru
          _
      $region36: #{tpu_custom_call.1} parent=5 // pred_fallthru
        _
      %p2455 = scmp.le.s32.totalorder 2, %s22
      // Predicated region
      $region61: #{tpu_custom_call.1} parent=5 // pred_check
        %p2456 = pneg %p2455
      $region62: #{tpu_custom_call.1} parent=5 // pred_check_branch
        %2458 = sbr.rel (%p2456) target = $region64
      $region63: #{tpu_custom_call.1} parent=5 // pred_region
        %s2459 = ssub.s32 %s22, 2
        // Predicated region
        $region65: #{tpu_custom_call.1} parent=63 // pred_check
          %p2460 = pneg %p145
        $region66: #{tpu_custom_call.1} parent=63 // pred_check_branch
          %2462 = sbr.rel (%p2460) target = $region68
        $region67: #{tpu_custom_call.1} parent=63 // pred_region
          %s2463 = sand.u32 %s130, 1
          %s2464 = scalar_lea.sflag [#allocation4], %s2463
          %s2465 = sand.u32 %s130, 1
          %s2466 = smul.addr %s2465, 128
          %s2467 = scalar_lea.vmem [#allocation10], %s2466
          %2468 = dma.done %s2464, 2048
        $region68: #{tpu_custom_call.1} parent=63 // pred_fallthru
          _
        // Predicated region
        $region69: #{tpu_custom_call.1} parent=63 // pred_check
          %p2469 = pneg %p171
        $region70: #{tpu_custom_call.1} parent=63 // pred_check_branch
          %2471 = sbr.rel (%p2469) target = $region72
        $region71: #{tpu_custom_call.1} parent=63 // pred_region
          %s2472 = smul.u32 2, %s28
          %p2473 = scmp.lt.s32.totalorder %s2472, 3
          %s2474 = scalar_select %p2473, %s2472, 3
          %s2475 = smul.addr %s2474, 8
          %s2476 = scalar_lea.vmem %s5, %s2475
        $region72: #{tpu_custom_call.1} parent=63 // pred_fallthru
          _
      $region64: #{tpu_custom_call.1} parent=5 // pred_fallthru
        _
    $region6: #{tpu_custom_call.1} parent=1 // loop_footer
      %s26 = sadd.s32 1, %s22
    $region7: #{tpu_custom_call.1} parent=1 // loop_footer_branch
      %21 = sbr.rel target = $region3
    $region8: #{tpu_custom_call.1} parent=1 // loop_exit
      _
    %2477 = vsyncpa [#allocation3], 1
    %s2478 = scalar_lea.sflag [#allocation3], 1
    %2479 = vsyncpa %s2478, 1
    %2480 = vsyncpa [#allocation8], 1
    %s2481 = scalar_lea.sflag [#allocation8], 1
    %2482 = vsyncpa %s2481, 1
    %2483 = vsyncpa [#allocation4], 1
    %s2484 = scalar_lea.sflag [#allocation4], 1
    %2485 = vsyncpa %s2484, 1
    %2486 = vsyncpa [#allocation5], 1
    %s2487 = scalar_lea.sflag [#allocation5], 1
    %2488 = vsyncpa %s2487, 1

</llo_original>
